<compile_context>
chip_gen: v7x
topology: tpu7x:2x2x1
jax: 0.10.0
libtpu: 0.0.40
codegen_flags: <defaults>
</compile_context>

<pallas_src>
import jax
import jax.numpy as jnp
from jax import lax
from jax.experimental import pallas as pl
from jax.experimental.pallas import tpu as pltpu


# ----------------------------------------------------------------------------
# Pallas kernels
# ----------------------------------------------------------------------------
def _conv_mm_kernel(p_ref, w_ref, b_ref, o_ref):
    """O = relu(P @ W + b).  P:(tm,K) bf16, W:(K,Cout) bf16, b:(1,Cout) f32."""
    acc = jnp.dot(p_ref[...], w_ref[...], preferred_element_type=jnp.float32)
    o_ref[...] = jnp.maximum(acc + b_ref[...], 0.0).astype(o_ref.dtype)


def _pick_row_tile(m):
    # Tile the row axis (M = B*oh*ow) when it is large and cleanly divisible:
    # weight/bias blocks stay resident while row tiles pipeline and can shard
    # across v7x's two TensorCores. At B=2 (M = 800/162/98) this falls back to
    # a single full block, avoiding per-step grid overhead on a tiny workload.
    for tm in (1024, 512, 256):
        if m > tm and m % tm == 0:
            return tm
    return m


def conv_mm(p, w, b, out_dtype=jnp.bfloat16):
    """p:(M,K) bf16 patches, w:(K,Cout) bf16, b:(1,Cout) f32 -> (M,Cout)."""
    m, k = p.shape
    k2, cout = w.shape
    assert k == k2, (k, k2)
    tm = _pick_row_tile(m)
    return pl.pallas_call(
        _conv_mm_kernel,
        out_shape=jax.ShapeDtypeStruct((m, cout), out_dtype),
        grid=(m // tm,),
        in_specs=[
            pl.BlockSpec((tm, k), lambda i: (i, 0)),
            pl.BlockSpec((k, cout), lambda i: (0, 0)),
            pl.BlockSpec((1, cout), lambda i: (0, 0)),
        ],
        out_specs=pl.BlockSpec((tm, cout), lambda i: (i, 0)),
        compiler_params=pltpu.CompilerParams(
            dimension_semantics=("parallel",),
            vmem_limit_bytes=32 * 1024 * 1024),
    )(p, w, b)


def _fc45_kernel(x_ref, w4_ref, b4_ref, w5_ref, b5_ref, o_ref, acc_ref):
    """K-tiled fused fc4+fc5: acc += x_k @ W4_k; on last step relu+fc5."""
    k = pl.program_id(0)

    @pl.when(k == 0)
    def _init():
        acc_ref[...] = jnp.zeros_like(acc_ref)

    acc_ref[...] += jnp.dot(x_ref[...], w4_ref[...],
                            preferred_element_type=jnp.float32)

    @pl.when(k == pl.num_programs(0) - 1)
    def _finalize():
        h = jnp.maximum(acc_ref[...] + b4_ref[...], 0.0).astype(jnp.bfloat16)
        o_ref[...] = (jnp.dot(h, w5_ref[...],
                              preferred_element_type=jnp.float32)
                      + b5_ref[...])


def fc45(x, w4, b4, w5, b5, *, tk=640):
    """x:(B,Kp) bf16 (Kp zero-padded to tk multiple), w4:(Kp,512) bf16,
    w5:(512,4) bf16 -> (B,4) f32."""
    bsz, kp = x.shape
    _, h = w4.shape
    _, n = w5.shape
    assert kp % tk == 0, (kp, tk)
    nk = kp // tk
    return pl.pallas_call(
        _fc45_kernel,
        out_shape=jax.ShapeDtypeStruct((bsz, n), jnp.float32),
        grid=(nk,),
        in_specs=[
            pl.BlockSpec((bsz, tk), lambda k: (0, k)),
            pl.BlockSpec((tk, h), lambda k: (k, 0)),
            pl.BlockSpec((1, h), lambda k: (0, 0)),
            pl.BlockSpec((h, n), lambda k: (0, 0)),
            pl.BlockSpec((1, n), lambda k: (0, 0)),
        ],
        out_specs=pl.BlockSpec((bsz, n), lambda k: (0, 0)),
        scratch_shapes=[pltpu.VMEM((bsz, h), jnp.float32)],
        compiler_params=pltpu.CompilerParams(
            dimension_semantics=("arbitrary",),
            vmem_limit_bytes=32 * 1024 * 1024),
    )(x, w4, b4, w5, b5)


# ----------------------------------------------------------------------------
# XLA glue: patch extraction (one op per layer, NHWC patch layout, no
# transposes anywhere in the forward).
# ----------------------------------------------------------------------------
def _patches(x, kh, kw, stride, dn):
    return lax.conv_general_dilated_patches(
        x, (kh, kw), (stride, stride), 'VALID', dimension_numbers=dn)


# ----------------------------------------------------------------------------
# DQN forward
# ----------------------------------------------------------------------------
def dqn_forward(x, prep):
    """x: (B, 4, 84, 84) f32, NCHW (torch layout) -> (B, 4) f32."""
    b = x.shape[0]
    a = x.astype(jnp.bfloat16)

    # conv1: patches straight from NCHW input into NHWC patch layout.
    p = _patches(a, 8, 8, 4, ('NCHW', 'OIHW', 'NHWC'))        # (B,20,20,256)
    oh, ow, k = p.shape[1], p.shape[2], p.shape[3]
    a = conv_mm(p.reshape(b * oh * ow, k), prep['w1'], prep['b1'])
    a = a.reshape(b, oh, ow, -1)                              # (B,20,20,32)

    # conv2
    p = _patches(a, 4, 4, 2, ('NHWC', 'OIHW', 'NHWC'))        # (B,9,9,512)
    oh, ow, k = p.shape[1], p.shape[2], p.shape[3]
    a = conv_mm(p.reshape(b * oh * ow, k), prep['w2'], prep['b2'])
    a = a.reshape(b, oh, ow, -1)                              # (B,9,9,64)

    # conv3
    p = _patches(a, 3, 3, 1, ('NHWC', 'OIHW', 'NHWC'))        # (B,7,7,576)
    oh, ow, k = p.shape[1], p.shape[2], p.shape[3]
    a = conv_mm(p.reshape(b * oh * ow, k), prep['w3'], prep['b3'])  # (B*49,64)

    # Flatten: rows are (b, y, x), columns c -> per-sample feature order
    # (y, x, c).  fc4's weight rows were permuted once in prepare_params to
    # this order, so this is a FREE reshape (no transpose).
    flat = a.reshape(b, -1)                                   # (B, 3136) bf16
    flat = jnp.pad(flat, ((0, 0), (0, prep['w4'].shape[0] - flat.shape[1])))
    return fc45(flat, prep['w4'], prep['b4'], prep['w5'], prep['b5'])


def prepare_params(p):
    """One-time layout/dtype prep (done outside the per-step forward)."""
    f32, bf16 = jnp.float32, jnp.bfloat16

    def conv_w(w):
        # Flatten (Cout,Cin,kh,kw) -> (K,Cout) using the SAME K ordering that
        # conv_general_dilated_patches produces for the activations, by
        # running the patch extractor on the weight itself (convention-proof).
        cout, cin, kh, kw = w.shape
        wf = lax.conv_general_dilated_patches(w, (kh, kw), (1, 1), 'VALID')
        return wf.reshape(cout, cin * kh * kw).T.astype(bf16)

    # fc4: torch flattens conv3 output as (c, y, x); our flatten is (y, x, c).
    # Permute fc4 weight rows accordingly, then zero-pad K 3136 -> 3200 so the
    # fc45 kernel can tile it in 640-wide (lane-aligned) chunks.
    n_hid, k_fc = p["fc4_w"].shape                  # (512, 3136)
    c3 = p["conv3_w"].shape[0]                      # 64
    sp = k_fc // c3                                 # 49
    tk = 640
    k_pad = ((k_fc + tk - 1) // tk) * tk            # 3200
    w4 = p["fc4_w"].reshape(n_hid, c3, sp)          # [n, c, s]
    w4 = jnp.transpose(w4, (2, 1, 0)).reshape(k_fc, n_hid)   # row = s*64 + c
    w4 = jnp.pad(w4, ((0, k_pad - k_fc), (0, 0))).astype(bf16)

    return {
        "w1": conv_w(p["conv1_w"]), "b1": p["conv1_b"].reshape(1, -1).astype(f32),
        "w2": conv_w(p["conv2_w"]), "b2": p["conv2_b"].reshape(1, -1).astype(f32),
        "w3": conv_w(p["conv3_w"]), "b3": p["conv3_b"].reshape(1, -1).astype(f32),
        "w4": w4, "b4": p["fc4_b"].reshape(1, -1).astype(f32),
        "w5": p["fc5_w"].T.astype(bf16), "b5": p["fc5_b"].reshape(1, -1).astype(f32),
    }


def init_params(key):
    ks = jax.random.split(key, 10)
    scale = 0.05
    return {
        "conv1_w": scale * jax.random.normal(ks[0], (32, 4, 8, 8), jnp.float32),
        "conv1_b": scale * jax.random.normal(ks[1], (32,), jnp.float32),
        "conv2_w": scale * jax.random.normal(ks[2], (64, 32, 4, 4), jnp.float32),
        "conv2_b": scale * jax.random.normal(ks[3], (64,), jnp.float32),
        "conv3_w": scale * jax.random.normal(ks[4], (64, 64, 3, 3), jnp.float32),
        "conv3_b": scale * jax.random.normal(ks[5], (64,), jnp.float32),
        "fc4_w":   scale * jax.random.normal(ks[6], (512, 3136), jnp.float32),
        "fc4_b":   scale * jax.random.normal(ks[7], (512,), jnp.float32),
        "fc5_w":   scale * jax.random.normal(ks[8], (4, 512), jnp.float32),
        "fc5_b":   scale * jax.random.normal(ks[9], (4,), jnp.float32),
    }


def dqn_reference(x, p):
    """Plain-JAX f32 reference matching the torch forward exactly."""
    a = jax.nn.relu(lax.conv(x, p["conv1_w"], (4, 4), "VALID")
                    + p["conv1_b"][None, :, None, None])
    a = jax.nn.relu(lax.conv(a, p["conv2_w"], (2, 2), "VALID")
                    + p["conv2_b"][None, :, None, None])
    a = jax.nn.relu(lax.conv(a, p["conv3_w"], (1, 1), "VALID")
                    + p["conv3_b"][None, :, None, None])
    a = a.reshape(a.shape[0], -1)
    a = jax.nn.relu(a @ p["fc4_w"].T + p["fc4_b"])
    return a @ p["fc5_w"].T + p["fc5_b"]


if __name__ == "__main__":
    key = jax.random.PRNGKey(0)
    kx, kp = jax.random.split(key)
    # fc4 expects 3136 = 64*7*7 features, which forces 84x84 spatial input
    # (standard Atari DQN frame size); batch kept small at 2.
    x = jax.random.uniform(kx, (2, 4, 84, 84), jnp.float32)
    params = init_params(kp)
    prep = prepare_params(params)          # one-time weight layout/dtype prep

    fwd = jax.jit(dqn_forward)
    out = jax.block_until_ready(fwd(x, prep))

    assert out.shape == (2, 4), out.shape
    assert out.dtype == jnp.float32

    # numerical sanity check vs f32 reference (bf16 matmul operands => loose tol)
    ref = dqn_reference(x, params)
    err = float(jnp.max(jnp.abs(out - ref)))
    assert err < 0.1, f"max abs err vs reference too large: {err}"

    print("KERNEL_OK")
</pallas_src>

<mosaic_0001>
module attributes {stable_mosaic.version = 11 : i64} {
  func.func @_conv_mm_kernel(%arg0: i32, %arg1: memref<800x256xbf16, #tpu.memory_space<vmem>>, %arg2: memref<256x32xbf16, #tpu.memory_space<vmem>>, %arg3: memref<1x32xf32, #tpu.memory_space<vmem>>, %arg4: memref<800x32xbf16, #tpu.memory_space<vmem>>) attributes {dimension_semantics = [#tpu.dimension_semantics<parallel>], iteration_bounds = array<i64: 1>, scalar_prefetch = 0 : i64, scratch_operands = 0 : i64, tpu.core_type = #tpu.core_type<tc>, window_params = [{transform_indices = @transform_0, window_bounds = array<i64: 800, 256>}, {pipeline_mode = #tpu.pipeline_mode<synchronous>, transform_indices = @transform_1, window_bounds = array<i64: 256, 32>}, {pipeline_mode = #tpu.pipeline_mode<synchronous>, transform_indices = @transform_2, window_bounds = array<i64: 1, 32>}, {transform_indices = @transform_3, window_bounds = array<i64: 800, 32>}]} {
    %c0 = arith.constant 0 : index
    %c0_0 = arith.constant 0 : index
    %0 = vector.load %arg1[%c0, %c0_0] : memref<800x256xbf16, #tpu.memory_space<vmem>>, vector<800x256xbf16>
    %c0_1 = arith.constant 0 : index
    %c0_2 = arith.constant 0 : index
    %1 = vector.load %arg2[%c0_1, %c0_2] : memref<256x32xbf16, #tpu.memory_space<vmem>>, vector<256x32xbf16>
    %cst = arith.constant dense<0.000000e+00> : vector<800x32xf32>
    %2 = tpu.matmul %0, %1, %cst {dimension_numbers = #tpu.dot_dimension_numbers<[1], [0], [0], [1], [0, 0, 1, 1], [], []>} : vector<800x256xbf16>, vector<256x32xbf16>, vector<800x32xf32> -> vector<800x32xf32>
    %c0_3 = arith.constant 0 : index
    %c0_4 = arith.constant 0 : index
    %3 = vector.load %arg3[%c0_3, %c0_4] : memref<1x32xf32, #tpu.memory_space<vmem>>, vector<1x32xf32>
    %4 = vector.broadcast %3 : vector<1x32xf32> to vector<800x32xf32>
    %5 = arith.addf %2, %4 : vector<800x32xf32>
    %cst_5 = arith.constant 0.000000e+00 : f32
    %6 = vector.broadcast %cst_5 : f32 to vector<800x32xf32>
    %7 = arith.maximumf %5, %6 : vector<800x32xf32>
    %8 = arith.truncf %7 : vector<800x32xf32> to vector<800x32xbf16>
    %c0_6 = arith.constant 0 : index
    %c0_7 = arith.constant 0 : index
    %9 = vector.load %arg4[%c0_6, %c0_7] : memref<800x32xbf16, #tpu.memory_space<vmem>>, vector<800x32xbf16>
    tpu.vector_store %arg4[%c0_6, %c0_7], %8 {strides = array<i32>} : memref<800x32xbf16, #tpu.memory_space<vmem>>, vector<800x32xbf16>,
    return
  }
  func.func @transform_0(%arg0: i32) -> (i32, i32) {
    %c0_i32 = arith.constant 0 : i32
    %c0_i32_0 = arith.constant 0 : i32
    return %arg0, %c0_i32 : i32, i32
  }
  func.func @transform_1(%arg0: i32) -> (i32, i32) {
    %c0_i32 = arith.constant 0 : i32
    %c0_i32_0 = arith.constant 0 : i32
    %c0_i32_1 = arith.constant 0 : i32
    return %c0_i32, %c0_i32_0 : i32, i32
  }
  func.func @transform_2(%arg0: i32) -> (i32, i32) {
    %c0_i32 = arith.constant 0 : i32
    %c0_i32_0 = arith.constant 0 : i32
    %c0_i32_1 = arith.constant 0 : i32
    return %c0_i32, %c0_i32_0 : i32, i32
  }
  func.func @transform_3(%arg0: i32) -> (i32, i32) {
    %c0_i32 = arith.constant 0 : i32
    %c0_i32_0 = arith.constant 0 : i32
    return %arg0, %c0_i32 : i32, i32
  }
}

module attributes {stable_mosaic.version = 11 : i64} {
  func.func @_conv_mm_kernel(%arg0: i32, %arg1: memref<162x512xbf16, #tpu.memory_space<vmem>>, %arg2: memref<512x64xbf16, #tpu.memory_space<vmem>>, %arg3: memref<1x64xf32, #tpu.memory_space<vmem>>, %arg4: memref<162x64xbf16, #tpu.memory_space<vmem>>) attributes {dimension_semantics = [#tpu.dimension_semantics<parallel>], iteration_bounds = array<i64: 1>, scalar_prefetch = 0 : i64, scratch_operands = 0 : i64, tpu.core_type = #tpu.core_type<tc>, window_params = [{transform_indices = @transform_0, window_bounds = array<i64: 162, 512>}, {pipeline_mode = #tpu.pipeline_mode<synchronous>, transform_indices = @transform_1, window_bounds = array<i64: 512, 64>}, {pipeline_mode = #tpu.pipeline_mode<synchronous>, transform_indices = @transform_2, window_bounds = array<i64: 1, 64>}, {transform_indices = @transform_3, window_bounds = array<i64: 162, 64>}]} {
    %c0 = arith.constant 0 : index
    %c0_0 = arith.constant 0 : index
    %0 = vector.load %arg1[%c0, %c0_0] : memref<162x512xbf16, #tpu.memory_space<vmem>>, vector<162x512xbf16>
    %c0_1 = arith.constant 0 : index
    %c0_2 = arith.constant 0 : index
    %1 = vector.load %arg2[%c0_1, %c0_2] : memref<512x64xbf16, #tpu.memory_space<vmem>>, vector<512x64xbf16>
    %cst = arith.constant dense<0.000000e+00> : vector<162x64xf32>
    %2 = tpu.matmul %0, %1, %cst {dimension_numbers = #tpu.dot_dimension_numbers<[1], [0], [0], [1], [0, 0, 1, 1], [], []>} : vector<162x512xbf16>, vector<512x64xbf16>, vector<162x64xf32> -> vector<162x64xf32>
    %c0_3 = arith.constant 0 : index
    %c0_4 = arith.constant 0 : index
    %3 = vector.load %arg3[%c0_3, %c0_4] : memref<1x64xf32, #tpu.memory_space<vmem>>, vector<1x64xf32>
    %4 = vector.broadcast %3 : vector<1x64xf32> to vector<162x64xf32>
    %5 = arith.addf %2, %4 : vector<162x64xf32>
    %cst_5 = arith.constant 0.000000e+00 : f32
    %6 = vector.broadcast %cst_5 : f32 to vector<162x64xf32>
    %7 = arith.maximumf %5, %6 : vector<162x64xf32>
    %8 = arith.truncf %7 : vector<162x64xf32> to vector<162x64xbf16>
    %c0_6 = arith.constant 0 : index
    %c0_7 = arith.constant 0 : index
    %9 = vector.load %arg4[%c0_6, %c0_7] : memref<162x64xbf16, #tpu.memory_space<vmem>>, vector<162x64xbf16>
    tpu.vector_store %arg4[%c0_6, %c0_7], %8 {strides = array<i32>} : memref<162x64xbf16, #tpu.memory_space<vmem>>, vector<162x64xbf16>,
    return
  }
  func.func @transform_0(%arg0: i32) -> (i32, i32) {
    %c0_i32 = arith.constant 0 : i32
    %c0_i32_0 = arith.constant 0 : i32
    return %arg0, %c0_i32 : i32, i32
  }
  func.func @transform_1(%arg0: i32) -> (i32, i32) {
    %c0_i32 = arith.constant 0 : i32
    %c0_i32_0 = arith.constant 0 : i32
    %c0_i32_1 = arith.constant 0 : i32
    return %c0_i32, %c0_i32_0 : i32, i32
  }
  func.func @transform_2(%arg0: i32) -> (i32, i32) {
    %c0_i32 = arith.constant 0 : i32
    %c0_i32_0 = arith.constant 0 : i32
    %c0_i32_1 = arith.constant 0 : i32
    return %c0_i32, %c0_i32_0 : i32, i32
  }
  func.func @transform_3(%arg0: i32) -> (i32, i32) {
    %c0_i32 = arith.constant 0 : i32
    %c0_i32_0 = arith.constant 0 : i32
    return %arg0, %c0_i32 : i32, i32
  }
}

module attributes {stable_mosaic.version = 11 : i64} {
  func.func @_conv_mm_kernel(%arg0: i32, %arg1: memref<98x576xbf16, #tpu.memory_space<vmem>>, %arg2: memref<576x64xbf16, #tpu.memory_space<vmem>>, %arg3: memref<1x64xf32, #tpu.memory_space<vmem>>, %arg4: memref<98x64xbf16, #tpu.memory_space<vmem>>) attributes {dimension_semantics = [#tpu.dimension_semantics<parallel>], iteration_bounds = array<i64: 1>, scalar_prefetch = 0 : i64, scratch_operands = 0 : i64, tpu.core_type = #tpu.core_type<tc>, window_params = [{transform_indices = @transform_0, window_bounds = array<i64: 98, 576>}, {pipeline_mode = #tpu.pipeline_mode<synchronous>, transform_indices = @transform_1, window_bounds = array<i64: 576, 64>}, {pipeline_mode = #tpu.pipeline_mode<synchronous>, transform_indices = @transform_2, window_bounds = array<i64: 1, 64>}, {transform_indices = @transform_3, window_bounds = array<i64: 98, 64>}]} {
    %c0 = arith.constant 0 : index
    %c0_0 = arith.constant 0 : index
    %0 = vector.load %arg1[%c0, %c0_0] : memref<98x576xbf16, #tpu.memory_space<vmem>>, vector<98x576xbf16>
    %c0_1 = arith.constant 0 : index
    %c0_2 = arith.constant 0 : index
    %1 = vector.load %arg2[%c0_1, %c0_2] : memref<576x64xbf16, #tpu.memory_space<vmem>>, vector<576x64xbf16>
    %cst = arith.constant dense<0.000000e+00> : vector<98x64xf32>
    %2 = tpu.matmul %0, %1, %cst {dimension_numbers = #tpu.dot_dimension_numbers<[1], [0], [0], [1], [0, 0, 1, 1], [], []>} : vector<98x576xbf16>, vector<576x64xbf16>, vector<98x64xf32> -> vector<98x64xf32>
    %c0_3 = arith.constant 0 : index
    %c0_4 = arith.constant 0 : index
    %3 = vector.load %arg3[%c0_3, %c0_4] : memref<1x64xf32, #tpu.memory_space<vmem>>, vector<1x64xf32>
    %4 = vector.broadcast %3 : vector<1x64xf32> to vector<98x64xf32>
    %5 = arith.addf %2, %4 : vector<98x64xf32>
    %cst_5 = arith.constant 0.000000e+00 : f32
    %6 = vector.broadcast %cst_5 : f32 to vector<98x64xf32>
    %7 = arith.maximumf %5, %6 : vector<98x64xf32>
    %8 = arith.truncf %7 : vector<98x64xf32> to vector<98x64xbf16>
    %c0_6 = arith.constant 0 : index
    %c0_7 = arith.constant 0 : index
    %9 = vector.load %arg4[%c0_6, %c0_7] : memref<98x64xbf16, #tpu.memory_space<vmem>>, vector<98x64xbf16>
    tpu.vector_store %arg4[%c0_6, %c0_7], %8 {strides = array<i32>} : memref<98x64xbf16, #tpu.memory_space<vmem>>, vector<98x64xbf16>,
    return
  }
  func.func @transform_0(%arg0: i32) -> (i32, i32) {
    %c0_i32 = arith.constant 0 : i32
    %c0_i32_0 = arith.constant 0 : i32
    return %arg0, %c0_i32 : i32, i32
  }
  func.func @transform_1(%arg0: i32) -> (i32, i32) {
    %c0_i32 = arith.constant 0 : i32
    %c0_i32_0 = arith.constant 0 : i32
    %c0_i32_1 = arith.constant 0 : i32
    return %c0_i32, %c0_i32_0 : i32, i32
  }
  func.func @transform_2(%arg0: i32) -> (i32, i32) {
    %c0_i32 = arith.constant 0 : i32
    %c0_i32_0 = arith.constant 0 : i32
    %c0_i32_1 = arith.constant 0 : i32
    return %c0_i32, %c0_i32_0 : i32, i32
  }
  func.func @transform_3(%arg0: i32) -> (i32, i32) {
    %c0_i32 = arith.constant 0 : i32
    %c0_i32_0 = arith.constant 0 : i32
    return %arg0, %c0_i32 : i32, i32
  }
}

module attributes {stable_mosaic.version = 11 : i64} {
  func.func @_fc45_kernel(%arg0: i32, %arg1: memref<2x640xbf16, #tpu.memory_space<vmem>>, %arg2: memref<640x512xbf16, #tpu.memory_space<vmem>>, %arg3: memref<1x512xf32, #tpu.memory_space<vmem>>, %arg4: memref<512x4xbf16, #tpu.memory_space<vmem>>, %arg5: memref<1x4xf32, #tpu.memory_space<vmem>>, %arg6: memref<2x4xf32, #tpu.memory_space<vmem>>, %arg7: memref<2x512xf32, #tpu.memory_space<vmem>>) attributes {dimension_semantics = [#tpu.dimension_semantics<arbitrary>], iteration_bounds = array<i64: 5>, scalar_prefetch = 0 : i64, scratch_operands = 1 : i64, tpu.core_type = #tpu.core_type<tc>, window_params = [{transform_indices = @transform_0, window_bounds = array<i64: 2, 640>}, {transform_indices = @transform_1, window_bounds = array<i64: 640, 512>}, {pipeline_mode = #tpu.pipeline_mode<synchronous>, transform_indices = @transform_2, window_bounds = array<i64: 1, 512>}, {pipeline_mode = #tpu.pipeline_mode<synchronous>, transform_indices = @transform_3, window_bounds = array<i64: 512, 4>}, {pipeline_mode = #tpu.pipeline_mode<synchronous>, transform_indices = @transform_4, window_bounds = array<i64: 1, 4>}, {pipeline_mode = #tpu.pipeline_mode<synchronous>, transform_indices = @transform_5, window_bounds = array<i64: 2, 4>}]} {
    %c0_i32 = arith.constant 0 : i32
    %0 = arith.cmpi eq, %arg0, %c0_i32 : i32
    %1 = arith.extui %0 : i1 to i32
    %c0_i32_0 = arith.constant 0 : i32
    %2 = arith.cmpi ne, %1, %c0_i32_0 : i32
    scf.if %2 {
      %cst_9 = arith.constant 0.000000e+00 : f32
      %12 = vector.broadcast %cst_9 : f32 to vector<2x512xf32>
      %c0_10 = arith.constant 0 : index
      %c0_11 = arith.constant 0 : index
      %13 = vector.load %arg7[%c0_10, %c0_11] : memref<2x512xf32, #tpu.memory_space<vmem>>, vector<2x512xf32>
      tpu.vector_store %arg7[%c0_10, %c0_11], %12 {strides = array<i32>} : memref<2x512xf32, #tpu.memory_space<vmem>>, vector<2x512xf32>,
    } else {
    }
    %c0 = arith.constant 0 : index
    %c0_1 = arith.constant 0 : index
    %3 = vector.load %arg7[%c0, %c0_1] : memref<2x512xf32, #tpu.memory_space<vmem>>, vector<2x512xf32>
    %c0_2 = arith.constant 0 : index
    %c0_3 = arith.constant 0 : index
    %4 = vector.load %arg1[%c0_2, %c0_3] : memref<2x640xbf16, #tpu.memory_space<vmem>>, vector<2x640xbf16>
    %c0_4 = arith.constant 0 : index
    %c0_5 = arith.constant 0 : index
    %5 = vector.load %arg2[%c0_4, %c0_5] : memref<640x512xbf16, #tpu.memory_space<vmem>>, vector<640x512xbf16>
    %cst = arith.constant dense<0.000000e+00> : vector<2x512xf32>
    %6 = tpu.matmul %4, %5, %cst {dimension_numbers = #tpu.dot_dimension_numbers<[1], [0], [0], [1], [0, 0, 1, 1], [], []>} : vector<2x640xbf16>, vector<640x512xbf16>, vector<2x512xf32> -> vector<2x512xf32>
    %7 = arith.addf %3, %6 : vector<2x512xf32>
    %c0_6 = arith.constant 0 : index
    %c0_7 = arith.constant 0 : index
    %8 = vector.load %arg7[%c0_6, %c0_7] : memref<2x512xf32, #tpu.memory_space<vmem>>, vector<2x512xf32>
    tpu.vector_store %arg7[%c0_6, %c0_7], %7 {strides = array<i32>} : memref<2x512xf32, #tpu.memory_space<vmem>>, vector<2x512xf32>,
    %c4_i32 = arith.constant 4 : i32
    %9 = arith.cmpi eq, %arg0, %c4_i32 : i32
    %10 = arith.extui %9 : i1 to i32
    %c0_i32_8 = arith.constant 0 : i32
    %11 = arith.cmpi ne, %10, %c0_i32_8 : i32
    scf.if %11 {
      %c0_9 = arith.constant 0 : index
      %c0_10 = arith.constant 0 : index
      %12 = vector.load %arg7[%c0_9, %c0_10] : memref<2x512xf32, #tpu.memory_space<vmem>>, vector<2x512xf32>
      %c0_11 = arith.constant 0 : index
      %c0_12 = arith.constant 0 : index
      %13 = vector.load %arg3[%c0_11, %c0_12] : memref<1x512xf32, #tpu.memory_space<vmem>>, vector<1x512xf32>
      %14 = vector.broadcast %13 : vector<1x512xf32> to vector<2x512xf32>
      %15 = arith.addf %12, %14 : vector<2x512xf32>
      %cst_13 = arith.constant 0.000000e+00 : f32
      %16 = vector.broadcast %cst_13 : f32 to vector<2x512xf32>
      %17 = arith.maximumf %15, %16 : vector<2x512xf32>
      %18 = arith.truncf %17 : vector<2x512xf32> to vector<2x512xbf16>
      %c0_14 = arith.constant 0 : index
      %c0_15 = arith.constant 0 : index
      %19 = vector.load %arg4[%c0_14, %c0_15] : memref<512x4xbf16, #tpu.memory_space<vmem>>, vector<512x4xbf16>
      %cst_16 = arith.constant dense<0.000000e+00> : vector<2x4xf32>
      %20 = tpu.matmul %18, %19, %cst_16 {dimension_numbers = #tpu.dot_dimension_numbers<[1], [0], [0], [1], [0, 0, 1, 1], [], []>} : vector<2x512xbf16>, vector<512x4xbf16>, vector<2x4xf32> -> vector<2x4xf32>
      %c0_17 = arith.constant 0 : index
      %c0_18 = arith.constant 0 : index
      %21 = vector.load %arg5[%c0_17, %c0_18] : memref<1x4xf32, #tpu.memory_space<vmem>>, vector<1x4xf32>
      %22 = vector.broadcast %21 : vector<1x4xf32> to vector<2x4xf32>
      %23 = arith.addf %20, %22 : vector<2x4xf32>
      %c0_19 = arith.constant 0 : index
      %c0_20 = arith.constant 0 : index
      %24 = vector.load %arg6[%c0_19, %c0_20] : memref<2x4xf32, #tpu.memory_space<vmem>>, vector<2x4xf32>
      tpu.vector_store %arg6[%c0_19, %c0_20], %23 {strides = array<i32>} : memref<2x4xf32, #tpu.memory_space<vmem>>, vector<2x4xf32>,
    } else {
    }
    return
  }
  func.func @transform_0(%arg0: i32) -> (i32, i32) {
    %c0_i32 = arith.constant 0 : i32
    %c0_i32_0 = arith.constant 0 : i32
    return %c0_i32, %arg0 : i32, i32
  }
  func.func @transform_1(%arg0: i32) -> (i32, i32) {
    %c0_i32 = arith.constant 0 : i32
    %c0_i32_0 = arith.constant 0 : i32
    return %arg0, %c0_i32 : i32, i32
  }
  func.func @transform_2(%arg0: i32) -> (i32, i32) {
    %c0_i32 = arith.constant 0 : i32
    %c0_i32_0 = arith.constant 0 : i32
    %c0_i32_1 = arith.constant 0 : i32
    return %c0_i32, %c0_i32_0 : i32, i32
  }
  func.func @transform_3(%arg0: i32) -> (i32, i32) {
    %c0_i32 = arith.constant 0 : i32
    %c0_i32_0 = arith.constant 0 : i32
    %c0_i32_1 = arith.constant 0 : i32
    return %c0_i32, %c0_i32_0 : i32, i32
  }
  func.func @transform_4(%arg0: i32) -> (i32, i32) {
    %c0_i32 = arith.constant 0 : i32
    %c0_i32_0 = arith.constant 0 : i32
    %c0_i32_1 = arith.constant 0 : i32
    return %c0_i32, %c0_i32_0 : i32, i32
  }
  func.func @transform_5(%arg0: i32) -> (i32, i32) {
    %c0_i32 = arith.constant 0 : i32
    %c0_i32_0 = arith.constant 0 : i32
    %c0_i32_1 = arith.constant 0 : i32
    return %c0_i32, %c0_i32_0 : i32, i32
  }
}

</mosaic_0001>

<llo_original>
// kernel: dqn_forward.4
$region0: #{dqn_forward.4}
  #allocation0 [shape = 'u32[]', space=smem, size = 0x4, offset = 0x4, fixed_abs, tag = 'smem constant byte address 0x4 - core index']
  #allocation1 [shape = 'u32[144,128]{1,0:T(1,128)}', space=vmem, size = 0x12000, scoped, tag = 'internal scratch']
  %s0 = inlined_call_operand.vmem [shape: bf16[800,256], index: 0, kind: input, shape index: {}]
  %s1 = inlined_call_operand.vmem [shape: bf16[256,32], index: 1, kind: input, shape index: {}]
  %s2 = inlined_call_operand.vmem [shape: f32[1,32], index: 2, kind: input, shape index: {}]
  %s3 = inlined_call_operand.vmem [shape: bf16[800,32], index: 3, kind: output, shape index: {}]
  %s4 = sld [smem:[#allocation0]]
  $region22: #{dqn_forward.4} parent=0
    _
  %s6 = ssub.s32 1, %s4
  %s7 = scalar_select 0, %s6, %s4
  // Predicated region
  $region2: #{dqn_forward.4} parent=0 // pred_check
    _
  $region3: #{dqn_forward.4} parent=0 // pred_check_branch
    %9 = sbr.rel (0) target = $region5
  $region4: #{dqn_forward.4} parent=0 // pred_region
    _
  $region5: #{dqn_forward.4} parent=0 // pred_fallthru
    _
  // Predicated region
  $region6: #{dqn_forward.4} parent=0 // pred_check
    _
  $region7: #{dqn_forward.4} parent=0 // pred_check_branch
    %11 = sbr.rel (0) target = $region9
  $region8: #{dqn_forward.4} parent=0 // pred_region
    _
  $region9: #{dqn_forward.4} parent=0 // pred_fallthru
    _
  // Predicated region
  $region10: #{dqn_forward.4} parent=0 // pred_check
    _
  $region11: #{dqn_forward.4} parent=0 // pred_check_branch
    %13 = sbr.rel (0) target = $region13
  $region12: #{dqn_forward.4} parent=0 // pred_region
    _
  $region13: #{dqn_forward.4} parent=0 // pred_fallthru
    _
  %v15 = vld [vmem:[%s0] sm:$0xff]
  %v16 = vld [vmem:[%s0 + $0x8] sm:$0xff]
  %v17 = vld [vmem:[%s0 + $0x10] sm:$0xff]
  %v18 = vld [vmem:[%s0 + $0x18] sm:$0xff]
  %v19 = vld [vmem:[%s0 + $0x20] sm:$0xff]
  %v20 = vld [vmem:[%s0 + $0x28] sm:$0xff]
  %v21 = vld [vmem:[%s0 + $0x30] sm:$0xff]
  %v22 = vld [vmem:[%s0 + $0x38] sm:$0xff]
  %v23 = vld [vmem:[%s0 + $0x40] sm:$0xff]
  %v24 = vld [vmem:[%s0 + $0x48] sm:$0xff]
  %v25 = vld [vmem:[%s0 + $0x50] sm:$0xff]
  %v26 = vld [vmem:[%s0 + $0x58] sm:$0xff]
  %v27 = vld [vmem:[%s0 + $0x60] sm:$0xff]
  %v28 = vld [vmem:[%s0 + $0x68] sm:$0xff]
  %v29 = vld [vmem:[%s0 + $0x70] sm:$0xff]
  %v30 = vld [vmem:[%s0 + $0x78] sm:$0xff]
  %v31 = vld [vmem:[%s0 + $0x80] sm:$0xff]
  %v32 = vld [vmem:[%s0 + $0x88] sm:$0xff]
  %v33 = vld [vmem:[%s0 + $0x90] sm:$0xff]
  %v34 = vld [vmem:[%s0 + $0x98] sm:$0xff]
  %v35 = vld [vmem:[%s0 + $0xa0] sm:$0xff]
  %v36 = vld [vmem:[%s0 + $0xa8] sm:$0xff]
  %v37 = vld [vmem:[%s0 + $0xb0] sm:$0xff]
  %v38 = vld [vmem:[%s0 + $0xb8] sm:$0xff]
  %v39 = vld [vmem:[%s0 + $0xc0] sm:$0xff]
  %v40 = vld [vmem:[%s0 + $0xc8] sm:$0xff]
  %v41 = vld [vmem:[%s0 + $0xd0] sm:$0xff]
  %v42 = vld [vmem:[%s0 + $0xd8] sm:$0xff]
  %v43 = vld [vmem:[%s0 + $0xe0] sm:$0xff]
  %v44 = vld [vmem:[%s0 + $0xe8] sm:$0xff]
  %v45 = vld [vmem:[%s0 + $0xf0] sm:$0xff]
  %v46 = vld [vmem:[%s0 + $0xf8] sm:$0xff]
  %v47 = vld [vmem:[%s0 + $0x100] sm:$0xff]
  %v48 = vld [vmem:[%s0 + $0x108] sm:$0xff]
  %v49 = vld [vmem:[%s0 + $0x110] sm:$0xff]
  %v50 = vld [vmem:[%s0 + $0x118] sm:$0xff]
  %v51 = vld [vmem:[%s0 + $0x120] sm:$0xff]
  %v52 = vld [vmem:[%s0 + $0x128] sm:$0xff]
  %v53 = vld [vmem:[%s0 + $0x130] sm:$0xff]
  %v54 = vld [vmem:[%s0 + $0x138] sm:$0xff]
  %v55 = vld [vmem:[%s0 + $0x140] sm:$0xff]
  %v56 = vld [vmem:[%s0 + $0x148] sm:$0xff]
  %v57 = vld [vmem:[%s0 + $0x150] sm:$0xff]
  %v58 = vld [vmem:[%s0 + $0x158] sm:$0xff]
  %v59 = vld [vmem:[%s0 + $0x160] sm:$0xff]
  %v60 = vld [vmem:[%s0 + $0x168] sm:$0xff]
  %v61 = vld [vmem:[%s0 + $0x170] sm:$0xff]
  %v62 = vld [vmem:[%s0 + $0x178] sm:$0xff]
  %v63 = vld [vmem:[%s0 + $0x180] sm:$0xff]
  %v64 = vld [vmem:[%s0 + $0x188] sm:$0xff]
  %v65 = vld [vmem:[%s0 + $0x190] sm:$0xff]
  %v66 = vld [vmem:[%s0 + $0x198] sm:$0xff]
  %v67 = vld [vmem:[%s0 + $0x1a0] sm:$0xff]
  %v68 = vld [vmem:[%s0 + $0x1a8] sm:$0xff]
  %v69 = vld [vmem:[%s0 + $0x1b0] sm:$0xff]
  %v70 = vld [vmem:[%s0 + $0x1b8] sm:$0xff]
  %v71 = vld [vmem:[%s0 + $0x1c0] sm:$0xff]
  %v72 = vld [vmem:[%s0 + $0x1c8] sm:$0xff]
  %v73 = vld [vmem:[%s0 + $0x1d0] sm:$0xff]
  %v74 = vld [vmem:[%s0 + $0x1d8] sm:$0xff]
  %v75 = vld [vmem:[%s0 + $0x1e0] sm:$0xff]
  %v76 = vld [vmem:[%s0 + $0x1e8] sm:$0xff]
  %v77 = vld [vmem:[%s0 + $0x1f0] sm:$0xff]
  %v78 = vld [vmem:[%s0 + $0x1f8] sm:$0xff]
  %v79 = vld [vmem:[%s0 + $0x200] sm:$0xff]
  %v80 = vld [vmem:[%s0 + $0x208] sm:$0xff]
  %v81 = vld [vmem:[%s0 + $0x210] sm:$0xff]
  %v82 = vld [vmem:[%s0 + $0x218] sm:$0xff]
  %v83 = vld [vmem:[%s0 + $0x220] sm:$0xff]
  %v84 = vld [vmem:[%s0 + $0x228] sm:$0xff]
  %v85 = vld [vmem:[%s0 + $0x230] sm:$0xff]
  %v86 = vld [vmem:[%s0 + $0x238] sm:$0xff]
  %v87 = vld [vmem:[%s0 + $0x240] sm:$0xff]
  %v88 = vld [vmem:[%s0 + $0x248] sm:$0xff]
  %v89 = vld [vmem:[%s0 + $0x250] sm:$0xff]
  %v90 = vld [vmem:[%s0 + $0x258] sm:$0xff]
  %v91 = vld [vmem:[%s0 + $0x260] sm:$0xff]
  %v92 = vld [vmem:[%s0 + $0x268] sm:$0xff]
  %v93 = vld [vmem:[%s0 + $0x270] sm:$0xff]
  %v94 = vld [vmem:[%s0 + $0x278] sm:$0xff]
  %v95 = vld [vmem:[%s0 + $0x280] sm:$0xff]
  %v96 = vld [vmem:[%s0 + $0x288] sm:$0xff]
  %v97 = vld [vmem:[%s0 + $0x290] sm:$0xff]
  %v98 = vld [vmem:[%s0 + $0x298] sm:$0xff]
  %v99 = vld [vmem:[%s0 + $0x2a0] sm:$0xff]
  %v100 = vld [vmem:[%s0 + $0x2a8] sm:$0xff]
  %v101 = vld [vmem:[%s0 + $0x2b0] sm:$0xff]
  %v102 = vld [vmem:[%s0 + $0x2b8] sm:$0xff]
  %v103 = vld [vmem:[%s0 + $0x2c0] sm:$0xff]
  %v104 = vld [vmem:[%s0 + $0x2c8] sm:$0xff]
  %v105 = vld [vmem:[%s0 + $0x2d0] sm:$0xff]
  %v106 = vld [vmem:[%s0 + $0x2d8] sm:$0xff]
  %v107 = vld [vmem:[%s0 + $0x2e0] sm:$0xff]
  %v108 = vld [vmem:[%s0 + $0x2e8] sm:$0xff]
  %v109 = vld [vmem:[%s0 + $0x2f0] sm:$0xff]
  %v110 = vld [vmem:[%s0 + $0x2f8] sm:$0xff]
  %v111 = vld [vmem:[%s0 + $0x300] sm:$0xff]
  %v112 = vld [vmem:[%s0 + $0x308] sm:$0xff]
  %v113 = vld [vmem:[%s0 + $0x310] sm:$0xff]
  %v114 = vld [vmem:[%s0 + $0x318] sm:$0xff]
  %v115 = vld [vmem:[%s1] sm:$0xf]
  %v116 = vld [vmem:[%s1 + $0x4] sm:$0xf]
  %v117 = vld [vmem:[%s1 + $0x8] sm:$0xf]
  %v118 = vld [vmem:[%s1 + $0xc] sm:$0xf]
  %v119 = vld [vmem:[%s1 + $0x10] sm:$0xf]
  %v120 = vld [vmem:[%s1 + $0x14] sm:$0xf]
  %v121 = vld [vmem:[%s1 + $0x18] sm:$0xf]
  %v122 = vld [vmem:[%s1 + $0x1c] sm:$0xf]
  %v123 = vld [vmem:[%s1 + $0x20] sm:$0xf]
  %v124 = vld [vmem:[%s1 + $0x24] sm:$0xf]
  %v125 = vld [vmem:[%s1 + $0x28] sm:$0xf]
  %v126 = vld [vmem:[%s1 + $0x2c] sm:$0xf]
  %v127 = vld [vmem:[%s1 + $0x30] sm:$0xf]
  %v128 = vld [vmem:[%s1 + $0x34] sm:$0xf]
  %v129 = vld [vmem:[%s1 + $0x38] sm:$0xf]
  %v130 = vld [vmem:[%s1 + $0x3c] sm:$0xf]
  %v131 = vld [vmem:[%s1 + $0x40] sm:$0xf]
  %v132 = vld [vmem:[%s1 + $0x44] sm:$0xf]
  %v133 = vld [vmem:[%s1 + $0x48] sm:$0xf]
  %v134 = vld [vmem:[%s1 + $0x4c] sm:$0xf]
  %v135 = vld [vmem:[%s1 + $0x50] sm:$0xf]
  %v136 = vld [vmem:[%s1 + $0x54] sm:$0xf]
  %v137 = vld [vmem:[%s1 + $0x58] sm:$0xf]
  %v138 = vld [vmem:[%s1 + $0x5c] sm:$0xf]
  %v139 = vld [vmem:[%s1 + $0x60] sm:$0xf]
  %v140 = vld [vmem:[%s1 + $0x64] sm:$0xf]
  %v141 = vld [vmem:[%s1 + $0x68] sm:$0xf]
  %v142 = vld [vmem:[%s1 + $0x6c] sm:$0xf]
  %v143 = vld [vmem:[%s1 + $0x70] sm:$0xf]
  %v144 = vld [vmem:[%s1 + $0x74] sm:$0xf]
  %v145 = vld [vmem:[%s1 + $0x78] sm:$0xf]
  %v146 = vld [vmem:[%s1 + $0x7c] sm:$0xf]
  %v147 = vld [vmem:[%s2] sm:$0x1]
  %v149 = vlaneseq
  %v150 = vshrl.u32 %v149, 7
  %v151 = vsub.s32 0, %v150
  %v152 = vrot.slane %v147, %v151
  %v254 = vunpack.c.l.b16 %v15
  %v255 = vunpack.c.h.b16 %v15
  %v256 = vunpack.c.l.b16 %v16
  %v257 = vunpack.c.h.b16 %v16
  %v258 = vunpack.c.l.b16 %v17
  %v259 = vunpack.c.h.b16 %v17
  %v260 = vunpack.c.l.b16 %v18
  %v261 = vunpack.c.h.b16 %v18
  %v262 = vunpack.c.l.b16 %v19
  %v263 = vunpack.c.h.b16 %v19
  %v264 = vunpack.c.l.b16 %v20
  %v265 = vunpack.c.h.b16 %v20
  %v266 = vunpack.c.l.b16 %v21
  %v267 = vunpack.c.h.b16 %v21
  %v268 = vunpack.c.l.b16 %v22
  %v269 = vunpack.c.h.b16 %v22
  %v270 = vunpack.c.l.b16 %v23
  %v271 = vunpack.c.h.b16 %v23
  %v272 = vunpack.c.l.b16 %v24
  %v273 = vunpack.c.h.b16 %v24
  %v274 = vunpack.c.l.b16 %v25
  %v275 = vunpack.c.h.b16 %v25
  %v276 = vunpack.c.l.b16 %v26
  %v277 = vunpack.c.h.b16 %v26
  %v278 = vunpack.c.l.b16 %v27
  %v279 = vunpack.c.h.b16 %v27
  %v280 = vunpack.c.l.b16 %v28
  %v281 = vunpack.c.h.b16 %v28
  %v282 = vunpack.c.l.b16 %v29
  %v283 = vunpack.c.h.b16 %v29
  %v284 = vunpack.c.l.b16 %v30
  %v285 = vunpack.c.h.b16 %v30
  %v286 = vunpack.c.l.b16 %v31
  %v287 = vunpack.c.h.b16 %v31
  %v288 = vunpack.c.l.b16 %v32
  %v289 = vunpack.c.h.b16 %v32
  %v290 = vunpack.c.l.b16 %v33
  %v291 = vunpack.c.h.b16 %v33
  %v292 = vunpack.c.l.b16 %v34
  %v293 = vunpack.c.h.b16 %v34
  %v294 = vunpack.c.l.b16 %v35
  %v295 = vunpack.c.h.b16 %v35
  %v296 = vunpack.c.l.b16 %v36
  %v297 = vunpack.c.h.b16 %v36
  %v298 = vunpack.c.l.b16 %v37
  %v299 = vunpack.c.h.b16 %v37
  %v300 = vunpack.c.l.b16 %v38
  %v301 = vunpack.c.h.b16 %v38
  %v302 = vunpack.c.l.b16 %v39
  %v303 = vunpack.c.h.b16 %v39
  %v304 = vunpack.c.l.b16 %v40
  %v305 = vunpack.c.h.b16 %v40
  %v306 = vunpack.c.l.b16 %v41
  %v307 = vunpack.c.h.b16 %v41
  %v308 = vunpack.c.l.b16 %v42
  %v309 = vunpack.c.h.b16 %v42
  %v310 = vunpack.c.l.b16 %v43
  %v311 = vunpack.c.h.b16 %v43
  %v312 = vunpack.c.l.b16 %v44
  %v313 = vunpack.c.h.b16 %v44
  %v314 = vunpack.c.l.b16 %v45
  %v315 = vunpack.c.h.b16 %v45
  %v316 = vunpack.c.l.b16 %v46
  %v317 = vunpack.c.h.b16 %v46
  %v318 = vunpack.c.l.b16 %v47
  %v319 = vunpack.c.h.b16 %v47
  %v320 = vunpack.c.l.b16 %v48
  %v321 = vunpack.c.h.b16 %v48
  %v322 = vunpack.c.l.b16 %v49
  %v323 = vunpack.c.h.b16 %v49
  %v324 = vunpack.c.l.b16 %v50
  %v325 = vunpack.c.h.b16 %v50
  %v326 = vunpack.c.l.b16 %v51
  %v327 = vunpack.c.h.b16 %v51
  %v328 = vunpack.c.l.b16 %v52
  %v329 = vunpack.c.h.b16 %v52
  %v330 = vunpack.c.l.b16 %v53
  %v331 = vunpack.c.h.b16 %v53
  %v332 = vunpack.c.l.b16 %v54
  %v333 = vunpack.c.h.b16 %v54
  %v334 = vunpack.c.l.b16 %v55
  %v335 = vunpack.c.h.b16 %v55
  %v336 = vunpack.c.l.b16 %v56
  %v337 = vunpack.c.h.b16 %v56
  %v338 = vunpack.c.l.b16 %v57
  %v339 = vunpack.c.h.b16 %v57
  %v340 = vunpack.c.l.b16 %v58
  %v341 = vunpack.c.h.b16 %v58
  %v342 = vunpack.c.l.b16 %v59
  %v343 = vunpack.c.h.b16 %v59
  %v344 = vunpack.c.l.b16 %v60
  %v345 = vunpack.c.h.b16 %v60
  %v346 = vunpack.c.l.b16 %v61
  %v347 = vunpack.c.h.b16 %v61
  %v348 = vunpack.c.l.b16 %v62
  %v349 = vunpack.c.h.b16 %v62
  %v350 = vunpack.c.l.b16 %v63
  %v351 = vunpack.c.h.b16 %v63
  %v352 = vunpack.c.l.b16 %v64
  %v353 = vunpack.c.h.b16 %v64
  %v354 = vunpack.c.l.b16 %v65
  %v355 = vunpack.c.h.b16 %v65
  %v356 = vunpack.c.l.b16 %v66
  %v357 = vunpack.c.h.b16 %v66
  %v358 = vunpack.c.l.b16 %v67
  %v359 = vunpack.c.h.b16 %v67
  %v360 = vunpack.c.l.b16 %v68
  %v361 = vunpack.c.h.b16 %v68
  %v362 = vunpack.c.l.b16 %v69
  %v363 = vunpack.c.h.b16 %v69
  %v364 = vunpack.c.l.b16 %v70
  %v365 = vunpack.c.h.b16 %v70
  %v366 = vunpack.c.l.b16 %v71
  %v367 = vunpack.c.h.b16 %v71
  %v368 = vunpack.c.l.b16 %v72
  %v369 = vunpack.c.h.b16 %v72
  %v370 = vunpack.c.l.b16 %v73
  %v371 = vunpack.c.h.b16 %v73
  %v372 = vunpack.c.l.b16 %v74
  %v373 = vunpack.c.h.b16 %v74
  %v374 = vunpack.c.l.b16 %v75
  %v375 = vunpack.c.h.b16 %v75
  %v376 = vunpack.c.l.b16 %v76
  %v377 = vunpack.c.h.b16 %v76
  %v378 = vunpack.c.l.b16 %v77
  %v379 = vunpack.c.h.b16 %v77
  %v380 = vunpack.c.l.b16 %v78
  %v381 = vunpack.c.h.b16 %v78
  %v382 = vunpack.c.l.b16 %v79
  %v383 = vunpack.c.h.b16 %v79
  %v384 = vunpack.c.l.b16 %v80
  %v385 = vunpack.c.h.b16 %v80
  %v386 = vunpack.c.l.b16 %v81
  %v387 = vunpack.c.h.b16 %v81
  %v388 = vunpack.c.l.b16 %v82
  %v389 = vunpack.c.h.b16 %v82
  %v390 = vunpack.c.l.b16 %v83
  %v391 = vunpack.c.h.b16 %v83
  %v392 = vunpack.c.l.b16 %v84
  %v393 = vunpack.c.h.b16 %v84
  %v394 = vunpack.c.l.b16 %v85
  %v395 = vunpack.c.h.b16 %v85
  %v396 = vunpack.c.l.b16 %v86
  %v397 = vunpack.c.h.b16 %v86
  %v398 = vunpack.c.l.b16 %v87
  %v399 = vunpack.c.h.b16 %v87
  %v400 = vunpack.c.l.b16 %v88
  %v401 = vunpack.c.h.b16 %v88
  %v402 = vunpack.c.l.b16 %v89
  %v403 = vunpack.c.h.b16 %v89
  %v404 = vunpack.c.l.b16 %v90
  %v405 = vunpack.c.h.b16 %v90
  %v406 = vunpack.c.l.b16 %v91
  %v407 = vunpack.c.h.b16 %v91
  %v408 = vunpack.c.l.b16 %v92
  %v409 = vunpack.c.h.b16 %v92
  %v410 = vunpack.c.l.b16 %v93
  %v411 = vunpack.c.h.b16 %v93
  %v412 = vunpack.c.l.b16 %v94
  %v413 = vunpack.c.h.b16 %v94
  %v414 = vunpack.c.l.b16 %v95
  %v415 = vunpack.c.h.b16 %v95
  %v416 = vunpack.c.l.b16 %v96
  %v417 = vunpack.c.h.b16 %v96
  %v418 = vunpack.c.l.b16 %v97
  %v419 = vunpack.c.h.b16 %v97
  %v420 = vunpack.c.l.b16 %v98
  %v421 = vunpack.c.h.b16 %v98
  %v422 = vunpack.c.l.b16 %v99
  %v423 = vunpack.c.h.b16 %v99
  %v424 = vunpack.c.l.b16 %v100
  %v425 = vunpack.c.h.b16 %v100
  %v426 = vunpack.c.l.b16 %v101
  %v427 = vunpack.c.h.b16 %v101
  %v428 = vunpack.c.l.b16 %v102
  %v429 = vunpack.c.h.b16 %v102
  %v430 = vunpack.c.l.b16 %v103
  %v431 = vunpack.c.h.b16 %v103
  %v432 = vunpack.c.l.b16 %v104
  %v433 = vunpack.c.h.b16 %v104
  %v434 = vunpack.c.l.b16 %v105
  %v435 = vunpack.c.h.b16 %v105
  %v436 = vunpack.c.l.b16 %v106
  %v437 = vunpack.c.h.b16 %v106
  %v438 = vunpack.c.l.b16 %v107
  %v439 = vunpack.c.h.b16 %v107
  %v440 = vunpack.c.l.b16 %v108
  %v441 = vunpack.c.h.b16 %v108
  %v442 = vunpack.c.l.b16 %v109
  %v443 = vunpack.c.h.b16 %v109
  %v444 = vunpack.c.l.b16 %v110
  %v445 = vunpack.c.h.b16 %v110
  %v446 = vunpack.c.l.b16 %v111
  %v447 = vunpack.c.h.b16 %v111
  %v448 = vunpack.c.l.b16 %v112
  %v449 = vunpack.c.h.b16 %v112
  %v450 = vunpack.c.l.b16 %v113
  %v451 = vunpack.c.h.b16 %v113
  %v452 = vunpack.c.l.b16 %v114
  %v453 = vunpack.c.h.b16 %v114
  %v454 = vpack.c.b16 %v256, %v254
  %v455 = vpack.c.b16 %v257, %v255
  %v456 = vpack.c.b16 %v260, %v258
  %v457 = vpack.c.b16 %v261, %v259
  %v458 = vpack.c.b16 %v264, %v262
  %v459 = vpack.c.b16 %v265, %v263
  %v460 = vpack.c.b16 %v268, %v266
  %v461 = vpack.c.b16 %v269, %v267
  %v462 = vpack.c.b16 %v272, %v270
  %v463 = vpack.c.b16 %v273, %v271
  %v464 = vpack.c.b16 %v276, %v274
  %v465 = vpack.c.b16 %v277, %v275
  %v466 = vpack.c.b16 %v280, %v278
  %v467 = vpack.c.b16 %v281, %v279
  %v468 = vpack.c.b16 %v284, %v282
  %v469 = vpack.c.b16 %v285, %v283
  %v470 = vpack.c.b16 %v288, %v286
  %v471 = vpack.c.b16 %v289, %v287
  %v472 = vpack.c.b16 %v292, %v290
  %v473 = vpack.c.b16 %v293, %v291
  %v474 = vpack.c.b16 %v296, %v294
  %v475 = vpack.c.b16 %v297, %v295
  %v476 = vpack.c.b16 %v300, %v298
  %v477 = vpack.c.b16 %v301, %v299
  %v478 = vpack.c.b16 %v304, %v302
  %v479 = vpack.c.b16 %v305, %v303
  %v480 = vpack.c.b16 %v308, %v306
  %v481 = vpack.c.b16 %v309, %v307
  %v482 = vpack.c.b16 %v312, %v310
  %v483 = vpack.c.b16 %v313, %v311
  %v484 = vpack.c.b16 %v316, %v314
  %v485 = vpack.c.b16 %v317, %v315
  %v486 = vpack.c.b16 %v320, %v318
  %v487 = vpack.c.b16 %v321, %v319
  %v488 = vpack.c.b16 %v324, %v322
  %v489 = vpack.c.b16 %v325, %v323
  %v490 = vpack.c.b16 %v328, %v326
  %v491 = vpack.c.b16 %v329, %v327
  %v492 = vpack.c.b16 %v332, %v330
  %v493 = vpack.c.b16 %v333, %v331
  %v494 = vpack.c.b16 %v336, %v334
  %v495 = vpack.c.b16 %v337, %v335
  %v496 = vpack.c.b16 %v340, %v338
  %v497 = vpack.c.b16 %v341, %v339
  %v498 = vpack.c.b16 %v344, %v342
  %v499 = vpack.c.b16 %v345, %v343
  %v500 = vpack.c.b16 %v348, %v346
  %v501 = vpack.c.b16 %v349, %v347
  %v502 = vpack.c.b16 %v352, %v350
  %v503 = vpack.c.b16 %v353, %v351
  %v504 = vpack.c.b16 %v356, %v354
  %v505 = vpack.c.b16 %v357, %v355
  %v506 = vpack.c.b16 %v360, %v358
  %v507 = vpack.c.b16 %v361, %v359
  %v508 = vpack.c.b16 %v364, %v362
  %v509 = vpack.c.b16 %v365, %v363
  %v510 = vpack.c.b16 %v368, %v366
  %v511 = vpack.c.b16 %v369, %v367
  %v512 = vpack.c.b16 %v372, %v370
  %v513 = vpack.c.b16 %v373, %v371
  %v514 = vpack.c.b16 %v376, %v374
  %v515 = vpack.c.b16 %v377, %v375
  %v516 = vpack.c.b16 %v380, %v378
  %v517 = vpack.c.b16 %v381, %v379
  %v518 = vpack.c.b16 %v384, %v382
  %v519 = vpack.c.b16 %v385, %v383
  %v520 = vpack.c.b16 %v388, %v386
  %v521 = vpack.c.b16 %v389, %v387
  %v522 = vpack.c.b16 %v392, %v390
  %v523 = vpack.c.b16 %v393, %v391
  %v524 = vpack.c.b16 %v396, %v394
  %v525 = vpack.c.b16 %v397, %v395
  %v526 = vpack.c.b16 %v400, %v398
  %v527 = vpack.c.b16 %v401, %v399
  %v528 = vpack.c.b16 %v404, %v402
  %v529 = vpack.c.b16 %v405, %v403
  %v530 = vpack.c.b16 %v408, %v406
  %v531 = vpack.c.b16 %v409, %v407
  %v532 = vpack.c.b16 %v412, %v410
  %v533 = vpack.c.b16 %v413, %v411
  %v534 = vpack.c.b16 %v416, %v414
  %v535 = vpack.c.b16 %v417, %v415
  %v536 = vpack.c.b16 %v420, %v418
  %v537 = vpack.c.b16 %v421, %v419
  %v538 = vpack.c.b16 %v424, %v422
  %v539 = vpack.c.b16 %v425, %v423
  %v540 = vpack.c.b16 %v428, %v426
  %v541 = vpack.c.b16 %v429, %v427
  %v542 = vpack.c.b16 %v432, %v430
  %v543 = vpack.c.b16 %v433, %v431
  %v544 = vpack.c.b16 %v436, %v434
  %v545 = vpack.c.b16 %v437, %v435
  %v546 = vpack.c.b16 %v440, %v438
  %v547 = vpack.c.b16 %v441, %v439
  %v548 = vpack.c.b16 %v444, %v442
  %v549 = vpack.c.b16 %v445, %v443
  %v550 = vpack.c.b16 %v448, %v446
  %v551 = vpack.c.b16 %v449, %v447
  %v552 = vpack.c.b16 %v452, %v450
  %v553 = vpack.c.b16 %v453, %v451
  %v686 = vunpack.c.l.b16 %v115
  %v687 = vunpack.c.l.b16 %v116
  %v688 = vunpack.c.l.b16 %v117
  %v689 = vunpack.c.l.b16 %v118
  %v690 = vunpack.c.l.b16 %v119
  %v691 = vunpack.c.l.b16 %v120
  %v692 = vunpack.c.l.b16 %v121
  %v693 = vunpack.c.l.b16 %v122
  %v694 = vunpack.c.l.b16 %v123
  %v695 = vunpack.c.l.b16 %v124
  %v696 = vunpack.c.l.b16 %v125
  %v697 = vunpack.c.l.b16 %v126
  %v698 = vunpack.c.l.b16 %v127
  %v699 = vunpack.c.l.b16 %v128
  %v700 = vunpack.c.l.b16 %v129
  %v701 = vunpack.c.l.b16 %v130
  %v702 = vunpack.c.l.b16 %v131
  %v703 = vunpack.c.l.b16 %v132
  %v704 = vunpack.c.l.b16 %v133
  %v705 = vunpack.c.l.b16 %v134
  %v706 = vunpack.c.l.b16 %v135
  %v707 = vunpack.c.l.b16 %v136
  %v708 = vunpack.c.l.b16 %v137
  %v709 = vunpack.c.l.b16 %v138
  %v710 = vunpack.c.l.b16 %v139
  %v711 = vunpack.c.l.b16 %v140
  %v712 = vunpack.c.l.b16 %v141
  %v713 = vunpack.c.l.b16 %v142
  %v714 = vunpack.c.l.b16 %v143
  %v715 = vunpack.c.l.b16 %v144
  %v716 = vunpack.c.l.b16 %v145
  %v717 = vunpack.c.l.b16 %v146
  %v718 = vpack.c.b16 %v687, %v686
  %v719 = vpack.c.b16 %v689, %v688
  %v720 = vpack.c.b16 %v691, %v690
  %v721 = vpack.c.b16 %v693, %v692
  %v722 = vpack.c.b16 %v695, %v694
  %v723 = vpack.c.b16 %v697, %v696
  %v724 = vpack.c.b16 %v699, %v698
  %v725 = vpack.c.b16 %v701, %v700
  %v726 = vpack.c.b16 %v703, %v702
  %v727 = vpack.c.b16 %v705, %v704
  %v728 = vpack.c.b16 %v707, %v706
  %v729 = vpack.c.b16 %v709, %v708
  %v730 = vpack.c.b16 %v711, %v710
  %v731 = vpack.c.b16 %v713, %v712
  %v732 = vpack.c.b16 %v715, %v714
  %v733 = vpack.c.b16 %v717, %v716
  %750 = vmatprep.subr.bf16.mxu0 0
  %751 = vmatpush1.bf16.msra.mxu0 %v718
  %752 = vmatprep.subr.bf16.mxu0 0
  %753 = vmatpush1.bf16.msra.mxu0 %v719
  %754 = vmatprep.subr.bf16.mxu0 0
  %755 = vmatpush1.bf16.msra.mxu0 %v720
  %756 = vmatprep.subr.bf16.mxu0 0
  %757 = vmatpush1.bf16.msra.mxu0 %v721
  %758 = vmatprep.subr.bf16.mxu0 0
  %759 = vmatpush1.bf16.msra.mxu0 %v722
  %760 = vmatprep.subr.bf16.mxu0 0
  %761 = vmatpush1.bf16.msra.mxu0 %v723
  %762 = vmatprep.subr.bf16.mxu0 0
  %763 = vmatpush1.bf16.msra.mxu0 %v724
  %764 = vmatprep.subr.bf16.mxu0 0
  %765 = vmatpush1.bf16.msra.mxu0 %v725
  %766 = vmatprep.subr.bf16.mxu0 0
  %767 = vmatpush1.bf16.msra.mxu0 %v726
  %768 = vmatprep.subr.bf16.mxu0 0
  %769 = vmatpush1.bf16.msra.mxu0 %v727
  %770 = vmatprep.subr.bf16.mxu0 0
  %771 = vmatpush1.bf16.msra.mxu0 %v728
  %772 = vmatprep.subr.bf16.mxu0 0
  %773 = vmatpush1.bf16.msra.mxu0 %v729
  %774 = vmatprep.subr.bf16.mxu0 0
  %775 = vmatpush1.bf16.msra.mxu0 %v730
  %776 = vmatprep.subr.bf16.mxu0 0
  %777 = vmatpush1.bf16.msra.mxu0 %v731
  %778 = vmatprep.subr.bf16.mxu0 0
  %779 = vmatpush1.bf16.msra.mxu0 %v732
  %780 = vmatprep.subr.bf16.mxu0 0
  %781 = vmatpush1.bf16.msra.mxu0 %v733
  %782 = vmatprep.mubr.bf16.mxu0 %v455
  %783 = vmatmul.mubr.bf16.gmra.mrb[0].mxu0 %v454
  %v784 = vpop.f32.mrb[0].mxu0
  %v785 = vadd.f32 %v152, %v784
  %v786 = vpop.f32.mrb[0].mxu0
  %v787 = vpop.f32.mrb[0].mxu0
  %v788 = vadd.f32 %v152, %v787
  %v789 = vpop.f32.mrb[0].mxu0
  %790 = vmatprep.mubr.bf16.mxu0 %v457
  %791 = vmatmul.mubr.bf16.gmra.mrb[0].mxu0 %v456
  %v792 = vpop.f32.mrb[0].mxu0
  %v793 = vadd.f32 %v152, %v792
  %v794 = vpop.f32.mrb[0].mxu0
  %v795 = vpop.f32.mrb[0].mxu0
  %v796 = vadd.f32 %v152, %v795
  %v797 = vpop.f32.mrb[0].mxu0
  %798 = vmatprep.mubr.bf16.mxu0 %v459
  %799 = vmatmul.mubr.bf16.gmra.mrb[0].mxu0 %v458
  %v800 = vpop.f32.mrb[0].mxu0
  %v801 = vadd.f32 %v152, %v800
  %v802 = vpop.f32.mrb[0].mxu0
  %v803 = vpop.f32.mrb[0].mxu0
  %v804 = vadd.f32 %v152, %v803
  %v805 = vpop.f32.mrb[0].mxu0
  %806 = vmatprep.mubr.bf16.mxu0 %v461
  %807 = vmatmul.mubr.bf16.gmra.mrb[0].mxu0 %v460
  %v808 = vpop.f32.mrb[0].mxu0
  %v809 = vadd.f32 %v152, %v808
  %v810 = vpop.f32.mrb[0].mxu0
  %v811 = vpop.f32.mrb[0].mxu0
  %v812 = vadd.f32 %v152, %v811
  %v813 = vpop.f32.mrb[0].mxu0
  %814 = vmatprep.mubr.bf16.mxu0 %v463
  %815 = vmatmul.mubr.bf16.gmra.mrb[0].mxu0 %v462
  %v816 = vpop.f32.mrb[0].mxu0
  %v817 = vadd.f32 %v152, %v816
  %v818 = vpop.f32.mrb[0].mxu0
  %v819 = vpop.f32.mrb[0].mxu0
  %v820 = vadd.f32 %v152, %v819
  %v821 = vpop.f32.mrb[0].mxu0
  %822 = vmatprep.mubr.bf16.mxu0 %v465
  %823 = vmatmul.mubr.bf16.gmra.mrb[0].mxu0 %v464
  %v824 = vpop.f32.mrb[0].mxu0
  %v825 = vadd.f32 %v152, %v824
  %v826 = vpop.f32.mrb[0].mxu0
  %v827 = vpop.f32.mrb[0].mxu0
  %v828 = vadd.f32 %v152, %v827
  %v829 = vpop.f32.mrb[0].mxu0
  %830 = vmatprep.mubr.bf16.mxu0 %v467
  %831 = vmatmul.mubr.bf16.gmra.mrb[0].mxu0 %v466
  %v832 = vpop.f32.mrb[0].mxu0
  %v833 = vadd.f32 %v152, %v832
  %v834 = vpop.f32.mrb[0].mxu0
  %v835 = vpop.f32.mrb[0].mxu0
  %v836 = vadd.f32 %v152, %v835
  %v837 = vpop.f32.mrb[0].mxu0
  %838 = vmatprep.mubr.bf16.mxu0 %v469
  %839 = vmatmul.mubr.bf16.gmra.mrb[0].mxu0 %v468
  %v840 = vpop.f32.mrb[0].mxu0
  %v841 = vadd.f32 %v152, %v840
  %v842 = vpop.f32.mrb[0].mxu0
  %v843 = vpop.f32.mrb[0].mxu0
  %v844 = vadd.f32 %v152, %v843
  %v845 = vpop.f32.mrb[0].mxu0
  %846 = vmatprep.mubr.bf16.mxu0 %v471
  %847 = vmatmul.mubr.bf16.gmra.mrb[0].mxu0 %v470
  %v848 = vpop.f32.mrb[0].mxu0
  %v849 = vadd.f32 %v152, %v848
  %v850 = vpop.f32.mrb[0].mxu0
  %v851 = vpop.f32.mrb[0].mxu0
  %v852 = vadd.f32 %v152, %v851
  %v853 = vpop.f32.mrb[0].mxu0
  %854 = vmatprep.mubr.bf16.mxu0 %v473
  %855 = vmatmul.mubr.bf16.gmra.mrb[0].mxu0 %v472
  %v856 = vpop.f32.mrb[0].mxu0
  %v857 = vadd.f32 %v152, %v856
  %v858 = vpop.f32.mrb[0].mxu0
  %v859 = vpop.f32.mrb[0].mxu0
  %v860 = vadd.f32 %v152, %v859
  %v861 = vpop.f32.mrb[0].mxu0
  %862 = vmatprep.mubr.bf16.mxu0 %v475
  %863 = vmatmul.mubr.bf16.gmra.mrb[0].mxu0 %v474
  %v864 = vpop.f32.mrb[0].mxu0
  %v865 = vadd.f32 %v152, %v864
  %v866 = vpop.f32.mrb[0].mxu0
  %v867 = vpop.f32.mrb[0].mxu0
  %v868 = vadd.f32 %v152, %v867
  %v869 = vpop.f32.mrb[0].mxu0
  %870 = vmatprep.mubr.bf16.mxu0 %v477
  %871 = vmatmul.mubr.bf16.gmra.mrb[0].mxu0 %v476
  %v872 = vpop.f32.mrb[0].mxu0
  %v873 = vadd.f32 %v152, %v872
  %v874 = vpop.f32.mrb[0].mxu0
  %v875 = vpop.f32.mrb[0].mxu0
  %v876 = vadd.f32 %v152, %v875
  %v877 = vpop.f32.mrb[0].mxu0
  %878 = vmatprep.mubr.bf16.mxu0 %v479
  %879 = vmatmul.mubr.bf16.gmra.mrb[0].mxu0 %v478
  %v880 = vpop.f32.mrb[0].mxu0
  %v881 = vadd.f32 %v152, %v880
  %v882 = vpop.f32.mrb[0].mxu0
  %v883 = vpop.f32.mrb[0].mxu0
  %v884 = vadd.f32 %v152, %v883
  %v885 = vpop.f32.mrb[0].mxu0
  %886 = vmatprep.mubr.bf16.mxu0 %v481
  %887 = vmatmul.mubr.bf16.gmra.mrb[0].mxu0 %v480
  %v888 = vpop.f32.mrb[0].mxu0
  %v889 = vadd.f32 %v152, %v888
  %v890 = vpop.f32.mrb[0].mxu0
  %v891 = vpop.f32.mrb[0].mxu0
  %v892 = vadd.f32 %v152, %v891
  %v893 = vpop.f32.mrb[0].mxu0
  %894 = vmatprep.mubr.bf16.mxu0 %v483
  %895 = vmatmul.mubr.bf16.gmra.mrb[0].mxu0 %v482
  %v896 = vpop.f32.mrb[0].mxu0
  %v897 = vadd.f32 %v152, %v896
  %v898 = vpop.f32.mrb[0].mxu0
  %v899 = vpop.f32.mrb[0].mxu0
  %v900 = vadd.f32 %v152, %v899
  %v901 = vpop.f32.mrb[0].mxu0
  %902 = vmatprep.mubr.bf16.mxu0 %v485
  %903 = vmatmul.mubr.bf16.gmra.mrb[0].mxu0 %v484
  %v904 = vpop.f32.mrb[0].mxu0
  %v905 = vadd.f32 %v152, %v904
  %v906 = vpop.f32.mrb[0].mxu0
  %v907 = vpop.f32.mrb[0].mxu0
  %v908 = vadd.f32 %v152, %v907
  %v909 = vpop.f32.mrb[0].mxu0
  %910 = vmatprep.mubr.bf16.mxu0 %v487
  %911 = vmatmul.mubr.bf16.gmra.mrb[0].mxu0 %v486
  %v912 = vpop.f32.mrb[0].mxu0
  %v913 = vadd.f32 %v152, %v912
  %v914 = vpop.f32.mrb[0].mxu0
  %v915 = vpop.f32.mrb[0].mxu0
  %v916 = vadd.f32 %v152, %v915
  %v917 = vpop.f32.mrb[0].mxu0
  %918 = vmatprep.mubr.bf16.mxu0 %v489
  %919 = vmatmul.mubr.bf16.gmra.mrb[0].mxu0 %v488
  %v920 = vpop.f32.mrb[0].mxu0
  %v921 = vadd.f32 %v152, %v920
  %v922 = vpop.f32.mrb[0].mxu0
  %v923 = vpop.f32.mrb[0].mxu0
  %v924 = vadd.f32 %v152, %v923
  %v925 = vpop.f32.mrb[0].mxu0
  %926 = vmatprep.mubr.bf16.mxu0 %v491
  %927 = vmatmul.mubr.bf16.gmra.mrb[0].mxu0 %v490
  %v928 = vpop.f32.mrb[0].mxu0
  %v929 = vadd.f32 %v152, %v928
  %v930 = vpop.f32.mrb[0].mxu0
  %v931 = vpop.f32.mrb[0].mxu0
  %v932 = vadd.f32 %v152, %v931
  %v933 = vpop.f32.mrb[0].mxu0
  %934 = vmatprep.mubr.bf16.mxu0 %v493
  %935 = vmatmul.mubr.bf16.gmra.mrb[0].mxu0 %v492
  %v936 = vpop.f32.mrb[0].mxu0
  %v937 = vadd.f32 %v152, %v936
  %v938 = vpop.f32.mrb[0].mxu0
  %v939 = vpop.f32.mrb[0].mxu0
  %v940 = vadd.f32 %v152, %v939
  %v941 = vpop.f32.mrb[0].mxu0
  %942 = vmatprep.mubr.bf16.mxu0 %v495
  %943 = vmatmul.mubr.bf16.gmra.mrb[0].mxu0 %v494
  %v944 = vpop.f32.mrb[0].mxu0
  %v945 = vadd.f32 %v152, %v944
  %v946 = vpop.f32.mrb[0].mxu0
  %v947 = vpop.f32.mrb[0].mxu0
  %v948 = vadd.f32 %v152, %v947
  %v949 = vpop.f32.mrb[0].mxu0
  %950 = vmatprep.mubr.bf16.mxu0 %v497
  %951 = vmatmul.mubr.bf16.gmra.mrb[0].mxu0 %v496
  %v952 = vpop.f32.mrb[0].mxu0
  %v953 = vadd.f32 %v152, %v952
  %v954 = vpop.f32.mrb[0].mxu0
  %v955 = vpop.f32.mrb[0].mxu0
  %v956 = vadd.f32 %v152, %v955
  %v957 = vpop.f32.mrb[0].mxu0
  %958 = vmatprep.mubr.bf16.mxu0 %v499
  %959 = vmatmul.mubr.bf16.gmra.mrb[0].mxu0 %v498
  %v960 = vpop.f32.mrb[0].mxu0
  %v961 = vadd.f32 %v152, %v960
  %v962 = vpop.f32.mrb[0].mxu0
  %v963 = vpop.f32.mrb[0].mxu0
  %v964 = vadd.f32 %v152, %v963
  %v965 = vpop.f32.mrb[0].mxu0
  %966 = vmatprep.mubr.bf16.mxu0 %v501
  %967 = vmatmul.mubr.bf16.gmra.mrb[0].mxu0 %v500
  %v968 = vpop.f32.mrb[0].mxu0
  %v969 = vadd.f32 %v152, %v968
  %v970 = vpop.f32.mrb[0].mxu0
  %v971 = vpop.f32.mrb[0].mxu0
  %v972 = vadd.f32 %v152, %v971
  %v973 = vpop.f32.mrb[0].mxu0
  %974 = vmatprep.mubr.bf16.mxu0 %v503
  %975 = vmatmul.mubr.bf16.gmra.mrb[0].mxu0 %v502
  %v976 = vpop.f32.mrb[0].mxu0
  %v977 = vadd.f32 %v152, %v976
  %v978 = vpop.f32.mrb[0].mxu0
  %v979 = vpop.f32.mrb[0].mxu0
  %v980 = vadd.f32 %v152, %v979
  %v981 = vpop.f32.mrb[0].mxu0
  %982 = vmatprep.mubr.bf16.mxu0 %v505
  %983 = vmatmul.mubr.bf16.gmra.mrb[0].mxu0 %v504
  %v984 = vpop.f32.mrb[0].mxu0
  %v985 = vadd.f32 %v152, %v984
  %v986 = vpop.f32.mrb[0].mxu0
  %v987 = vpop.f32.mrb[0].mxu0
  %v988 = vadd.f32 %v152, %v987
  %v989 = vpop.f32.mrb[0].mxu0
  %990 = vmatprep.mubr.bf16.mxu0 %v507
  %991 = vmatmul.mubr.bf16.gmra.mrb[0].mxu0 %v506
  %v992 = vpop.f32.mrb[0].mxu0
  %v993 = vadd.f32 %v152, %v992
  %v994 = vpop.f32.mrb[0].mxu0
  %v995 = vpop.f32.mrb[0].mxu0
  %v996 = vadd.f32 %v152, %v995
  %v997 = vpop.f32.mrb[0].mxu0
  %998 = vmatprep.mubr.bf16.mxu0 %v509
  %999 = vmatmul.mubr.bf16.gmra.mrb[0].mxu0 %v508
  %v1000 = vpop.f32.mrb[0].mxu0
  %v1001 = vadd.f32 %v152, %v1000
  %v1002 = vpop.f32.mrb[0].mxu0
  %v1003 = vpop.f32.mrb[0].mxu0
  %v1004 = vadd.f32 %v152, %v1003
  %v1005 = vpop.f32.mrb[0].mxu0
  %1006 = vmatprep.mubr.bf16.mxu0 %v511
  %1007 = vmatmul.mubr.bf16.gmra.mrb[0].mxu0 %v510
  %v1008 = vpop.f32.mrb[0].mxu0
  %v1009 = vadd.f32 %v152, %v1008
  %v1010 = vpop.f32.mrb[0].mxu0
  %v1011 = vpop.f32.mrb[0].mxu0
  %v1012 = vadd.f32 %v152, %v1011
  %v1013 = vpop.f32.mrb[0].mxu0
  %1014 = vmatprep.mubr.bf16.mxu0 %v513
  %1015 = vmatmul.mubr.bf16.gmra.mrb[0].mxu0 %v512
  %v1016 = vpop.f32.mrb[0].mxu0
  %v1017 = vadd.f32 %v152, %v1016
  %v1018 = vpop.f32.mrb[0].mxu0
  %v1019 = vpop.f32.mrb[0].mxu0
  %v1020 = vadd.f32 %v152, %v1019
  %v1021 = vpop.f32.mrb[0].mxu0
  %1022 = vmatprep.mubr.bf16.mxu0 %v515
  %1023 = vmatmul.mubr.bf16.gmra.mrb[0].mxu0 %v514
  %v1024 = vpop.f32.mrb[0].mxu0
  %v1025 = vadd.f32 %v152, %v1024
  %v1026 = vpop.f32.mrb[0].mxu0
  %v1027 = vpop.f32.mrb[0].mxu0
  %v1028 = vadd.f32 %v152, %v1027
  %v1029 = vpop.f32.mrb[0].mxu0
  %1030 = vmatprep.mubr.bf16.mxu0 %v517
  %1031 = vmatmul.mubr.bf16.gmra.mrb[0].mxu0 %v516
  %v1032 = vpop.f32.mrb[0].mxu0
  %v1033 = vadd.f32 %v152, %v1032
  %v1034 = vpop.f32.mrb[0].mxu0
  %v1035 = vpop.f32.mrb[0].mxu0
  %v1036 = vadd.f32 %v152, %v1035
  %v1037 = vpop.f32.mrb[0].mxu0
  %1038 = vmatprep.mubr.bf16.mxu0 %v519
  %1039 = vmatmul.mubr.bf16.gmra.mrb[0].mxu0 %v518
  %v1040 = vpop.f32.mrb[0].mxu0
  %v1041 = vadd.f32 %v152, %v1040
  %v1042 = vpop.f32.mrb[0].mxu0
  %v1043 = vpop.f32.mrb[0].mxu0
  %v1044 = vadd.f32 %v152, %v1043
  %v1045 = vpop.f32.mrb[0].mxu0
  %1046 = vmatprep.mubr.bf16.mxu0 %v521
  %1047 = vmatmul.mubr.bf16.gmra.mrb[0].mxu0 %v520
  %v1048 = vpop.f32.mrb[0].mxu0
  %v1049 = vadd.f32 %v152, %v1048
  %v1050 = vpop.f32.mrb[0].mxu0
  %v1051 = vpop.f32.mrb[0].mxu0
  %v1052 = vadd.f32 %v152, %v1051
  %v1053 = vpop.f32.mrb[0].mxu0
  %1054 = vmatprep.mubr.bf16.mxu0 %v523
  %1055 = vmatmul.mubr.bf16.gmra.mrb[0].mxu0 %v522
  %v1056 = vpop.f32.mrb[0].mxu0
  %v1057 = vadd.f32 %v152, %v1056
  %v1058 = vpop.f32.mrb[0].mxu0
  %v1059 = vpop.f32.mrb[0].mxu0
  %v1060 = vadd.f32 %v152, %v1059
  %v1061 = vpop.f32.mrb[0].mxu0
  %1062 = vmatprep.mubr.bf16.mxu0 %v525
  %1063 = vmatmul.mubr.bf16.gmra.mrb[0].mxu0 %v524
  %v1064 = vpop.f32.mrb[0].mxu0
  %v1065 = vadd.f32 %v152, %v1064
  %v1066 = vpop.f32.mrb[0].mxu0
  %v1067 = vpop.f32.mrb[0].mxu0
  %v1068 = vadd.f32 %v152, %v1067
  %v1069 = vpop.f32.mrb[0].mxu0
  %1070 = vmatprep.mubr.bf16.mxu0 %v527
  %1071 = vmatmul.mubr.bf16.gmra.mrb[0].mxu0 %v526
  %v1072 = vpop.f32.mrb[0].mxu0
  %v1073 = vadd.f32 %v152, %v1072
  %v1074 = vpop.f32.mrb[0].mxu0
  %v1075 = vpop.f32.mrb[0].mxu0
  %v1076 = vadd.f32 %v152, %v1075
  %v1077 = vpop.f32.mrb[0].mxu0
  %1078 = vmatprep.mubr.bf16.mxu0 %v529
  %1079 = vmatmul.mubr.bf16.gmra.mrb[0].mxu0 %v528
  %v1080 = vpop.f32.mrb[0].mxu0
  %v1081 = vadd.f32 %v152, %v1080
  %v1082 = vpop.f32.mrb[0].mxu0
  %v1083 = vpop.f32.mrb[0].mxu0
  %v1084 = vadd.f32 %v152, %v1083
  %v1085 = vpop.f32.mrb[0].mxu0
  %1086 = vmatprep.mubr.bf16.mxu0 %v531
  %1087 = vmatmul.mubr.bf16.gmra.mrb[0].mxu0 %v530
  %v1088 = vpop.f32.mrb[0].mxu0
  %v1089 = vadd.f32 %v152, %v1088
  %v1090 = vpop.f32.mrb[0].mxu0
  %v1091 = vpop.f32.mrb[0].mxu0
  %v1092 = vadd.f32 %v152, %v1091
  %v1093 = vpop.f32.mrb[0].mxu0
  %1094 = vmatprep.mubr.bf16.mxu0 %v533
  %1095 = vmatmul.mubr.bf16.gmra.mrb[0].mxu0 %v532
  %v1096 = vpop.f32.mrb[0].mxu0
  %v1097 = vadd.f32 %v152, %v1096
  %v1098 = vpop.f32.mrb[0].mxu0
  %v1099 = vpop.f32.mrb[0].mxu0
  %v1100 = vadd.f32 %v152, %v1099
  %v1101 = vpop.f32.mrb[0].mxu0
  %1102 = vmatprep.mubr.bf16.mxu0 %v535
  %1103 = vmatmul.mubr.bf16.gmra.mrb[0].mxu0 %v534
  %v1104 = vpop.f32.mrb[0].mxu0
  %v1105 = vadd.f32 %v152, %v1104
  %v1106 = vpop.f32.mrb[0].mxu0
  %v1107 = vpop.f32.mrb[0].mxu0
  %v1108 = vadd.f32 %v152, %v1107
  %v1109 = vpop.f32.mrb[0].mxu0
  %1110 = vmatprep.mubr.bf16.mxu0 %v537
  %1111 = vmatmul.mubr.bf16.gmra.mrb[0].mxu0 %v536
  %v1112 = vpop.f32.mrb[0].mxu0
  %v1113 = vadd.f32 %v152, %v1112
  %v1114 = vpop.f32.mrb[0].mxu0
  %v1115 = vpop.f32.mrb[0].mxu0
  %v1116 = vadd.f32 %v152, %v1115
  %v1117 = vpop.f32.mrb[0].mxu0
  %1118 = vmatprep.mubr.bf16.mxu0 %v539
  %1119 = vmatmul.mubr.bf16.gmra.mrb[0].mxu0 %v538
  %v1120 = vpop.f32.mrb[0].mxu0
  %v1121 = vadd.f32 %v152, %v1120
  %v1122 = vpop.f32.mrb[0].mxu0
  %v1123 = vpop.f32.mrb[0].mxu0
  %v1124 = vadd.f32 %v152, %v1123
  %v1125 = vpop.f32.mrb[0].mxu0
  %1126 = vmatprep.mubr.bf16.mxu0 %v541
  %1127 = vmatmul.mubr.bf16.gmra.mrb[0].mxu0 %v540
  %v1128 = vpop.f32.mrb[0].mxu0
  %v1129 = vadd.f32 %v152, %v1128
  %v1130 = vpop.f32.mrb[0].mxu0
  %v1131 = vpop.f32.mrb[0].mxu0
  %v1132 = vadd.f32 %v152, %v1131
  %v1133 = vpop.f32.mrb[0].mxu0
  %1134 = vmatprep.mubr.bf16.mxu0 %v543
  %1135 = vmatmul.mubr.bf16.gmra.mrb[0].mxu0 %v542
  %v1136 = vpop.f32.mrb[0].mxu0
  %v1137 = vadd.f32 %v152, %v1136
  %v1138 = vpop.f32.mrb[0].mxu0
  %v1139 = vpop.f32.mrb[0].mxu0
  %v1140 = vadd.f32 %v152, %v1139
  %v1141 = vpop.f32.mrb[0].mxu0
  %1142 = vmatprep.mubr.bf16.mxu0 %v545
  %1143 = vmatmul.mubr.bf16.gmra.mrb[0].mxu0 %v544
  %v1144 = vpop.f32.mrb[0].mxu0
  %v1145 = vadd.f32 %v152, %v1144
  %v1146 = vpop.f32.mrb[0].mxu0
  %v1147 = vpop.f32.mrb[0].mxu0
  %v1148 = vadd.f32 %v152, %v1147
  %v1149 = vpop.f32.mrb[0].mxu0
  %1150 = vmatprep.mubr.bf16.mxu0 %v547
  %1151 = vmatmul.mubr.bf16.gmra.mrb[0].mxu0 %v546
  %v1152 = vpop.f32.mrb[0].mxu0
  %v1153 = vadd.f32 %v152, %v1152
  %v1154 = vpop.f32.mrb[0].mxu0
  %v1155 = vpop.f32.mrb[0].mxu0
  %v1156 = vadd.f32 %v152, %v1155
  %v1157 = vpop.f32.mrb[0].mxu0
  %1158 = vmatprep.mubr.bf16.mxu0 %v549
  %1159 = vmatmul.mubr.bf16.gmra.mrb[0].mxu0 %v548
  %v1160 = vpop.f32.mrb[0].mxu0
  %v1161 = vadd.f32 %v152, %v1160
  %v1162 = vpop.f32.mrb[0].mxu0
  %v1163 = vpop.f32.mrb[0].mxu0
  %v1164 = vadd.f32 %v152, %v1163
  %v1165 = vpop.f32.mrb[0].mxu0
  %1166 = vmatprep.mubr.bf16.mxu0 %v551
  %1167 = vmatmul.mubr.bf16.gmra.mrb[0].mxu0 %v550
  %v1168 = vpop.f32.mrb[0].mxu0
  %v1169 = vadd.f32 %v152, %v1168
  %v1170 = vpop.f32.mrb[0].mxu0
  %v1171 = vpop.f32.mrb[0].mxu0
  %v1172 = vadd.f32 %v152, %v1171
  %v1173 = vpop.f32.mrb[0].mxu0
  %1174 = vmatprep.mubr.bf16.mxu0 %v553
  %1175 = vmatmul.mubr.bf16.gmra.mrb[0].mxu0 %v552
  %v1176 = vpop.f32.mrb[0].mxu0
  %v1177 = vadd.f32 %v152, %v1176
  %v1178 = vpop.f32.mrb[0].mxu0
  %v1179 = vpop.f32.mrb[0].mxu0
  %v1180 = vadd.f32 %v152, %v1179
  %v1181 = vpop.f32.mrb[0].mxu0
  %1182 = vdwg.mxu0
  %v1183 = vmax.f32 %v785, 0.0
  %v1184 = vmax.f32 %v788, 0.0
  %v1185 = vmax.f32 %v793, 0.0
  %v1186 = vmax.f32 %v796, 0.0
  %v1187 = vmax.f32 %v801, 0.0
  %v1188 = vmax.f32 %v804, 0.0
  %v1189 = vmax.f32 %v809, 0.0
  %v1190 = vmax.f32 %v812, 0.0
  %v1191 = vmax.f32 %v817, 0.0
  %v1192 = vmax.f32 %v820, 0.0
  %v1193 = vmax.f32 %v825, 0.0
  %v1194 = vmax.f32 %v828, 0.0
  %v1195 = vmax.f32 %v833, 0.0
  %v1196 = vmax.f32 %v836, 0.0
  %v1197 = vmax.f32 %v841, 0.0
  %v1198 = vmax.f32 %v844, 0.0
  %v1199 = vmax.f32 %v849, 0.0
  %v1200 = vmax.f32 %v852, 0.0
  %v1201 = vmax.f32 %v857, 0.0
  %v1202 = vmax.f32 %v860, 0.0
  %v1203 = vmax.f32 %v865, 0.0
  %v1204 = vmax.f32 %v868, 0.0
  %v1205 = vmax.f32 %v873, 0.0
  %v1206 = vmax.f32 %v876, 0.0
  %v1207 = vmax.f32 %v881, 0.0
  %v1208 = vmax.f32 %v884, 0.0
  %v1209 = vmax.f32 %v889, 0.0
  %v1210 = vmax.f32 %v892, 0.0
  %v1211 = vmax.f32 %v897, 0.0
  %v1212 = vmax.f32 %v900, 0.0
  %v1213 = vmax.f32 %v905, 0.0
  %v1214 = vmax.f32 %v908, 0.0
  %v1215 = vmax.f32 %v913, 0.0
  %v1216 = vmax.f32 %v916, 0.0
  %v1217 = vmax.f32 %v921, 0.0
  %v1218 = vmax.f32 %v924, 0.0
  %v1219 = vmax.f32 %v929, 0.0
  %v1220 = vmax.f32 %v932, 0.0
  %v1221 = vmax.f32 %v937, 0.0
  %v1222 = vmax.f32 %v940, 0.0
  %v1223 = vmax.f32 %v945, 0.0
  %v1224 = vmax.f32 %v948, 0.0
  %v1225 = vmax.f32 %v953, 0.0
  %v1226 = vmax.f32 %v956, 0.0
  %v1227 = vmax.f32 %v961, 0.0
  %v1228 = vmax.f32 %v964, 0.0
  %v1229 = vmax.f32 %v969, 0.0
  %v1230 = vmax.f32 %v972, 0.0
  %v1231 = vmax.f32 %v977, 0.0
  %v1232 = vmax.f32 %v980, 0.0
  %v1233 = vmax.f32 %v985, 0.0
  %v1234 = vmax.f32 %v988, 0.0
  %v1235 = vmax.f32 %v993, 0.0
  %v1236 = vmax.f32 %v996, 0.0
  %v1237 = vmax.f32 %v1001, 0.0
  %v1238 = vmax.f32 %v1004, 0.0
  %v1239 = vmax.f32 %v1009, 0.0
  %v1240 = vmax.f32 %v1012, 0.0
  %v1241 = vmax.f32 %v1017, 0.0
  %v1242 = vmax.f32 %v1020, 0.0
  %v1243 = vmax.f32 %v1025, 0.0
  %v1244 = vmax.f32 %v1028, 0.0
  %v1245 = vmax.f32 %v1033, 0.0
  %v1246 = vmax.f32 %v1036, 0.0
  %v1247 = vmax.f32 %v1041, 0.0
  %v1248 = vmax.f32 %v1044, 0.0
  %v1249 = vmax.f32 %v1049, 0.0
  %v1250 = vmax.f32 %v1052, 0.0
  %v1251 = vmax.f32 %v1057, 0.0
  %v1252 = vmax.f32 %v1060, 0.0
  %v1253 = vmax.f32 %v1065, 0.0
  %v1254 = vmax.f32 %v1068, 0.0
  %v1255 = vmax.f32 %v1073, 0.0
  %v1256 = vmax.f32 %v1076, 0.0
  %v1257 = vmax.f32 %v1081, 0.0
  %v1258 = vmax.f32 %v1084, 0.0
  %v1259 = vmax.f32 %v1089, 0.0
  %v1260 = vmax.f32 %v1092, 0.0
  %v1261 = vmax.f32 %v1097, 0.0
  %v1262 = vmax.f32 %v1100, 0.0
  %v1263 = vmax.f32 %v1105, 0.0
  %v1264 = vmax.f32 %v1108, 0.0
  %v1265 = vmax.f32 %v1113, 0.0
  %v1266 = vmax.f32 %v1116, 0.0
  %v1267 = vmax.f32 %v1121, 0.0
  %v1268 = vmax.f32 %v1124, 0.0
  %v1269 = vmax.f32 %v1129, 0.0
  %v1270 = vmax.f32 %v1132, 0.0
  %v1271 = vmax.f32 %v1137, 0.0
  %v1272 = vmax.f32 %v1140, 0.0
  %v1273 = vmax.f32 %v1145, 0.0
  %v1274 = vmax.f32 %v1148, 0.0
  %v1275 = vmax.f32 %v1153, 0.0
  %v1276 = vmax.f32 %v1156, 0.0
  %v1277 = vmax.f32 %v1161, 0.0
  %v1278 = vmax.f32 %v1164, 0.0
  %v1279 = vmax.f32 %v1169, 0.0
  %v1280 = vmax.f32 %v1172, 0.0
  %v1281 = vmax.f32 %v1177, 0.0
  %v1282 = vmax.f32 %v1180, 0.0
  %v1283 = vpack.c.bf16 %v1184, %v1183
  %v1284 = vpack.c.bf16 %v1186, %v1185
  %v1285 = vpack.c.bf16 %v1188, %v1187
  %v1286 = vpack.c.bf16 %v1190, %v1189
  %v1287 = vpack.c.bf16 %v1192, %v1191
  %v1288 = vpack.c.bf16 %v1194, %v1193
  %v1289 = vpack.c.bf16 %v1196, %v1195
  %v1290 = vpack.c.bf16 %v1198, %v1197
  %v1291 = vpack.c.bf16 %v1200, %v1199
  %v1292 = vpack.c.bf16 %v1202, %v1201
  %v1293 = vpack.c.bf16 %v1204, %v1203
  %v1294 = vpack.c.bf16 %v1206, %v1205
  %v1295 = vpack.c.bf16 %v1208, %v1207
  %v1296 = vpack.c.bf16 %v1210, %v1209
  %v1297 = vpack.c.bf16 %v1212, %v1211
  %v1298 = vpack.c.bf16 %v1214, %v1213
  %v1299 = vpack.c.bf16 %v1216, %v1215
  %v1300 = vpack.c.bf16 %v1218, %v1217
  %v1301 = vpack.c.bf16 %v1220, %v1219
  %v1302 = vpack.c.bf16 %v1222, %v1221
  %v1303 = vpack.c.bf16 %v1224, %v1223
  %v1304 = vpack.c.bf16 %v1226, %v1225
  %v1305 = vpack.c.bf16 %v1228, %v1227
  %v1306 = vpack.c.bf16 %v1230, %v1229
  %v1307 = vpack.c.bf16 %v1232, %v1231
  %v1308 = vpack.c.bf16 %v1234, %v1233
  %v1309 = vpack.c.bf16 %v1236, %v1235
  %v1310 = vpack.c.bf16 %v1238, %v1237
  %v1311 = vpack.c.bf16 %v1240, %v1239
  %v1312 = vpack.c.bf16 %v1242, %v1241
  %v1313 = vpack.c.bf16 %v1244, %v1243
  %v1314 = vpack.c.bf16 %v1246, %v1245
  %v1315 = vpack.c.bf16 %v1248, %v1247
  %v1316 = vpack.c.bf16 %v1250, %v1249
  %v1317 = vpack.c.bf16 %v1252, %v1251
  %v1318 = vpack.c.bf16 %v1254, %v1253
  %v1319 = vpack.c.bf16 %v1256, %v1255
  %v1320 = vpack.c.bf16 %v1258, %v1257
  %v1321 = vpack.c.bf16 %v1260, %v1259
  %v1322 = vpack.c.bf16 %v1262, %v1261
  %v1323 = vpack.c.bf16 %v1264, %v1263
  %v1324 = vpack.c.bf16 %v1266, %v1265
  %v1325 = vpack.c.bf16 %v1268, %v1267
  %v1326 = vpack.c.bf16 %v1270, %v1269
  %v1327 = vpack.c.bf16 %v1272, %v1271
  %v1328 = vpack.c.bf16 %v1274, %v1273
  %v1329 = vpack.c.bf16 %v1276, %v1275
  %v1330 = vpack.c.bf16 %v1278, %v1277
  %v1331 = vpack.c.bf16 %v1280, %v1279
  %v1332 = vpack.c.bf16 %v1282, %v1281
  %v1383 = vunpack.c.l.b16 %v1283
  %v1384 = vunpack.c.h.b16 %v1283
  %v1385 = vunpack.c.l.b16 %v1284
  %v1386 = vunpack.c.h.b16 %v1284
  %v1387 = vunpack.c.l.b16 %v1285
  %v1388 = vunpack.c.h.b16 %v1285
  %v1389 = vunpack.c.l.b16 %v1286
  %v1390 = vunpack.c.h.b16 %v1286
  %v1391 = vunpack.c.l.b16 %v1287
  %v1392 = vunpack.c.h.b16 %v1287
  %v1393 = vunpack.c.l.b16 %v1288
  %v1394 = vunpack.c.h.b16 %v1288
  %v1395 = vunpack.c.l.b16 %v1289
  %v1396 = vunpack.c.h.b16 %v1289
  %v1397 = vunpack.c.l.b16 %v1290
  %v1398 = vunpack.c.h.b16 %v1290
  %v1399 = vunpack.c.l.b16 %v1291
  %v1400 = vunpack.c.h.b16 %v1291
  %v1401 = vunpack.c.l.b16 %v1292
  %v1402 = vunpack.c.h.b16 %v1292
  %v1403 = vunpack.c.l.b16 %v1293
  %v1404 = vunpack.c.h.b16 %v1293
  %v1405 = vunpack.c.l.b16 %v1294
  %v1406 = vunpack.c.h.b16 %v1294
  %v1407 = vunpack.c.l.b16 %v1295
  %v1408 = vunpack.c.h.b16 %v1295
  %v1409 = vunpack.c.l.b16 %v1296
  %v1410 = vunpack.c.h.b16 %v1296
  %v1411 = vunpack.c.l.b16 %v1297
  %v1412 = vunpack.c.h.b16 %v1297
  %v1413 = vunpack.c.l.b16 %v1298
  %v1414 = vunpack.c.h.b16 %v1298
  %v1415 = vunpack.c.l.b16 %v1299
  %v1416 = vunpack.c.h.b16 %v1299
  %v1417 = vunpack.c.l.b16 %v1300
  %v1418 = vunpack.c.h.b16 %v1300
  %v1419 = vunpack.c.l.b16 %v1301
  %v1420 = vunpack.c.h.b16 %v1301
  %v1421 = vunpack.c.l.b16 %v1302
  %v1422 = vunpack.c.h.b16 %v1302
  %v1423 = vunpack.c.l.b16 %v1303
  %v1424 = vunpack.c.h.b16 %v1303
  %v1425 = vunpack.c.l.b16 %v1304
  %v1426 = vunpack.c.h.b16 %v1304
  %v1427 = vunpack.c.l.b16 %v1305
  %v1428 = vunpack.c.h.b16 %v1305
  %v1429 = vunpack.c.l.b16 %v1306
  %v1430 = vunpack.c.h.b16 %v1306
  %v1431 = vunpack.c.l.b16 %v1307
  %v1432 = vunpack.c.h.b16 %v1307
  %v1433 = vunpack.c.l.b16 %v1308
  %v1434 = vunpack.c.h.b16 %v1308
  %v1435 = vunpack.c.l.b16 %v1309
  %v1436 = vunpack.c.h.b16 %v1309
  %v1437 = vunpack.c.l.b16 %v1310
  %v1438 = vunpack.c.h.b16 %v1310
  %v1439 = vunpack.c.l.b16 %v1311
  %v1440 = vunpack.c.h.b16 %v1311
  %v1441 = vunpack.c.l.b16 %v1312
  %v1442 = vunpack.c.h.b16 %v1312
  %v1443 = vunpack.c.l.b16 %v1313
  %v1444 = vunpack.c.h.b16 %v1313
  %v1445 = vunpack.c.l.b16 %v1314
  %v1446 = vunpack.c.h.b16 %v1314
  %v1447 = vunpack.c.l.b16 %v1315
  %v1448 = vunpack.c.h.b16 %v1315
  %v1449 = vunpack.c.l.b16 %v1316
  %v1450 = vunpack.c.h.b16 %v1316
  %v1451 = vunpack.c.l.b16 %v1317
  %v1452 = vunpack.c.h.b16 %v1317
  %v1453 = vunpack.c.l.b16 %v1318
  %v1454 = vunpack.c.h.b16 %v1318
  %v1455 = vunpack.c.l.b16 %v1319
  %v1456 = vunpack.c.h.b16 %v1319
  %v1457 = vunpack.c.l.b16 %v1320
  %v1458 = vunpack.c.h.b16 %v1320
  %v1459 = vunpack.c.l.b16 %v1321
  %v1460 = vunpack.c.h.b16 %v1321
  %v1461 = vunpack.c.l.b16 %v1322
  %v1462 = vunpack.c.h.b16 %v1322
  %v1463 = vunpack.c.l.b16 %v1323
  %v1464 = vunpack.c.h.b16 %v1323
  %v1465 = vunpack.c.l.b16 %v1324
  %v1466 = vunpack.c.h.b16 %v1324
  %v1467 = vunpack.c.l.b16 %v1325
  %v1468 = vunpack.c.h.b16 %v1325
  %v1469 = vunpack.c.l.b16 %v1326
  %v1470 = vunpack.c.h.b16 %v1326
  %v1471 = vunpack.c.l.b16 %v1327
  %v1472 = vunpack.c.h.b16 %v1327
  %v1473 = vunpack.c.l.b16 %v1328
  %v1474 = vunpack.c.h.b16 %v1328
  %v1475 = vunpack.c.l.b16 %v1329
  %v1476 = vunpack.c.h.b16 %v1329
  %v1477 = vunpack.c.l.b16 %v1330
  %v1478 = vunpack.c.h.b16 %v1330
  %v1479 = vunpack.c.l.b16 %v1331
  %v1480 = vunpack.c.h.b16 %v1331
  %v1481 = vunpack.c.l.b16 %v1332
  %v1482 = vunpack.c.h.b16 %v1332
  %v1483 = vpack.c.b16 %v1383, %v1383
  %v1484 = vpack.c.b16 %v1384, %v1384
  %v1485 = vpack.c.b16 %v1385, %v1385
  %v1486 = vpack.c.b16 %v1386, %v1386
  %v1487 = vpack.c.b16 %v1387, %v1387
  %v1488 = vpack.c.b16 %v1388, %v1388
  %v1489 = vpack.c.b16 %v1389, %v1389
  %v1490 = vpack.c.b16 %v1390, %v1390
  %v1491 = vpack.c.b16 %v1391, %v1391
  %v1492 = vpack.c.b16 %v1392, %v1392
  %v1493 = vpack.c.b16 %v1393, %v1393
  %v1494 = vpack.c.b16 %v1394, %v1394
  %v1495 = vpack.c.b16 %v1395, %v1395
  %v1496 = vpack.c.b16 %v1396, %v1396
  %v1497 = vpack.c.b16 %v1397, %v1397
  %v1498 = vpack.c.b16 %v1398, %v1398
  %v1499 = vpack.c.b16 %v1399, %v1399
  %v1500 = vpack.c.b16 %v1400, %v1400
  %v1501 = vpack.c.b16 %v1401, %v1401
  %v1502 = vpack.c.b16 %v1402, %v1402
  %v1503 = vpack.c.b16 %v1403, %v1403
  %v1504 = vpack.c.b16 %v1404, %v1404
  %v1505 = vpack.c.b16 %v1405, %v1405
  %v1506 = vpack.c.b16 %v1406, %v1406
  %v1507 = vpack.c.b16 %v1407, %v1407
  %v1508 = vpack.c.b16 %v1408, %v1408
  %v1509 = vpack.c.b16 %v1409, %v1409
  %v1510 = vpack.c.b16 %v1410, %v1410
  %v1511 = vpack.c.b16 %v1411, %v1411
  %v1512 = vpack.c.b16 %v1412, %v1412
  %v1513 = vpack.c.b16 %v1413, %v1413
  %v1514 = vpack.c.b16 %v1414, %v1414
  %v1515 = vpack.c.b16 %v1415, %v1415
  %v1516 = vpack.c.b16 %v1416, %v1416
  %v1517 = vpack.c.b16 %v1417, %v1417
  %v1518 = vpack.c.b16 %v1418, %v1418
  %v1519 = vpack.c.b16 %v1419, %v1419
  %v1520 = vpack.c.b16 %v1420, %v1420
  %v1521 = vpack.c.b16 %v1421, %v1421
  %v1522 = vpack.c.b16 %v1422, %v1422
  %v1523 = vpack.c.b16 %v1423, %v1423
  %v1524 = vpack.c.b16 %v1424, %v1424
  %v1525 = vpack.c.b16 %v1425, %v1425
  %v1526 = vpack.c.b16 %v1426, %v1426
  %v1527 = vpack.c.b16 %v1427, %v1427
  %v1528 = vpack.c.b16 %v1428, %v1428
  %v1529 = vpack.c.b16 %v1429, %v1429
  %v1530 = vpack.c.b16 %v1430, %v1430
  %v1531 = vpack.c.b16 %v1431, %v1431
  %v1532 = vpack.c.b16 %v1432, %v1432
  %v1533 = vpack.c.b16 %v1433, %v1433
  %v1534 = vpack.c.b16 %v1434, %v1434
  %v1535 = vpack.c.b16 %v1435, %v1435
  %v1536 = vpack.c.b16 %v1436, %v1436
  %v1537 = vpack.c.b16 %v1437, %v1437
  %v1538 = vpack.c.b16 %v1438, %v1438
  %v1539 = vpack.c.b16 %v1439, %v1439
  %v1540 = vpack.c.b16 %v1440, %v1440
  %v1541 = vpack.c.b16 %v1441, %v1441
  %v1542 = vpack.c.b16 %v1442, %v1442
  %v1543 = vpack.c.b16 %v1443, %v1443
  %v1544 = vpack.c.b16 %v1444, %v1444
  %v1545 = vpack.c.b16 %v1445, %v1445
  %v1546 = vpack.c.b16 %v1446, %v1446
  %v1547 = vpack.c.b16 %v1447, %v1447
  %v1548 = vpack.c.b16 %v1448, %v1448
  %v1549 = vpack.c.b16 %v1449, %v1449
  %v1550 = vpack.c.b16 %v1450, %v1450
  %v1551 = vpack.c.b16 %v1451, %v1451
  %v1552 = vpack.c.b16 %v1452, %v1452
  %v1553 = vpack.c.b16 %v1453, %v1453
  %v1554 = vpack.c.b16 %v1454, %v1454
  %v1555 = vpack.c.b16 %v1455, %v1455
  %v1556 = vpack.c.b16 %v1456, %v1456
  %v1557 = vpack.c.b16 %v1457, %v1457
  %v1558 = vpack.c.b16 %v1458, %v1458
  %v1559 = vpack.c.b16 %v1459, %v1459
  %v1560 = vpack.c.b16 %v1460, %v1460
  %v1561 = vpack.c.b16 %v1461, %v1461
  %v1562 = vpack.c.b16 %v1462, %v1462
  %v1563 = vpack.c.b16 %v1463, %v1463
  %v1564 = vpack.c.b16 %v1464, %v1464
  %v1565 = vpack.c.b16 %v1465, %v1465
  %v1566 = vpack.c.b16 %v1466, %v1466
  %v1567 = vpack.c.b16 %v1467, %v1467
  %v1568 = vpack.c.b16 %v1468, %v1468
  %v1569 = vpack.c.b16 %v1469, %v1469
  %v1570 = vpack.c.b16 %v1470, %v1470
  %v1571 = vpack.c.b16 %v1471, %v1471
  %v1572 = vpack.c.b16 %v1472, %v1472
  %v1573 = vpack.c.b16 %v1473, %v1473
  %v1574 = vpack.c.b16 %v1474, %v1474
  %v1575 = vpack.c.b16 %v1475, %v1475
  %v1576 = vpack.c.b16 %v1476, %v1476
  %v1577 = vpack.c.b16 %v1477, %v1477
  %v1578 = vpack.c.b16 %v1478, %v1478
  %v1579 = vpack.c.b16 %v1479, %v1479
  %v1580 = vpack.c.b16 %v1480, %v1480
  %v1581 = vpack.c.b16 %v1481, %v1481
  %v1582 = vpack.c.b16 %v1482, %v1482
  %vm1683 = vcmask 257024
  %1684 = vst.msk [vmem:[%s3] sm:$0xf] %vm1683, %v1483
  %1685 = vst.msk [vmem:[%s3 + $0x4] sm:$0xf] %vm1683, %v1484
  %1686 = vst.msk [vmem:[%s3 + $0x8] sm:$0xf] %vm1683, %v1485
  %1687 = vst.msk [vmem:[%s3 + $0xc] sm:$0xf] %vm1683, %v1486
  %1688 = vst.msk [vmem:[%s3 + $0x10] sm:$0xf] %vm1683, %v1487
  %1689 = vst.msk [vmem:[%s3 + $0x14] sm:$0xf] %vm1683, %v1488
  %1690 = vst.msk [vmem:[%s3 + $0x18] sm:$0xf] %vm1683, %v1489
  %1691 = vst.msk [vmem:[%s3 + $0x1c] sm:$0xf] %vm1683, %v1490
  %1692 = vst.msk [vmem:[%s3 + $0x20] sm:$0xf] %vm1683, %v1491
  %1693 = vst.msk [vmem:[%s3 + $0x24] sm:$0xf] %vm1683, %v1492
  %1694 = vst.msk [vmem:[%s3 + $0x28] sm:$0xf] %vm1683, %v1493
  %1695 = vst.msk [vmem:[%s3 + $0x2c] sm:$0xf] %vm1683, %v1494
  %1696 = vst.msk [vmem:[%s3 + $0x30] sm:$0xf] %vm1683, %v1495
  %1697 = vst.msk [vmem:[%s3 + $0x34] sm:$0xf] %vm1683, %v1496
  %1698 = vst.msk [vmem:[%s3 + $0x38] sm:$0xf] %vm1683, %v1497
  %1699 = vst.msk [vmem:[%s3 + $0x3c] sm:$0xf] %vm1683, %v1498
  %1700 = vst.msk [vmem:[%s3 + $0x40] sm:$0xf] %vm1683, %v1499
  %1701 = vst.msk [vmem:[%s3 + $0x44] sm:$0xf] %vm1683, %v1500
  %1702 = vst.msk [vmem:[%s3 + $0x48] sm:$0xf] %vm1683, %v1501
  %1703 = vst.msk [vmem:[%s3 + $0x4c] sm:$0xf] %vm1683, %v1502
  %1704 = vst.msk [vmem:[%s3 + $0x50] sm:$0xf] %vm1683, %v1503
  %1705 = vst.msk [vmem:[%s3 + $0x54] sm:$0xf] %vm1683, %v1504
  %1706 = vst.msk [vmem:[%s3 + $0x58] sm:$0xf] %vm1683, %v1505
  %1707 = vst.msk [vmem:[%s3 + $0x5c] sm:$0xf] %vm1683, %v1506
  %1708 = vst.msk [vmem:[%s3 + $0x60] sm:$0xf] %vm1683, %v1507
  %1709 = vst.msk [vmem:[%s3 + $0x64] sm:$0xf] %vm1683, %v1508
  %1710 = vst.msk [vmem:[%s3 + $0x68] sm:$0xf] %vm1683, %v1509
  %1711 = vst.msk [vmem:[%s3 + $0x6c] sm:$0xf] %vm1683, %v1510
  %1712 = vst.msk [vmem:[%s3 + $0x70] sm:$0xf] %vm1683, %v1511
  %1713 = vst.msk [vmem:[%s3 + $0x74] sm:$0xf] %vm1683, %v1512
  %1714 = vst.msk [vmem:[%s3 + $0x78] sm:$0xf] %vm1683, %v1513
  %1715 = vst.msk [vmem:[%s3 + $0x7c] sm:$0xf] %vm1683, %v1514
  %1716 = vst.msk [vmem:[%s3 + $0x80] sm:$0xf] %vm1683, %v1515
  %1717 = vst.msk [vmem:[%s3 + $0x84] sm:$0xf] %vm1683, %v1516
  %1718 = vst.msk [vmem:[%s3 + $0x88] sm:$0xf] %vm1683, %v1517
  %1719 = vst.msk [vmem:[%s3 + $0x8c] sm:$0xf] %vm1683, %v1518
  %1720 = vst.msk [vmem:[%s3 + $0x90] sm:$0xf] %vm1683, %v1519
  %1721 = vst.msk [vmem:[%s3 + $0x94] sm:$0xf] %vm1683, %v1520
  %1722 = vst.msk [vmem:[%s3 + $0x98] sm:$0xf] %vm1683, %v1521
  %1723 = vst.msk [vmem:[%s3 + $0x9c] sm:$0xf] %vm1683, %v1522
  %1724 = vst.msk [vmem:[%s3 + $0xa0] sm:$0xf] %vm1683, %v1523
  %1725 = vst.msk [vmem:[%s3 + $0xa4] sm:$0xf] %vm1683, %v1524
  %1726 = vst.msk [vmem:[%s3 + $0xa8] sm:$0xf] %vm1683, %v1525
  %1727 = vst.msk [vmem:[%s3 + $0xac] sm:$0xf] %vm1683, %v1526
  %1728 = vst.msk [vmem:[%s3 + $0xb0] sm:$0xf] %vm1683, %v1527
  %1729 = vst.msk [vmem:[%s3 + $0xb4] sm:$0xf] %vm1683, %v1528
  %1730 = vst.msk [vmem:[%s3 + $0xb8] sm:$0xf] %vm1683, %v1529
  %1731 = vst.msk [vmem:[%s3 + $0xbc] sm:$0xf] %vm1683, %v1530
  %1732 = vst.msk [vmem:[%s3 + $0xc0] sm:$0xf] %vm1683, %v1531
  %1733 = vst.msk [vmem:[%s3 + $0xc4] sm:$0xf] %vm1683, %v1532
  %1734 = vst.msk [vmem:[%s3 + $0xc8] sm:$0xf] %vm1683, %v1533
  %1735 = vst.msk [vmem:[%s3 + $0xcc] sm:$0xf] %vm1683, %v1534
  %1736 = vst.msk [vmem:[%s3 + $0xd0] sm:$0xf] %vm1683, %v1535
  %1737 = vst.msk [vmem:[%s3 + $0xd4] sm:$0xf] %vm1683, %v1536
  %1738 = vst.msk [vmem:[%s3 + $0xd8] sm:$0xf] %vm1683, %v1537
  %1739 = vst.msk [vmem:[%s3 + $0xdc] sm:$0xf] %vm1683, %v1538
  %1740 = vst.msk [vmem:[%s3 + $0xe0] sm:$0xf] %vm1683, %v1539
  %1741 = vst.msk [vmem:[%s3 + $0xe4] sm:$0xf] %vm1683, %v1540
  %1742 = vst.msk [vmem:[%s3 + $0xe8] sm:$0xf] %vm1683, %v1541
  %1743 = vst.msk [vmem:[%s3 + $0xec] sm:$0xf] %vm1683, %v1542
  %1744 = vst.msk [vmem:[%s3 + $0xf0] sm:$0xf] %vm1683, %v1543
  %1745 = vst.msk [vmem:[%s3 + $0xf4] sm:$0xf] %vm1683, %v1544
  %1746 = vst.msk [vmem:[%s3 + $0xf8] sm:$0xf] %vm1683, %v1545
  %1747 = vst.msk [vmem:[%s3 + $0xfc] sm:$0xf] %vm1683, %v1546
  %1748 = vst.msk [vmem:[%s3 + $0x100] sm:$0xf] %vm1683, %v1547
  %1749 = vst.msk [vmem:[%s3 + $0x104] sm:$0xf] %vm1683, %v1548
  %1750 = vst.msk [vmem:[%s3 + $0x108] sm:$0xf] %vm1683, %v1549
  %1751 = vst.msk [vmem:[%s3 + $0x10c] sm:$0xf] %vm1683, %v1550
  %1752 = vst.msk [vmem:[%s3 + $0x110] sm:$0xf] %vm1683, %v1551
  %1753 = vst.msk [vmem:[%s3 + $0x114] sm:$0xf] %vm1683, %v1552
  %1754 = vst.msk [vmem:[%s3 + $0x118] sm:$0xf] %vm1683, %v1553
  %1755 = vst.msk [vmem:[%s3 + $0x11c] sm:$0xf] %vm1683, %v1554
  %1756 = vst.msk [vmem:[%s3 + $0x120] sm:$0xf] %vm1683, %v1555
  %1757 = vst.msk [vmem:[%s3 + $0x124] sm:$0xf] %vm1683, %v1556
  %1758 = vst.msk [vmem:[%s3 + $0x128] sm:$0xf] %vm1683, %v1557
  %1759 = vst.msk [vmem:[%s3 + $0x12c] sm:$0xf] %vm1683, %v1558
  %1760 = vst.msk [vmem:[%s3 + $0x130] sm:$0xf] %vm1683, %v1559
  %1761 = vst.msk [vmem:[%s3 + $0x134] sm:$0xf] %vm1683, %v1560
  %1762 = vst.msk [vmem:[%s3 + $0x138] sm:$0xf] %vm1683, %v1561
  %1763 = vst.msk [vmem:[%s3 + $0x13c] sm:$0xf] %vm1683, %v1562
  %1764 = vst.msk [vmem:[%s3 + $0x140] sm:$0xf] %vm1683, %v1563
  %1765 = vst.msk [vmem:[%s3 + $0x144] sm:$0xf] %vm1683, %v1564
  %1766 = vst.msk [vmem:[%s3 + $0x148] sm:$0xf] %vm1683, %v1565
  %1767 = vst.msk [vmem:[%s3 + $0x14c] sm:$0xf] %vm1683, %v1566
  %1768 = vst.msk [vmem:[%s3 + $0x150] sm:$0xf] %vm1683, %v1567
  %1769 = vst.msk [vmem:[%s3 + $0x154] sm:$0xf] %vm1683, %v1568
  %1770 = vst.msk [vmem:[%s3 + $0x158] sm:$0xf] %vm1683, %v1569
  %1771 = vst.msk [vmem:[%s3 + $0x15c] sm:$0xf] %vm1683, %v1570
  %1772 = vst.msk [vmem:[%s3 + $0x160] sm:$0xf] %vm1683, %v1571
  %1773 = vst.msk [vmem:[%s3 + $0x164] sm:$0xf] %vm1683, %v1572
  %1774 = vst.msk [vmem:[%s3 + $0x168] sm:$0xf] %vm1683, %v1573
  %1775 = vst.msk [vmem:[%s3 + $0x16c] sm:$0xf] %vm1683, %v1574
  %1776 = vst.msk [vmem:[%s3 + $0x170] sm:$0xf] %vm1683, %v1575
  %1777 = vst.msk [vmem:[%s3 + $0x174] sm:$0xf] %vm1683, %v1576
  %1778 = vst.msk [vmem:[%s3 + $0x178] sm:$0xf] %vm1683, %v1577
  %1779 = vst.msk [vmem:[%s3 + $0x17c] sm:$0xf] %vm1683, %v1578
  %1780 = vst.msk [vmem:[%s3 + $0x180] sm:$0xf] %vm1683, %v1579
  %1781 = vst.msk [vmem:[%s3 + $0x184] sm:$0xf] %vm1683, %v1580
  %1782 = vst.msk [vmem:[%s3 + $0x188] sm:$0xf] %vm1683, %v1581
  %1783 = vst.msk [vmem:[%s3 + $0x18c] sm:$0xf] %vm1683, %v1582
  // Predicated region
  $region14: #{dqn_forward.4} parent=0 // pred_check
    _
  $region15: #{dqn_forward.4} parent=0 // pred_check_branch
    %1785 = sbr.rel (0) target = $region17
  $region16: #{dqn_forward.4} parent=0 // pred_region
    _
  $region17: #{dqn_forward.4} parent=0 // pred_fallthru
    _
  // Predicated region
  $region18: #{dqn_forward.4} parent=0 // pred_check
    _
  $region19: #{dqn_forward.4} parent=0 // pred_check_branch
    %1787 = sbr.rel (0) target = $region21
  $region20: #{dqn_forward.4} parent=0 // pred_region
    _
  $region21: #{dqn_forward.4} parent=0 // pred_fallthru
    _

// kernel: dqn_forward.5
$region0: #{dqn_forward.5}
  #allocation0 [shape = 'u32[]', space=smem, size = 0x4, offset = 0x4, fixed_abs, tag = 'smem constant byte address 0x4 - core index']
  #allocation1 [shape = 'u32[144,128]{1,0:T(1,128)}', space=vmem, size = 0x12000, scoped, tag = 'internal scratch']
  %s0 = inlined_call_operand.vmem [shape: bf16[162,512], index: 0, kind: input, shape index: {}]
  %s1 = inlined_call_operand.vmem [shape: bf16[512,64], index: 1, kind: input, shape index: {}]
  %s2 = inlined_call_operand.vmem [shape: f32[1,64], index: 2, kind: input, shape index: {}]
  %s3 = inlined_call_operand.vmem [shape: bf16[162,64], index: 3, kind: output, shape index: {}]
  %s4 = sld [smem:[#allocation0]]
  $region22: #{dqn_forward.5} parent=0
    _
  %s6 = ssub.s32 1, %s4
  %s7 = scalar_select 0, %s6, %s4
  // Predicated region
  $region2: #{dqn_forward.5} parent=0 // pred_check
    _
  $region3: #{dqn_forward.5} parent=0 // pred_check_branch
    %9 = sbr.rel (0) target = $region5
  $region4: #{dqn_forward.5} parent=0 // pred_region
    _
  $region5: #{dqn_forward.5} parent=0 // pred_fallthru
    _
  // Predicated region
  $region6: #{dqn_forward.5} parent=0 // pred_check
    _
  $region7: #{dqn_forward.5} parent=0 // pred_check_branch
    %11 = sbr.rel (0) target = $region9
  $region8: #{dqn_forward.5} parent=0 // pred_region
    _
  $region9: #{dqn_forward.5} parent=0 // pred_fallthru
    _
  // Predicated region
  $region10: #{dqn_forward.5} parent=0 // pred_check
    _
  $region11: #{dqn_forward.5} parent=0 // pred_check_branch
    %13 = sbr.rel (0) target = $region13
  $region12: #{dqn_forward.5} parent=0 // pred_region
    _
  $region13: #{dqn_forward.5} parent=0 // pred_fallthru
    _
  %v15 = vld [vmem:[%s0] sm:$0xff]
  %v16 = vld [vmem:[%s0 + $0x8] sm:$0xff]
  %v17 = vld [vmem:[%s0 + $0x10] sm:$0xff]
  %v18 = vld [vmem:[%s0 + $0x18] sm:$0xff]
  %v19 = vld [vmem:[%s0 + $0x20] sm:$0xff]
  %v20 = vld [vmem:[%s0 + $0x28] sm:$0xff]
  %v21 = vld [vmem:[%s0 + $0x30] sm:$0xff]
  %v22 = vld [vmem:[%s0 + $0x38] sm:$0xff]
  %v23 = vld [vmem:[%s0 + $0x40] sm:$0xff]
  %v24 = vld [vmem:[%s0 + $0x48] sm:$0xff]
  %v25 = vld [vmem:[%s0 + $0x50] sm:$0xff]
  %v26 = vld [vmem:[%s0 + $0x58] sm:$0xff]
  %v27 = vld [vmem:[%s0 + $0x60] sm:$0xff]
  %v28 = vld [vmem:[%s0 + $0x68] sm:$0xff]
  %v29 = vld [vmem:[%s0 + $0x70] sm:$0xff]
  %v30 = vld [vmem:[%s0 + $0x78] sm:$0xff]
  %v31 = vld [vmem:[%s0 + $0x80] sm:$0xff]
  %v32 = vld [vmem:[%s0 + $0x88] sm:$0xff]
  %v33 = vld [vmem:[%s0 + $0x90] sm:$0xff]
  %v34 = vld [vmem:[%s0 + $0x98] sm:$0xff]
  %v35 = vld [vmem:[%s0 + $0xa0] sm:$0xff]
  %v36 = vld [vmem:[%s0 + $0xa8] sm:$0xff]
  %v37 = vld [vmem:[%s0 + $0xb0] sm:$0xff]
  %v38 = vld [vmem:[%s0 + $0xb8] sm:$0xff]
  %v39 = vld [vmem:[%s0 + $0xc0] sm:$0xff]
  %v40 = vld [vmem:[%s0 + $0xc8] sm:$0xff]
  %v41 = vld [vmem:[%s0 + $0xd0] sm:$0xff]
  %v42 = vld [vmem:[%s0 + $0xd8] sm:$0xff]
  %v43 = vld [vmem:[%s0 + $0xe0] sm:$0xff]
  %v44 = vld [vmem:[%s0 + $0xe8] sm:$0xff]
  %v45 = vld [vmem:[%s0 + $0xf0] sm:$0xff]
  %v46 = vld [vmem:[%s0 + $0xf8] sm:$0xff]
  %v47 = vld [vmem:[%s0 + $0x100] sm:$0xff]
  %v48 = vld [vmem:[%s0 + $0x108] sm:$0xff]
  %v49 = vld [vmem:[%s0 + $0x110] sm:$0xff]
  %v50 = vld [vmem:[%s0 + $0x118] sm:$0xff]
  %v51 = vld [vmem:[%s0 + $0x120] sm:$0xff]
  %v52 = vld [vmem:[%s0 + $0x128] sm:$0xff]
  %v53 = vld [vmem:[%s0 + $0x130] sm:$0xff]
  %v54 = vld [vmem:[%s0 + $0x138] sm:$0xff]
  %v55 = vld [vmem:[%s0 + $0x140] sm:$0x11]
  %v56 = vld [vmem:[%s0 + $0x148] sm:$0x11]
  %v57 = vld [vmem:[%s1] sm:$0xf]
  %v58 = vld [vmem:[%s1 + $0x4] sm:$0xf]
  %v59 = vld [vmem:[%s1 + $0x8] sm:$0xf]
  %v60 = vld [vmem:[%s1 + $0xc] sm:$0xf]
  %v61 = vld [vmem:[%s1 + $0x10] sm:$0xf]
  %v62 = vld [vmem:[%s1 + $0x14] sm:$0xf]
  %v63 = vld [vmem:[%s1 + $0x18] sm:$0xf]
  %v64 = vld [vmem:[%s1 + $0x1c] sm:$0xf]
  %v65 = vld [vmem:[%s1 + $0x20] sm:$0xf]
  %v66 = vld [vmem:[%s1 + $0x24] sm:$0xf]
  %v67 = vld [vmem:[%s1 + $0x28] sm:$0xf]
  %v68 = vld [vmem:[%s1 + $0x2c] sm:$0xf]
  %v69 = vld [vmem:[%s1 + $0x30] sm:$0xf]
  %v70 = vld [vmem:[%s1 + $0x34] sm:$0xf]
  %v71 = vld [vmem:[%s1 + $0x38] sm:$0xf]
  %v72 = vld [vmem:[%s1 + $0x3c] sm:$0xf]
  %v73 = vld [vmem:[%s1 + $0x40] sm:$0xf]
  %v74 = vld [vmem:[%s1 + $0x44] sm:$0xf]
  %v75 = vld [vmem:[%s1 + $0x48] sm:$0xf]
  %v76 = vld [vmem:[%s1 + $0x4c] sm:$0xf]
  %v77 = vld [vmem:[%s1 + $0x50] sm:$0xf]
  %v78 = vld [vmem:[%s1 + $0x54] sm:$0xf]
  %v79 = vld [vmem:[%s1 + $0x58] sm:$0xf]
  %v80 = vld [vmem:[%s1 + $0x5c] sm:$0xf]
  %v81 = vld [vmem:[%s1 + $0x60] sm:$0xf]
  %v82 = vld [vmem:[%s1 + $0x64] sm:$0xf]
  %v83 = vld [vmem:[%s1 + $0x68] sm:$0xf]
  %v84 = vld [vmem:[%s1 + $0x6c] sm:$0xf]
  %v85 = vld [vmem:[%s1 + $0x70] sm:$0xf]
  %v86 = vld [vmem:[%s1 + $0x74] sm:$0xf]
  %v87 = vld [vmem:[%s1 + $0x78] sm:$0xf]
  %v88 = vld [vmem:[%s1 + $0x7c] sm:$0xf]
  %v89 = vld [vmem:[%s1 + $0x80] sm:$0xf]
  %v90 = vld [vmem:[%s1 + $0x84] sm:$0xf]
  %v91 = vld [vmem:[%s1 + $0x88] sm:$0xf]
  %v92 = vld [vmem:[%s1 + $0x8c] sm:$0xf]
  %v93 = vld [vmem:[%s1 + $0x90] sm:$0xf]
  %v94 = vld [vmem:[%s1 + $0x94] sm:$0xf]
  %v95 = vld [vmem:[%s1 + $0x98] sm:$0xf]
  %v96 = vld [vmem:[%s1 + $0x9c] sm:$0xf]
  %v97 = vld [vmem:[%s1 + $0xa0] sm:$0xf]
  %v98 = vld [vmem:[%s1 + $0xa4] sm:$0xf]
  %v99 = vld [vmem:[%s1 + $0xa8] sm:$0xf]
  %v100 = vld [vmem:[%s1 + $0xac] sm:$0xf]
  %v101 = vld [vmem:[%s1 + $0xb0] sm:$0xf]
  %v102 = vld [vmem:[%s1 + $0xb4] sm:$0xf]
  %v103 = vld [vmem:[%s1 + $0xb8] sm:$0xf]
  %v104 = vld [vmem:[%s1 + $0xbc] sm:$0xf]
  %v105 = vld [vmem:[%s1 + $0xc0] sm:$0xf]
  %v106 = vld [vmem:[%s1 + $0xc4] sm:$0xf]
  %v107 = vld [vmem:[%s1 + $0xc8] sm:$0xf]
  %v108 = vld [vmem:[%s1 + $0xcc] sm:$0xf]
  %v109 = vld [vmem:[%s1 + $0xd0] sm:$0xf]
  %v110 = vld [vmem:[%s1 + $0xd4] sm:$0xf]
  %v111 = vld [vmem:[%s1 + $0xd8] sm:$0xf]
  %v112 = vld [vmem:[%s1 + $0xdc] sm:$0xf]
  %v113 = vld [vmem:[%s1 + $0xe0] sm:$0xf]
  %v114 = vld [vmem:[%s1 + $0xe4] sm:$0xf]
  %v115 = vld [vmem:[%s1 + $0xe8] sm:$0xf]
  %v116 = vld [vmem:[%s1 + $0xec] sm:$0xf]
  %v117 = vld [vmem:[%s1 + $0xf0] sm:$0xf]
  %v118 = vld [vmem:[%s1 + $0xf4] sm:$0xf]
  %v119 = vld [vmem:[%s1 + $0xf8] sm:$0xf]
  %v120 = vld [vmem:[%s1 + $0xfc] sm:$0xf]
  %v121 = vld [vmem:[%s2] sm:$0x1]
  %v123 = vlaneseq
  %v124 = vshrl.u32 %v123, 7
  %v125 = vsub.s32 0, %v124
  %v126 = vrot.slane %v121, %v125
  %v170 = vunpack.c.l.b16 %v15
  %v171 = vunpack.c.h.b16 %v15
  %v172 = vunpack.c.l.b16 %v16
  %v173 = vunpack.c.h.b16 %v16
  %v174 = vunpack.c.l.b16 %v17
  %v175 = vunpack.c.h.b16 %v17
  %v176 = vunpack.c.l.b16 %v18
  %v177 = vunpack.c.h.b16 %v18
  %v178 = vunpack.c.l.b16 %v19
  %v179 = vunpack.c.h.b16 %v19
  %v180 = vunpack.c.l.b16 %v20
  %v181 = vunpack.c.h.b16 %v20
  %v182 = vunpack.c.l.b16 %v21
  %v183 = vunpack.c.h.b16 %v21
  %v184 = vunpack.c.l.b16 %v22
  %v185 = vunpack.c.h.b16 %v22
  %v186 = vunpack.c.l.b16 %v23
  %v187 = vunpack.c.h.b16 %v23
  %v188 = vunpack.c.l.b16 %v24
  %v189 = vunpack.c.h.b16 %v24
  %v190 = vunpack.c.l.b16 %v25
  %v191 = vunpack.c.h.b16 %v25
  %v192 = vunpack.c.l.b16 %v26
  %v193 = vunpack.c.h.b16 %v26
  %v194 = vunpack.c.l.b16 %v27
  %v195 = vunpack.c.h.b16 %v27
  %v196 = vunpack.c.l.b16 %v28
  %v197 = vunpack.c.h.b16 %v28
  %v198 = vunpack.c.l.b16 %v29
  %v199 = vunpack.c.h.b16 %v29
  %v200 = vunpack.c.l.b16 %v30
  %v201 = vunpack.c.h.b16 %v30
  %v202 = vunpack.c.l.b16 %v31
  %v203 = vunpack.c.h.b16 %v31
  %v204 = vunpack.c.l.b16 %v32
  %v205 = vunpack.c.h.b16 %v32
  %v206 = vunpack.c.l.b16 %v33
  %v207 = vunpack.c.h.b16 %v33
  %v208 = vunpack.c.l.b16 %v34
  %v209 = vunpack.c.h.b16 %v34
  %v210 = vunpack.c.l.b16 %v35
  %v211 = vunpack.c.h.b16 %v35
  %v212 = vunpack.c.l.b16 %v36
  %v213 = vunpack.c.h.b16 %v36
  %v214 = vunpack.c.l.b16 %v37
  %v215 = vunpack.c.h.b16 %v37
  %v216 = vunpack.c.l.b16 %v38
  %v217 = vunpack.c.h.b16 %v38
  %v218 = vunpack.c.l.b16 %v39
  %v219 = vunpack.c.h.b16 %v39
  %v220 = vunpack.c.l.b16 %v40
  %v221 = vunpack.c.h.b16 %v40
  %v222 = vunpack.c.l.b16 %v41
  %v223 = vunpack.c.h.b16 %v41
  %v224 = vunpack.c.l.b16 %v42
  %v225 = vunpack.c.h.b16 %v42
  %v226 = vunpack.c.l.b16 %v43
  %v227 = vunpack.c.h.b16 %v43
  %v228 = vunpack.c.l.b16 %v44
  %v229 = vunpack.c.h.b16 %v44
  %v230 = vunpack.c.l.b16 %v45
  %v231 = vunpack.c.h.b16 %v45
  %v232 = vunpack.c.l.b16 %v46
  %v233 = vunpack.c.h.b16 %v46
  %v234 = vunpack.c.l.b16 %v47
  %v235 = vunpack.c.h.b16 %v47
  %v236 = vunpack.c.l.b16 %v48
  %v237 = vunpack.c.h.b16 %v48
  %v238 = vunpack.c.l.b16 %v49
  %v239 = vunpack.c.h.b16 %v49
  %v240 = vunpack.c.l.b16 %v50
  %v241 = vunpack.c.h.b16 %v50
  %v242 = vunpack.c.l.b16 %v51
  %v243 = vunpack.c.h.b16 %v51
  %v244 = vunpack.c.l.b16 %v52
  %v245 = vunpack.c.h.b16 %v52
  %v246 = vunpack.c.l.b16 %v53
  %v247 = vunpack.c.h.b16 %v53
  %v248 = vunpack.c.l.b16 %v54
  %v249 = vunpack.c.h.b16 %v54
  %v250 = vunpack.c.l.b16 %v55
  %v251 = vunpack.c.h.b16 %v55
  %v252 = vunpack.c.l.b16 %v56
  %v253 = vunpack.c.h.b16 %v56
  %v254 = vpack.c.b16 %v174, %v170
  %v255 = vpack.c.b16 %v175, %v171
  %v256 = vpack.c.b16 %v176, %v172
  %v257 = vpack.c.b16 %v177, %v173
  %v258 = vpack.c.b16 %v182, %v178
  %v259 = vpack.c.b16 %v183, %v179
  %v260 = vpack.c.b16 %v184, %v180
  %v261 = vpack.c.b16 %v185, %v181
  %v262 = vpack.c.b16 %v190, %v186
  %v263 = vpack.c.b16 %v191, %v187
  %v264 = vpack.c.b16 %v192, %v188
  %v265 = vpack.c.b16 %v193, %v189
  %v266 = vpack.c.b16 %v198, %v194
  %v267 = vpack.c.b16 %v199, %v195
  %v268 = vpack.c.b16 %v200, %v196
  %v269 = vpack.c.b16 %v201, %v197
  %v270 = vpack.c.b16 %v206, %v202
  %v271 = vpack.c.b16 %v207, %v203
  %v272 = vpack.c.b16 %v208, %v204
  %v273 = vpack.c.b16 %v209, %v205
  %v274 = vpack.c.b16 %v214, %v210
  %v275 = vpack.c.b16 %v215, %v211
  %v276 = vpack.c.b16 %v216, %v212
  %v277 = vpack.c.b16 %v217, %v213
  %v278 = vpack.c.b16 %v222, %v218
  %v279 = vpack.c.b16 %v223, %v219
  %v280 = vpack.c.b16 %v224, %v220
  %v281 = vpack.c.b16 %v225, %v221
  %v282 = vpack.c.b16 %v230, %v226
  %v283 = vpack.c.b16 %v231, %v227
  %v284 = vpack.c.b16 %v232, %v228
  %v285 = vpack.c.b16 %v233, %v229
  %v286 = vpack.c.b16 %v238, %v234
  %v287 = vpack.c.b16 %v239, %v235
  %v288 = vpack.c.b16 %v240, %v236
  %v289 = vpack.c.b16 %v241, %v237
  %v290 = vpack.c.b16 %v246, %v242
  %v291 = vpack.c.b16 %v247, %v243
  %v292 = vpack.c.b16 %v248, %v244
  %v293 = vpack.c.b16 %v249, %v245
  %v294 = vpack.c.b16 %v250, %v250
  %v295 = vpack.c.b16 %v251, %v251
  %v296 = vpack.c.b16 %v252, %v252
  %v297 = vpack.c.b16 %v253, %v253
  %v406 = vunpack.c.l.b16 %v57
  %v407 = vunpack.c.l.b16 %v58
  %v408 = vunpack.c.l.b16 %v59
  %v409 = vunpack.c.l.b16 %v60
  %v410 = vunpack.c.l.b16 %v61
  %v411 = vunpack.c.l.b16 %v62
  %v412 = vunpack.c.l.b16 %v63
  %v413 = vunpack.c.l.b16 %v64
  %v414 = vunpack.c.l.b16 %v65
  %v415 = vunpack.c.l.b16 %v66
  %v416 = vunpack.c.l.b16 %v67
  %v417 = vunpack.c.l.b16 %v68
  %v418 = vunpack.c.l.b16 %v69
  %v419 = vunpack.c.l.b16 %v70
  %v420 = vunpack.c.l.b16 %v71
  %v421 = vunpack.c.l.b16 %v72
  %v422 = vunpack.c.l.b16 %v73
  %v423 = vunpack.c.l.b16 %v74
  %v424 = vunpack.c.l.b16 %v75
  %v425 = vunpack.c.l.b16 %v76
  %v426 = vunpack.c.l.b16 %v77
  %v427 = vunpack.c.l.b16 %v78
  %v428 = vunpack.c.l.b16 %v79
  %v429 = vunpack.c.l.b16 %v80
  %v430 = vunpack.c.l.b16 %v81
  %v431 = vunpack.c.l.b16 %v82
  %v432 = vunpack.c.l.b16 %v83
  %v433 = vunpack.c.l.b16 %v84
  %v434 = vunpack.c.l.b16 %v85
  %v435 = vunpack.c.l.b16 %v86
  %v436 = vunpack.c.l.b16 %v87
  %v437 = vunpack.c.l.b16 %v88
  %v438 = vunpack.c.l.b16 %v89
  %v439 = vunpack.c.l.b16 %v90
  %v440 = vunpack.c.l.b16 %v91
  %v441 = vunpack.c.l.b16 %v92
  %v442 = vunpack.c.l.b16 %v93
  %v443 = vunpack.c.l.b16 %v94
  %v444 = vunpack.c.l.b16 %v95
  %v445 = vunpack.c.l.b16 %v96
  %v446 = vunpack.c.l.b16 %v97
  %v447 = vunpack.c.l.b16 %v98
  %v448 = vunpack.c.l.b16 %v99
  %v449 = vunpack.c.l.b16 %v100
  %v450 = vunpack.c.l.b16 %v101
  %v451 = vunpack.c.l.b16 %v102
  %v452 = vunpack.c.l.b16 %v103
  %v453 = vunpack.c.l.b16 %v104
  %v454 = vunpack.c.l.b16 %v105
  %v455 = vunpack.c.l.b16 %v106
  %v456 = vunpack.c.l.b16 %v107
  %v457 = vunpack.c.l.b16 %v108
  %v458 = vunpack.c.l.b16 %v109
  %v459 = vunpack.c.l.b16 %v110
  %v460 = vunpack.c.l.b16 %v111
  %v461 = vunpack.c.l.b16 %v112
  %v462 = vunpack.c.l.b16 %v113
  %v463 = vunpack.c.l.b16 %v114
  %v464 = vunpack.c.l.b16 %v115
  %v465 = vunpack.c.l.b16 %v116
  %v466 = vunpack.c.l.b16 %v117
  %v467 = vunpack.c.l.b16 %v118
  %v468 = vunpack.c.l.b16 %v119
  %v469 = vunpack.c.l.b16 %v120
  %v470 = vpack.c.b16 %v407, %v406
  %v471 = vpack.c.b16 %v409, %v408
  %v472 = vpack.c.b16 %v411, %v410
  %v473 = vpack.c.b16 %v413, %v412
  %v474 = vpack.c.b16 %v415, %v414
  %v475 = vpack.c.b16 %v417, %v416
  %v476 = vpack.c.b16 %v419, %v418
  %v477 = vpack.c.b16 %v421, %v420
  %v478 = vpack.c.b16 %v423, %v422
  %v479 = vpack.c.b16 %v425, %v424
  %v480 = vpack.c.b16 %v427, %v426
  %v481 = vpack.c.b16 %v429, %v428
  %v482 = vpack.c.b16 %v431, %v430
  %v483 = vpack.c.b16 %v433, %v432
  %v484 = vpack.c.b16 %v435, %v434
  %v485 = vpack.c.b16 %v437, %v436
  %v486 = vpack.c.b16 %v439, %v438
  %v487 = vpack.c.b16 %v441, %v440
  %v488 = vpack.c.b16 %v443, %v442
  %v489 = vpack.c.b16 %v445, %v444
  %v490 = vpack.c.b16 %v447, %v446
  %v491 = vpack.c.b16 %v449, %v448
  %v492 = vpack.c.b16 %v451, %v450
  %v493 = vpack.c.b16 %v453, %v452
  %v494 = vpack.c.b16 %v455, %v454
  %v495 = vpack.c.b16 %v457, %v456
  %v496 = vpack.c.b16 %v459, %v458
  %v497 = vpack.c.b16 %v461, %v460
  %v498 = vpack.c.b16 %v463, %v462
  %v499 = vpack.c.b16 %v465, %v464
  %v500 = vpack.c.b16 %v467, %v466
  %v501 = vpack.c.b16 %v469, %v468
  %534 = vmatprep.subr.bf16.mxu0 0
  %535 = vmatpush1.bf16.msra.mxu0 %v470
  %536 = vmatprep.subr.bf16.mxu0 0
  %537 = vmatpush1.bf16.msra.mxu0 %v471
  %538 = vmatprep.subr.bf16.mxu0 0
  %539 = vmatpush1.bf16.msra.mxu0 %v472
  %540 = vmatprep.subr.bf16.mxu0 0
  %541 = vmatpush1.bf16.msra.mxu0 %v473
  %542 = vmatprep.subr.bf16.mxu0 0
  %543 = vmatpush1.bf16.msra.mxu0 %v474
  %544 = vmatprep.subr.bf16.mxu0 0
  %545 = vmatpush1.bf16.msra.mxu0 %v475
  %546 = vmatprep.subr.bf16.mxu0 0
  %547 = vmatpush1.bf16.msra.mxu0 %v476
  %548 = vmatprep.subr.bf16.mxu0 0
  %549 = vmatpush1.bf16.msra.mxu0 %v477
  %550 = vmatprep.subr.bf16.mxu0 0
  %551 = vmatpush1.bf16.msra.mxu0 %v478
  %552 = vmatprep.subr.bf16.mxu0 0
  %553 = vmatpush1.bf16.msra.mxu0 %v479
  %554 = vmatprep.subr.bf16.mxu0 0
  %555 = vmatpush1.bf16.msra.mxu0 %v480
  %556 = vmatprep.subr.bf16.mxu0 0
  %557 = vmatpush1.bf16.msra.mxu0 %v481
  %558 = vmatprep.subr.bf16.mxu0 0
  %559 = vmatpush1.bf16.msra.mxu0 %v482
  %560 = vmatprep.subr.bf16.mxu0 0
  %561 = vmatpush1.bf16.msra.mxu0 %v483
  %562 = vmatprep.subr.bf16.mxu0 0
  %563 = vmatpush1.bf16.msra.mxu0 %v484
  %564 = vmatprep.subr.bf16.mxu0 0
  %565 = vmatpush1.bf16.msra.mxu0 %v485
  %566 = vmatprep.mubr.bf16.mxu0 %v255
  %567 = vmatmul.mubr.bf16.gmra.mrb[0].mxu0 %v254
  %v568 = vpop.f32.mrb[0].mxu0
  %v569 = vadd.f32 %v126, %v568
  %v570 = vpop.f32.mrb[0].mxu0
  %v571 = vpop.f32.mrb[0].mxu0
  %v572 = vadd.f32 %v126, %v571
  %v573 = vpop.f32.mrb[0].mxu0
  %574 = vmatprep.mubr.bf16.mxu0 %v259
  %575 = vmatmul.mubr.bf16.gmra.mrb[0].mxu0 %v258
  %v576 = vpop.f32.mrb[0].mxu0
  %v577 = vadd.f32 %v126, %v576
  %v578 = vpop.f32.mrb[0].mxu0
  %v579 = vpop.f32.mrb[0].mxu0
  %v580 = vadd.f32 %v126, %v579
  %v581 = vpop.f32.mrb[0].mxu0
  %582 = vmatprep.mubr.bf16.mxu0 %v263
  %583 = vmatmul.mubr.bf16.gmra.mrb[0].mxu0 %v262
  %v584 = vpop.f32.mrb[0].mxu0
  %v585 = vadd.f32 %v126, %v584
  %v586 = vpop.f32.mrb[0].mxu0
  %v587 = vpop.f32.mrb[0].mxu0
  %v588 = vadd.f32 %v126, %v587
  %v589 = vpop.f32.mrb[0].mxu0
  %590 = vmatprep.mubr.bf16.mxu0 %v267
  %591 = vmatmul.mubr.bf16.gmra.mrb[0].mxu0 %v266
  %v592 = vpop.f32.mrb[0].mxu0
  %v593 = vadd.f32 %v126, %v592
  %v594 = vpop.f32.mrb[0].mxu0
  %v595 = vpop.f32.mrb[0].mxu0
  %v596 = vadd.f32 %v126, %v595
  %v597 = vpop.f32.mrb[0].mxu0
  %598 = vmatprep.mubr.bf16.mxu0 %v271
  %599 = vmatmul.mubr.bf16.gmra.mrb[0].mxu0 %v270
  %v600 = vpop.f32.mrb[0].mxu0
  %v601 = vadd.f32 %v126, %v600
  %v602 = vpop.f32.mrb[0].mxu0
  %v603 = vpop.f32.mrb[0].mxu0
  %v604 = vadd.f32 %v126, %v603
  %v605 = vpop.f32.mrb[0].mxu0
  %606 = vmatprep.mubr.bf16.mxu0 %v275
  %607 = vmatmul.mubr.bf16.gmra.mrb[0].mxu0 %v274
  %v608 = vpop.f32.mrb[0].mxu0
  %v609 = vadd.f32 %v126, %v608
  %v610 = vpop.f32.mrb[0].mxu0
  %v611 = vpop.f32.mrb[0].mxu0
  %v612 = vadd.f32 %v126, %v611
  %v613 = vpop.f32.mrb[0].mxu0
  %614 = vmatprep.mubr.bf16.mxu0 %v279
  %615 = vmatmul.mubr.bf16.gmra.mrb[0].mxu0 %v278
  %v616 = vpop.f32.mrb[0].mxu0
  %v617 = vadd.f32 %v126, %v616
  %v618 = vpop.f32.mrb[0].mxu0
  %v619 = vpop.f32.mrb[0].mxu0
  %v620 = vadd.f32 %v126, %v619
  %v621 = vpop.f32.mrb[0].mxu0
  %622 = vmatprep.mubr.bf16.mxu0 %v283
  %623 = vmatmul.mubr.bf16.gmra.mrb[0].mxu0 %v282
  %v624 = vpop.f32.mrb[0].mxu0
  %v625 = vadd.f32 %v126, %v624
  %v626 = vpop.f32.mrb[0].mxu0
  %v627 = vpop.f32.mrb[0].mxu0
  %v628 = vadd.f32 %v126, %v627
  %v629 = vpop.f32.mrb[0].mxu0
  %630 = vmatprep.mubr.bf16.mxu0 %v287
  %631 = vmatmul.mubr.bf16.gmra.mrb[0].mxu0 %v286
  %v632 = vpop.f32.mrb[0].mxu0
  %v633 = vadd.f32 %v126, %v632
  %v634 = vpop.f32.mrb[0].mxu0
  %v635 = vpop.f32.mrb[0].mxu0
  %v636 = vadd.f32 %v126, %v635
  %v637 = vpop.f32.mrb[0].mxu0
  %638 = vmatprep.mubr.bf16.mxu0 %v291
  %639 = vmatmul.mubr.bf16.gmra.mrb[0].mxu0 %v290
  %v640 = vpop.f32.mrb[0].mxu0
  %v641 = vadd.f32 %v126, %v640
  %v642 = vpop.f32.mrb[0].mxu0
  %v643 = vpop.f32.mrb[0].mxu0
  %v644 = vadd.f32 %v126, %v643
  %v645 = vpop.f32.mrb[0].mxu0
  %646 = vmatprep.mubr.bf16.mxu0 %v295
  %647 = vmatmul.mubr.bf16.gmra.mrb[0].mxu0 %v294
  %v648 = vpop.f32.mrb[0].mxu0
  %v649 = vadd.f32 %v126, %v648
  %v650 = vpop.f32.mrb[0].mxu0
  %v651 = vpop.f32.mrb[0].mxu0
  %v652 = vpop.f32.mrb[0].mxu0
  %653 = vdwg.mxu0
  %654 = vmatprep.subr.bf16.mxu0 0
  %655 = vmatpush1.bf16.msra.mxu0 %v486
  %656 = vmatprep.subr.bf16.mxu0 0
  %657 = vmatpush1.bf16.msra.mxu0 %v487
  %658 = vmatprep.subr.bf16.mxu0 0
  %659 = vmatpush1.bf16.msra.mxu0 %v488
  %660 = vmatprep.subr.bf16.mxu0 0
  %661 = vmatpush1.bf16.msra.mxu0 %v489
  %662 = vmatprep.subr.bf16.mxu0 0
  %663 = vmatpush1.bf16.msra.mxu0 %v490
  %664 = vmatprep.subr.bf16.mxu0 0
  %665 = vmatpush1.bf16.msra.mxu0 %v491
  %666 = vmatprep.subr.bf16.mxu0 0
  %667 = vmatpush1.bf16.msra.mxu0 %v492
  %668 = vmatprep.subr.bf16.mxu0 0
  %669 = vmatpush1.bf16.msra.mxu0 %v493
  %670 = vmatprep.subr.bf16.mxu0 0
  %671 = vmatpush1.bf16.msra.mxu0 %v494
  %672 = vmatprep.subr.bf16.mxu0 0
  %673 = vmatpush1.bf16.msra.mxu0 %v495
  %674 = vmatprep.subr.bf16.mxu0 0
  %675 = vmatpush1.bf16.msra.mxu0 %v496
  %676 = vmatprep.subr.bf16.mxu0 0
  %677 = vmatpush1.bf16.msra.mxu0 %v497
  %678 = vmatprep.subr.bf16.mxu0 0
  %679 = vmatpush1.bf16.msra.mxu0 %v498
  %680 = vmatprep.subr.bf16.mxu0 0
  %681 = vmatpush1.bf16.msra.mxu0 %v499
  %682 = vmatprep.subr.bf16.mxu0 0
  %683 = vmatpush1.bf16.msra.mxu0 %v500
  %684 = vmatprep.subr.bf16.mxu0 0
  %685 = vmatpush1.bf16.msra.mxu0 %v501
  %686 = vmatprep.mubr.bf16.mxu0 %v257
  %687 = vmatmul.mubr.bf16.gmra.mrb[0].mxu0 %v256
  %v688 = vpop.f32.mrb[0].mxu0
  %v689 = vadd.f32 %v569, %v688
  %v690 = vpop.f32.mrb[0].mxu0
  %v691 = vpop.f32.mrb[0].mxu0
  %v692 = vadd.f32 %v572, %v691
  %v693 = vpop.f32.mrb[0].mxu0
  %694 = vmatprep.mubr.bf16.mxu0 %v261
  %695 = vmatmul.mubr.bf16.gmra.mrb[0].mxu0 %v260
  %v696 = vpop.f32.mrb[0].mxu0
  %v697 = vadd.f32 %v577, %v696
  %v698 = vpop.f32.mrb[0].mxu0
  %v699 = vpop.f32.mrb[0].mxu0
  %v700 = vadd.f32 %v580, %v699
  %v701 = vpop.f32.mrb[0].mxu0
  %702 = vmatprep.mubr.bf16.mxu0 %v265
  %703 = vmatmul.mubr.bf16.gmra.mrb[0].mxu0 %v264
  %v704 = vpop.f32.mrb[0].mxu0
  %v705 = vadd.f32 %v585, %v704
  %v706 = vpop.f32.mrb[0].mxu0
  %v707 = vpop.f32.mrb[0].mxu0
  %v708 = vadd.f32 %v588, %v707
  %v709 = vpop.f32.mrb[0].mxu0
  %710 = vmatprep.mubr.bf16.mxu0 %v269
  %711 = vmatmul.mubr.bf16.gmra.mrb[0].mxu0 %v268
  %v712 = vpop.f32.mrb[0].mxu0
  %v713 = vadd.f32 %v593, %v712
  %v714 = vpop.f32.mrb[0].mxu0
  %v715 = vpop.f32.mrb[0].mxu0
  %v716 = vadd.f32 %v596, %v715
  %v717 = vpop.f32.mrb[0].mxu0
  %718 = vmatprep.mubr.bf16.mxu0 %v273
  %719 = vmatmul.mubr.bf16.gmra.mrb[0].mxu0 %v272
  %v720 = vpop.f32.mrb[0].mxu0
  %v721 = vadd.f32 %v601, %v720
  %v722 = vpop.f32.mrb[0].mxu0
  %v723 = vpop.f32.mrb[0].mxu0
  %v724 = vadd.f32 %v604, %v723
  %v725 = vpop.f32.mrb[0].mxu0
  %726 = vmatprep.mubr.bf16.mxu0 %v277
  %727 = vmatmul.mubr.bf16.gmra.mrb[0].mxu0 %v276
  %v728 = vpop.f32.mrb[0].mxu0
  %v729 = vadd.f32 %v609, %v728
  %v730 = vpop.f32.mrb[0].mxu0
  %v731 = vpop.f32.mrb[0].mxu0
  %v732 = vadd.f32 %v612, %v731
  %v733 = vpop.f32.mrb[0].mxu0
  %734 = vmatprep.mubr.bf16.mxu0 %v281
  %735 = vmatmul.mubr.bf16.gmra.mrb[0].mxu0 %v280
  %v736 = vpop.f32.mrb[0].mxu0
  %v737 = vadd.f32 %v617, %v736
  %v738 = vpop.f32.mrb[0].mxu0
  %v739 = vpop.f32.mrb[0].mxu0
  %v740 = vadd.f32 %v620, %v739
  %v741 = vpop.f32.mrb[0].mxu0
  %742 = vmatprep.mubr.bf16.mxu0 %v285
  %743 = vmatmul.mubr.bf16.gmra.mrb[0].mxu0 %v284
  %v744 = vpop.f32.mrb[0].mxu0
  %v745 = vadd.f32 %v625, %v744
  %v746 = vpop.f32.mrb[0].mxu0
  %v747 = vpop.f32.mrb[0].mxu0
  %v748 = vadd.f32 %v628, %v747
  %v749 = vpop.f32.mrb[0].mxu0
  %750 = vmatprep.mubr.bf16.mxu0 %v289
  %751 = vmatmul.mubr.bf16.gmra.mrb[0].mxu0 %v288
  %v752 = vpop.f32.mrb[0].mxu0
  %v753 = vadd.f32 %v633, %v752
  %v754 = vpop.f32.mrb[0].mxu0
  %v755 = vpop.f32.mrb[0].mxu0
  %v756 = vadd.f32 %v636, %v755
  %v757 = vpop.f32.mrb[0].mxu0
  %758 = vmatprep.mubr.bf16.mxu0 %v293
  %759 = vmatmul.mubr.bf16.gmra.mrb[0].mxu0 %v292
  %v760 = vpop.f32.mrb[0].mxu0
  %v761 = vadd.f32 %v641, %v760
  %v762 = vpop.f32.mrb[0].mxu0
  %v763 = vpop.f32.mrb[0].mxu0
  %v764 = vadd.f32 %v644, %v763
  %v765 = vpop.f32.mrb[0].mxu0
  %766 = vmatprep.mubr.bf16.mxu0 %v297
  %767 = vmatmul.mubr.bf16.gmra.mrb[0].mxu0 %v296
  %v768 = vpop.f32.mrb[0].mxu0
  %v769 = vadd.f32 %v649, %v768
  %v770 = vpop.f32.mrb[0].mxu0
  %v771 = vpop.f32.mrb[0].mxu0
  %v772 = vpop.f32.mrb[0].mxu0
  %773 = vdwg.mxu0
  %v774 = vmax.f32 %v689, 0.0
  %v775 = vmax.f32 %v692, 0.0
  %v776 = vmax.f32 %v697, 0.0
  %v777 = vmax.f32 %v700, 0.0
  %v778 = vmax.f32 %v705, 0.0
  %v779 = vmax.f32 %v708, 0.0
  %v780 = vmax.f32 %v713, 0.0
  %v781 = vmax.f32 %v716, 0.0
  %v782 = vmax.f32 %v721, 0.0
  %v783 = vmax.f32 %v724, 0.0
  %v784 = vmax.f32 %v729, 0.0
  %v785 = vmax.f32 %v732, 0.0
  %v786 = vmax.f32 %v737, 0.0
  %v787 = vmax.f32 %v740, 0.0
  %v788 = vmax.f32 %v745, 0.0
  %v789 = vmax.f32 %v748, 0.0
  %v790 = vmax.f32 %v753, 0.0
  %v791 = vmax.f32 %v756, 0.0
  %v792 = vmax.f32 %v761, 0.0
  %v793 = vmax.f32 %v764, 0.0
  %v794 = vmax.f32 %v769, 0.0
  %v795 = vpack.c.bf16 %v775, %v774
  %v796 = vpack.c.bf16 %v777, %v776
  %v797 = vpack.c.bf16 %v779, %v778
  %v798 = vpack.c.bf16 %v781, %v780
  %v799 = vpack.c.bf16 %v783, %v782
  %v800 = vpack.c.bf16 %v785, %v784
  %v801 = vpack.c.bf16 %v787, %v786
  %v802 = vpack.c.bf16 %v789, %v788
  %v803 = vpack.c.bf16 %v791, %v790
  %v804 = vpack.c.bf16 %v793, %v792
  %v805 = vpack.c.bf16 %v794, %v794
  %v817 = vunpack.c.l.b16 %v795
  %v818 = vunpack.c.h.b16 %v795
  %v819 = vunpack.c.l.b16 %v796
  %v820 = vunpack.c.h.b16 %v796
  %v821 = vunpack.c.l.b16 %v797
  %v822 = vunpack.c.h.b16 %v797
  %v823 = vunpack.c.l.b16 %v798
  %v824 = vunpack.c.h.b16 %v798
  %v825 = vunpack.c.l.b16 %v799
  %v826 = vunpack.c.h.b16 %v799
  %v827 = vunpack.c.l.b16 %v800
  %v828 = vunpack.c.h.b16 %v800
  %v829 = vunpack.c.l.b16 %v801
  %v830 = vunpack.c.h.b16 %v801
  %v831 = vunpack.c.l.b16 %v802
  %v832 = vunpack.c.h.b16 %v802
  %v833 = vunpack.c.l.b16 %v803
  %v834 = vunpack.c.h.b16 %v803
  %v835 = vunpack.c.l.b16 %v804
  %v836 = vunpack.c.h.b16 %v804
  %v837 = vunpack.c.l.b16 %v805
  %v838 = vpack.c.b16 %v817, %v817
  %v839 = vpack.c.b16 %v818, %v818
  %v840 = vpack.c.b16 %v819, %v819
  %v841 = vpack.c.b16 %v820, %v820
  %v842 = vpack.c.b16 %v821, %v821
  %v843 = vpack.c.b16 %v822, %v822
  %v844 = vpack.c.b16 %v823, %v823
  %v845 = vpack.c.b16 %v824, %v824
  %v846 = vpack.c.b16 %v825, %v825
  %v847 = vpack.c.b16 %v826, %v826
  %v848 = vpack.c.b16 %v827, %v827
  %v849 = vpack.c.b16 %v828, %v828
  %v850 = vpack.c.b16 %v829, %v829
  %v851 = vpack.c.b16 %v830, %v830
  %v852 = vpack.c.b16 %v831, %v831
  %v853 = vpack.c.b16 %v832, %v832
  %v854 = vpack.c.b16 %v833, %v833
  %v855 = vpack.c.b16 %v834, %v834
  %v856 = vpack.c.b16 %v835, %v835
  %v857 = vpack.c.b16 %v836, %v836
  %v858 = vpack.c.b16 %v837, %v837
  %vm880 = vcmask 519168
  %881 = vst.msk [vmem:[%s3] sm:$0xf] %vm880, %v838
  %882 = vst.msk [vmem:[%s3 + $0x4] sm:$0xf] %vm880, %v839
  %883 = vst.msk [vmem:[%s3 + $0x8] sm:$0xf] %vm880, %v840
  %884 = vst.msk [vmem:[%s3 + $0xc] sm:$0xf] %vm880, %v841
  %885 = vst.msk [vmem:[%s3 + $0x10] sm:$0xf] %vm880, %v842
  %886 = vst.msk [vmem:[%s3 + $0x14] sm:$0xf] %vm880, %v843
  %887 = vst.msk [vmem:[%s3 + $0x18] sm:$0xf] %vm880, %v844
  %888 = vst.msk [vmem:[%s3 + $0x1c] sm:$0xf] %vm880, %v845
  %889 = vst.msk [vmem:[%s3 + $0x20] sm:$0xf] %vm880, %v846
  %890 = vst.msk [vmem:[%s3 + $0x24] sm:$0xf] %vm880, %v847
  %891 = vst.msk [vmem:[%s3 + $0x28] sm:$0xf] %vm880, %v848
  %892 = vst.msk [vmem:[%s3 + $0x2c] sm:$0xf] %vm880, %v849
  %893 = vst.msk [vmem:[%s3 + $0x30] sm:$0xf] %vm880, %v850
  %894 = vst.msk [vmem:[%s3 + $0x34] sm:$0xf] %vm880, %v851
  %895 = vst.msk [vmem:[%s3 + $0x38] sm:$0xf] %vm880, %v852
  %896 = vst.msk [vmem:[%s3 + $0x3c] sm:$0xf] %vm880, %v853
  %897 = vst.msk [vmem:[%s3 + $0x40] sm:$0xf] %vm880, %v854
  %898 = vst.msk [vmem:[%s3 + $0x44] sm:$0xf] %vm880, %v855
  %899 = vst.msk [vmem:[%s3 + $0x48] sm:$0xf] %vm880, %v856
  %900 = vst.msk [vmem:[%s3 + $0x4c] sm:$0xf] %vm880, %v857
  %vm901 = vcmask 516096
  %902 = vst.msk [vmem:[%s3 + $0x50] sm:$0x1] %vm901, %v858
  // Predicated region
  $region14: #{dqn_forward.5} parent=0 // pred_check
    _
  $region15: #{dqn_forward.5} parent=0 // pred_check_branch
    %904 = sbr.rel (0) target = $region17
  $region16: #{dqn_forward.5} parent=0 // pred_region
    _
  $region17: #{dqn_forward.5} parent=0 // pred_fallthru
    _
  // Predicated region
  $region18: #{dqn_forward.5} parent=0 // pred_check
    _
  $region19: #{dqn_forward.5} parent=0 // pred_check_branch
    %906 = sbr.rel (0) target = $region21
  $region20: #{dqn_forward.5} parent=0 // pred_region
    _
  $region21: #{dqn_forward.5} parent=0 // pred_fallthru
    _

// kernel: dqn_forward.6
$region0: #{dqn_forward.6}
  #allocation0 [shape = 'u32[]', space=smem, size = 0x4, offset = 0x4, fixed_abs, tag = 'smem constant byte address 0x4 - core index']
  #allocation1 [shape = 'u32[144,128]{1,0:T(1,128)}', space=vmem, size = 0x12000, scoped, tag = 'internal scratch']
  %s0 = inlined_call_operand.vmem [shape: bf16[98,576], index: 0, kind: input, shape index: {}]
  %s1 = inlined_call_operand.vmem [shape: bf16[576,64], index: 1, kind: input, shape index: {}]
  %s2 = inlined_call_operand.vmem [shape: f32[1,64], index: 2, kind: input, shape index: {}]
  %s3 = inlined_call_operand.vmem [shape: bf16[98,64], index: 3, kind: output, shape index: {}]
  %s4 = sld [smem:[#allocation0]]
  $region22: #{dqn_forward.6} parent=0
    _
  %s6 = ssub.s32 1, %s4
  %s7 = scalar_select 0, %s6, %s4
  // Predicated region
  $region2: #{dqn_forward.6} parent=0 // pred_check
    _
  $region3: #{dqn_forward.6} parent=0 // pred_check_branch
    %9 = sbr.rel (0) target = $region5
  $region4: #{dqn_forward.6} parent=0 // pred_region
    _
  $region5: #{dqn_forward.6} parent=0 // pred_fallthru
    _
  // Predicated region
  $region6: #{dqn_forward.6} parent=0 // pred_check
    _
  $region7: #{dqn_forward.6} parent=0 // pred_check_branch
    %11 = sbr.rel (0) target = $region9
  $region8: #{dqn_forward.6} parent=0 // pred_region
    _
  $region9: #{dqn_forward.6} parent=0 // pred_fallthru
    _
  // Predicated region
  $region10: #{dqn_forward.6} parent=0 // pred_check
    _
  $region11: #{dqn_forward.6} parent=0 // pred_check_branch
    %13 = sbr.rel (0) target = $region13
  $region12: #{dqn_forward.6} parent=0 // pred_region
    _
  $region13: #{dqn_forward.6} parent=0 // pred_fallthru
    _
  %v15 = vld [vmem:[%s0] sm:$0xff]
  %v16 = vld [vmem:[%s0 + $0x8] sm:$0xff]
  %v17 = vld [vmem:[%s0 + $0x10] sm:$0xf]
  %v18 = vld [vmem:[%s0 + $0x14] sm:$0xff]
  %v19 = vld [vmem:[%s0 + $0x1c] sm:$0xff]
  %v20 = vld [vmem:[%s0 + $0x24] sm:$0xf]
  %v21 = vld [vmem:[%s0 + $0x28] sm:$0xff]
  %v22 = vld [vmem:[%s0 + $0x30] sm:$0xff]
  %v23 = vld [vmem:[%s0 + $0x38] sm:$0xf]
  %v24 = vld [vmem:[%s0 + $0x3c] sm:$0xff]
  %v25 = vld [vmem:[%s0 + $0x44] sm:$0xff]
  %v26 = vld [vmem:[%s0 + $0x4c] sm:$0xf]
  %v27 = vld [vmem:[%s0 + $0x50] sm:$0xff]
  %v28 = vld [vmem:[%s0 + $0x58] sm:$0xff]
  %v29 = vld [vmem:[%s0 + $0x60] sm:$0xf]
  %v30 = vld [vmem:[%s0 + $0x64] sm:$0xff]
  %v31 = vld [vmem:[%s0 + $0x6c] sm:$0xff]
  %v32 = vld [vmem:[%s0 + $0x74] sm:$0xf]
  %v33 = vld [vmem:[%s0 + $0x78] sm:$0xff]
  %v34 = vld [vmem:[%s0 + $0x80] sm:$0xff]
  %v35 = vld [vmem:[%s0 + $0x88] sm:$0xf]
  %v36 = vld [vmem:[%s0 + $0x8c] sm:$0xff]
  %v37 = vld [vmem:[%s0 + $0x94] sm:$0xff]
  %v38 = vld [vmem:[%s0 + $0x9c] sm:$0xf]
  %v39 = vld [vmem:[%s0 + $0xa0] sm:$0xff]
  %v40 = vld [vmem:[%s0 + $0xa8] sm:$0xff]
  %v41 = vld [vmem:[%s0 + $0xb0] sm:$0xf]
  %v42 = vld [vmem:[%s0 + $0xb4] sm:$0xff]
  %v43 = vld [vmem:[%s0 + $0xbc] sm:$0xff]
  %v44 = vld [vmem:[%s0 + $0xc4] sm:$0xf]
  %v45 = vld [vmem:[%s0 + $0xc8] sm:$0xff]
  %v46 = vld [vmem:[%s0 + $0xd0] sm:$0xff]
  %v47 = vld [vmem:[%s0 + $0xd8] sm:$0xf]
  %v48 = vld [vmem:[%s0 + $0xdc] sm:$0xff]
  %v49 = vld [vmem:[%s0 + $0xe4] sm:$0xff]
  %v50 = vld [vmem:[%s0 + $0xec] sm:$0xf]
  %v51 = vld [vmem:[%s0 + $0xf0] sm:$0x11]
  %v52 = vld [vmem:[%s0 + $0xf8] sm:$0x11]
  %v53 = vld [vmem:[%s0 + $0x100] sm:$0x1]
  %v54 = vld [vmem:[%s1] sm:$0xf]
  %v55 = vld [vmem:[%s1 + $0x4] sm:$0xf]
  %v56 = vld [vmem:[%s1 + $0x8] sm:$0xf]
  %v57 = vld [vmem:[%s1 + $0xc] sm:$0xf]
  %v58 = vld [vmem:[%s1 + $0x10] sm:$0xf]
  %v59 = vld [vmem:[%s1 + $0x14] sm:$0xf]
  %v60 = vld [vmem:[%s1 + $0x18] sm:$0xf]
  %v61 = vld [vmem:[%s1 + $0x1c] sm:$0xf]
  %v62 = vld [vmem:[%s1 + $0x20] sm:$0xf]
  %v63 = vld [vmem:[%s1 + $0x24] sm:$0xf]
  %v64 = vld [vmem:[%s1 + $0x28] sm:$0xf]
  %v65 = vld [vmem:[%s1 + $0x2c] sm:$0xf]
  %v66 = vld [vmem:[%s1 + $0x30] sm:$0xf]
  %v67 = vld [vmem:[%s1 + $0x34] sm:$0xf]
  %v68 = vld [vmem:[%s1 + $0x38] sm:$0xf]
  %v69 = vld [vmem:[%s1 + $0x3c] sm:$0xf]
  %v70 = vld [vmem:[%s1 + $0x40] sm:$0xf]
  %v71 = vld [vmem:[%s1 + $0x44] sm:$0xf]
  %v72 = vld [vmem:[%s1 + $0x48] sm:$0xf]
  %v73 = vld [vmem:[%s1 + $0x4c] sm:$0xf]
  %v74 = vld [vmem:[%s1 + $0x50] sm:$0xf]
  %v75 = vld [vmem:[%s1 + $0x54] sm:$0xf]
  %v76 = vld [vmem:[%s1 + $0x58] sm:$0xf]
  %v77 = vld [vmem:[%s1 + $0x5c] sm:$0xf]
  %v78 = vld [vmem:[%s1 + $0x60] sm:$0xf]
  %v79 = vld [vmem:[%s1 + $0x64] sm:$0xf]
  %v80 = vld [vmem:[%s1 + $0x68] sm:$0xf]
  %v81 = vld [vmem:[%s1 + $0x6c] sm:$0xf]
  %v82 = vld [vmem:[%s1 + $0x70] sm:$0xf]
  %v83 = vld [vmem:[%s1 + $0x74] sm:$0xf]
  %v84 = vld [vmem:[%s1 + $0x78] sm:$0xf]
  %v85 = vld [vmem:[%s1 + $0x7c] sm:$0xf]
  %v86 = vld [vmem:[%s1 + $0x80] sm:$0xf]
  %v87 = vld [vmem:[%s1 + $0x84] sm:$0xf]
  %v88 = vld [vmem:[%s1 + $0x88] sm:$0xf]
  %v89 = vld [vmem:[%s1 + $0x8c] sm:$0xf]
  %v90 = vld [vmem:[%s1 + $0x90] sm:$0xf]
  %v91 = vld [vmem:[%s1 + $0x94] sm:$0xf]
  %v92 = vld [vmem:[%s1 + $0x98] sm:$0xf]
  %v93 = vld [vmem:[%s1 + $0x9c] sm:$0xf]
  %v94 = vld [vmem:[%s1 + $0xa0] sm:$0xf]
  %v95 = vld [vmem:[%s1 + $0xa4] sm:$0xf]
  %v96 = vld [vmem:[%s1 + $0xa8] sm:$0xf]
  %v97 = vld [vmem:[%s1 + $0xac] sm:$0xf]
  %v98 = vld [vmem:[%s1 + $0xb0] sm:$0xf]
  %v99 = vld [vmem:[%s1 + $0xb4] sm:$0xf]
  %v100 = vld [vmem:[%s1 + $0xb8] sm:$0xf]
  %v101 = vld [vmem:[%s1 + $0xbc] sm:$0xf]
  %v102 = vld [vmem:[%s1 + $0xc0] sm:$0xf]
  %v103 = vld [vmem:[%s1 + $0xc4] sm:$0xf]
  %v104 = vld [vmem:[%s1 + $0xc8] sm:$0xf]
  %v105 = vld [vmem:[%s1 + $0xcc] sm:$0xf]
  %v106 = vld [vmem:[%s1 + $0xd0] sm:$0xf]
  %v107 = vld [vmem:[%s1 + $0xd4] sm:$0xf]
  %v108 = vld [vmem:[%s1 + $0xd8] sm:$0xf]
  %v109 = vld [vmem:[%s1 + $0xdc] sm:$0xf]
  %v110 = vld [vmem:[%s1 + $0xe0] sm:$0xf]
  %v111 = vld [vmem:[%s1 + $0xe4] sm:$0xf]
  %v112 = vld [vmem:[%s1 + $0xe8] sm:$0xf]
  %v113 = vld [vmem:[%s1 + $0xec] sm:$0xf]
  %v114 = vld [vmem:[%s1 + $0xf0] sm:$0xf]
  %v115 = vld [vmem:[%s1 + $0xf4] sm:$0xf]
  %v116 = vld [vmem:[%s1 + $0xf8] sm:$0xf]
  %v117 = vld [vmem:[%s1 + $0xfc] sm:$0xf]
  %v118 = vld [vmem:[%s1 + $0x100] sm:$0xf]
  %v119 = vld [vmem:[%s1 + $0x104] sm:$0xf]
  %v120 = vld [vmem:[%s1 + $0x108] sm:$0xf]
  %v121 = vld [vmem:[%s1 + $0x10c] sm:$0xf]
  %v122 = vld [vmem:[%s1 + $0x110] sm:$0xf]
  %v123 = vld [vmem:[%s1 + $0x114] sm:$0xf]
  %v124 = vld [vmem:[%s1 + $0x118] sm:$0xf]
  %v125 = vld [vmem:[%s1 + $0x11c] sm:$0xf]
  %v126 = vld [vmem:[%s2] sm:$0x1]
  %v128 = vlaneseq
  %v129 = vshrl.u32 %v128, 7
  %v130 = vsub.s32 0, %v129
  %v131 = vrot.slane %v126, %v130
  %v172 = vunpack.c.l.b16 %v15
  %v173 = vunpack.c.h.b16 %v15
  %v174 = vunpack.c.l.b16 %v16
  %v175 = vunpack.c.h.b16 %v16
  %v176 = vunpack.c.l.b16 %v17
  %v177 = vunpack.c.l.b16 %v18
  %v178 = vunpack.c.h.b16 %v18
  %v179 = vunpack.c.l.b16 %v19
  %v180 = vunpack.c.h.b16 %v19
  %v181 = vunpack.c.l.b16 %v20
  %v182 = vunpack.c.l.b16 %v21
  %v183 = vunpack.c.h.b16 %v21
  %v184 = vunpack.c.l.b16 %v22
  %v185 = vunpack.c.h.b16 %v22
  %v186 = vunpack.c.l.b16 %v23
  %v187 = vunpack.c.l.b16 %v24
  %v188 = vunpack.c.h.b16 %v24
  %v189 = vunpack.c.l.b16 %v25
  %v190 = vunpack.c.h.b16 %v25
  %v191 = vunpack.c.l.b16 %v26
  %v192 = vunpack.c.l.b16 %v27
  %v193 = vunpack.c.h.b16 %v27
  %v194 = vunpack.c.l.b16 %v28
  %v195 = vunpack.c.h.b16 %v28
  %v196 = vunpack.c.l.b16 %v29
  %v197 = vunpack.c.l.b16 %v30
  %v198 = vunpack.c.h.b16 %v30
  %v199 = vunpack.c.l.b16 %v31
  %v200 = vunpack.c.h.b16 %v31
  %v201 = vunpack.c.l.b16 %v32
  %v202 = vunpack.c.l.b16 %v33
  %v203 = vunpack.c.h.b16 %v33
  %v204 = vunpack.c.l.b16 %v34
  %v205 = vunpack.c.h.b16 %v34
  %v206 = vunpack.c.l.b16 %v35
  %v207 = vunpack.c.l.b16 %v36
  %v208 = vunpack.c.h.b16 %v36
  %v209 = vunpack.c.l.b16 %v37
  %v210 = vunpack.c.h.b16 %v37
  %v211 = vunpack.c.l.b16 %v38
  %v212 = vunpack.c.l.b16 %v39
  %v213 = vunpack.c.h.b16 %v39
  %v214 = vunpack.c.l.b16 %v40
  %v215 = vunpack.c.h.b16 %v40
  %v216 = vunpack.c.l.b16 %v41
  %v217 = vunpack.c.l.b16 %v42
  %v218 = vunpack.c.h.b16 %v42
  %v219 = vunpack.c.l.b16 %v43
  %v220 = vunpack.c.h.b16 %v43
  %v221 = vunpack.c.l.b16 %v44
  %v222 = vunpack.c.l.b16 %v45
  %v223 = vunpack.c.h.b16 %v45
  %v224 = vunpack.c.l.b16 %v46
  %v225 = vunpack.c.h.b16 %v46
  %v226 = vunpack.c.l.b16 %v47
  %v227 = vunpack.c.l.b16 %v48
  %v228 = vunpack.c.h.b16 %v48
  %v229 = vunpack.c.l.b16 %v49
  %v230 = vunpack.c.h.b16 %v49
  %v231 = vunpack.c.l.b16 %v50
  %v232 = vunpack.c.l.b16 %v51
  %v233 = vunpack.c.h.b16 %v51
  %v234 = vunpack.c.l.b16 %v52
  %v235 = vunpack.c.h.b16 %v52
  %v236 = vunpack.c.l.b16 %v53
  %v237 = vpack.c.b16 %v177, %v172
  %v238 = vpack.c.b16 %v178, %v173
  %v239 = vpack.c.b16 %v179, %v174
  %v240 = vpack.c.b16 %v180, %v175
  %v241 = vpack.c.b16 %v181, %v176
  %v242 = vpack.c.b16 %v187, %v182
  %v243 = vpack.c.b16 %v188, %v183
  %v244 = vpack.c.b16 %v189, %v184
  %v245 = vpack.c.b16 %v190, %v185
  %v246 = vpack.c.b16 %v191, %v186
  %v247 = vpack.c.b16 %v197, %v192
  %v248 = vpack.c.b16 %v198, %v193
  %v249 = vpack.c.b16 %v199, %v194
  %v250 = vpack.c.b16 %v200, %v195
  %v251 = vpack.c.b16 %v201, %v196
  %v252 = vpack.c.b16 %v207, %v202
  %v253 = vpack.c.b16 %v208, %v203
  %v254 = vpack.c.b16 %v209, %v204
  %v255 = vpack.c.b16 %v210, %v205
  %v256 = vpack.c.b16 %v211, %v206
  %v257 = vpack.c.b16 %v217, %v212
  %v258 = vpack.c.b16 %v218, %v213
  %v259 = vpack.c.b16 %v219, %v214
  %v260 = vpack.c.b16 %v220, %v215
  %v261 = vpack.c.b16 %v221, %v216
  %v262 = vpack.c.b16 %v227, %v222
  %v263 = vpack.c.b16 %v228, %v223
  %v264 = vpack.c.b16 %v229, %v224
  %v265 = vpack.c.b16 %v230, %v225
  %v266 = vpack.c.b16 %v231, %v226
  %v267 = vpack.c.b16 %v232, %v232
  %v268 = vpack.c.b16 %v233, %v233
  %v269 = vpack.c.b16 %v234, %v234
  %v270 = vpack.c.b16 %v235, %v235
  %v271 = vpack.c.b16 %v236, %v236
  %v372 = vunpack.c.l.b16 %v54
  %v373 = vunpack.c.l.b16 %v55
  %v374 = vunpack.c.l.b16 %v56
  %v375 = vunpack.c.l.b16 %v57
  %v376 = vunpack.c.l.b16 %v58
  %v377 = vunpack.c.l.b16 %v59
  %v378 = vunpack.c.l.b16 %v60
  %v379 = vunpack.c.l.b16 %v61
  %v380 = vunpack.c.l.b16 %v62
  %v381 = vunpack.c.l.b16 %v63
  %v382 = vunpack.c.l.b16 %v64
  %v383 = vunpack.c.l.b16 %v65
  %v384 = vunpack.c.l.b16 %v66
  %v385 = vunpack.c.l.b16 %v67
  %v386 = vunpack.c.l.b16 %v68
  %v387 = vunpack.c.l.b16 %v69
  %v388 = vunpack.c.l.b16 %v70
  %v389 = vunpack.c.l.b16 %v71
  %v390 = vunpack.c.l.b16 %v72
  %v391 = vunpack.c.l.b16 %v73
  %v392 = vunpack.c.l.b16 %v74
  %v393 = vunpack.c.l.b16 %v75
  %v394 = vunpack.c.l.b16 %v76
  %v395 = vunpack.c.l.b16 %v77
  %v396 = vunpack.c.l.b16 %v78
  %v397 = vunpack.c.l.b16 %v79
  %v398 = vunpack.c.l.b16 %v80
  %v399 = vunpack.c.l.b16 %v81
  %v400 = vunpack.c.l.b16 %v82
  %v401 = vunpack.c.l.b16 %v83
  %v402 = vunpack.c.l.b16 %v84
  %v403 = vunpack.c.l.b16 %v85
  %v404 = vunpack.c.l.b16 %v86
  %v405 = vunpack.c.l.b16 %v87
  %v406 = vunpack.c.l.b16 %v88
  %v407 = vunpack.c.l.b16 %v89
  %v408 = vunpack.c.l.b16 %v90
  %v409 = vunpack.c.l.b16 %v91
  %v410 = vunpack.c.l.b16 %v92
  %v411 = vunpack.c.l.b16 %v93
  %v412 = vunpack.c.l.b16 %v94
  %v413 = vunpack.c.l.b16 %v95
  %v414 = vunpack.c.l.b16 %v96
  %v415 = vunpack.c.l.b16 %v97
  %v416 = vunpack.c.l.b16 %v98
  %v417 = vunpack.c.l.b16 %v99
  %v418 = vunpack.c.l.b16 %v100
  %v419 = vunpack.c.l.b16 %v101
  %v420 = vunpack.c.l.b16 %v102
  %v421 = vunpack.c.l.b16 %v103
  %v422 = vunpack.c.l.b16 %v104
  %v423 = vunpack.c.l.b16 %v105
  %v424 = vunpack.c.l.b16 %v106
  %v425 = vunpack.c.l.b16 %v107
  %v426 = vunpack.c.l.b16 %v108
  %v427 = vunpack.c.l.b16 %v109
  %v428 = vunpack.c.l.b16 %v110
  %v429 = vunpack.c.l.b16 %v111
  %v430 = vunpack.c.l.b16 %v112
  %v431 = vunpack.c.l.b16 %v113
  %v432 = vunpack.c.l.b16 %v114
  %v433 = vunpack.c.l.b16 %v115
  %v434 = vunpack.c.l.b16 %v116
  %v435 = vunpack.c.l.b16 %v117
  %v436 = vunpack.c.l.b16 %v118
  %v437 = vunpack.c.l.b16 %v119
  %v438 = vunpack.c.l.b16 %v120
  %v439 = vunpack.c.l.b16 %v121
  %v440 = vunpack.c.l.b16 %v122
  %v441 = vunpack.c.l.b16 %v123
  %v442 = vunpack.c.l.b16 %v124
  %v443 = vunpack.c.l.b16 %v125
  %v444 = vpack.c.b16 %v373, %v372
  %v445 = vpack.c.b16 %v375, %v374
  %v446 = vpack.c.b16 %v377, %v376
  %v447 = vpack.c.b16 %v379, %v378
  %v448 = vpack.c.b16 %v381, %v380
  %v449 = vpack.c.b16 %v383, %v382
  %v450 = vpack.c.b16 %v385, %v384
  %v451 = vpack.c.b16 %v387, %v386
  %v452 = vpack.c.b16 %v389, %v388
  %v453 = vpack.c.b16 %v391, %v390
  %v454 = vpack.c.b16 %v393, %v392
  %v455 = vpack.c.b16 %v395, %v394
  %v456 = vpack.c.b16 %v397, %v396
  %v457 = vpack.c.b16 %v399, %v398
  %v458 = vpack.c.b16 %v401, %v400
  %v459 = vpack.c.b16 %v403, %v402
  %v460 = vpack.c.b16 %v405, %v404
  %v461 = vpack.c.b16 %v407, %v406
  %v462 = vpack.c.b16 %v409, %v408
  %v463 = vpack.c.b16 %v411, %v410
  %v464 = vpack.c.b16 %v413, %v412
  %v465 = vpack.c.b16 %v415, %v414
  %v466 = vpack.c.b16 %v417, %v416
  %v467 = vpack.c.b16 %v419, %v418
  %v468 = vpack.c.b16 %v421, %v420
  %v469 = vpack.c.b16 %v423, %v422
  %v470 = vpack.c.b16 %v425, %v424
  %v471 = vpack.c.b16 %v427, %v426
  %v472 = vpack.c.b16 %v429, %v428
  %v473 = vpack.c.b16 %v431, %v430
  %v474 = vpack.c.b16 %v433, %v432
  %v475 = vpack.c.b16 %v435, %v434
  %v476 = vpack.c.b16 %v437, %v436
  %v477 = vpack.c.b16 %v439, %v438
  %v478 = vpack.c.b16 %v441, %v440
  %v479 = vpack.c.b16 %v443, %v442
  %vm516 = vcmask 523264
  %v518 = vsel %vm516, %v241, 0
  %v521 = vsel %vm516, %v246, 0
  %v524 = vsel %vm516, %v251, 0
  %v527 = vsel %vm516, %v256, 0
  %v530 = vsel %vm516, %v261, 0
  %v533 = vsel %vm516, %v266, 0
  %v536 = vsel %vm516, %v271, 0
  %538 = vmatprep.subr.bf16.mxu0 0
  %539 = vmatpush1.bf16.msra.mxu0 %v444
  %540 = vmatprep.subr.bf16.mxu0 0
  %541 = vmatpush1.bf16.msra.mxu0 %v445
  %542 = vmatprep.subr.bf16.mxu0 0
  %543 = vmatpush1.bf16.msra.mxu0 %v446
  %544 = vmatprep.subr.bf16.mxu0 0
  %545 = vmatpush1.bf16.msra.mxu0 %v447
  %546 = vmatprep.subr.bf16.mxu0 0
  %547 = vmatpush1.bf16.msra.mxu0 %v448
  %548 = vmatprep.subr.bf16.mxu0 0
  %549 = vmatpush1.bf16.msra.mxu0 %v449
  %550 = vmatprep.subr.bf16.mxu0 0
  %551 = vmatpush1.bf16.msra.mxu0 %v450
  %552 = vmatprep.subr.bf16.mxu0 0
  %553 = vmatpush1.bf16.msra.mxu0 %v451
  %554 = vmatprep.subr.bf16.mxu0 0
  %555 = vmatpush1.bf16.msra.mxu0 %v452
  %556 = vmatprep.subr.bf16.mxu0 0
  %557 = vmatpush1.bf16.msra.mxu0 %v453
  %558 = vmatprep.subr.bf16.mxu0 0
  %559 = vmatpush1.bf16.msra.mxu0 %v454
  %560 = vmatprep.subr.bf16.mxu0 0
  %561 = vmatpush1.bf16.msra.mxu0 %v455
  %562 = vmatprep.subr.bf16.mxu0 0
  %563 = vmatpush1.bf16.msra.mxu0 %v456
  %564 = vmatprep.subr.bf16.mxu0 0
  %565 = vmatpush1.bf16.msra.mxu0 %v457
  %566 = vmatprep.subr.bf16.mxu0 0
  %567 = vmatpush1.bf16.msra.mxu0 %v458
  %568 = vmatprep.subr.bf16.mxu0 0
  %569 = vmatpush1.bf16.msra.mxu0 %v459
  %570 = vmatprep.mubr.bf16.mxu0 %v238
  %571 = vmatmul.mubr.bf16.gmra.mrb[0].mxu0 %v237
  %v572 = vpop.f32.mrb[0].mxu0
  %v573 = vadd.f32 %v131, %v572
  %v574 = vpop.f32.mrb[0].mxu0
  %v575 = vpop.f32.mrb[0].mxu0
  %v576 = vadd.f32 %v131, %v575
  %v577 = vpop.f32.mrb[0].mxu0
  %578 = vmatprep.mubr.bf16.mxu0 %v243
  %579 = vmatmul.mubr.bf16.gmra.mrb[0].mxu0 %v242
  %v580 = vpop.f32.mrb[0].mxu0
  %v581 = vadd.f32 %v131, %v580
  %v582 = vpop.f32.mrb[0].mxu0
  %v583 = vpop.f32.mrb[0].mxu0
  %v584 = vadd.f32 %v131, %v583
  %v585 = vpop.f32.mrb[0].mxu0
  %586 = vmatprep.mubr.bf16.mxu0 %v248
  %587 = vmatmul.mubr.bf16.gmra.mrb[0].mxu0 %v247
  %v588 = vpop.f32.mrb[0].mxu0
  %v589 = vadd.f32 %v131, %v588
  %v590 = vpop.f32.mrb[0].mxu0
  %v591 = vpop.f32.mrb[0].mxu0
  %v592 = vadd.f32 %v131, %v591
  %v593 = vpop.f32.mrb[0].mxu0
  %594 = vmatprep.mubr.bf16.mxu0 %v253
  %595 = vmatmul.mubr.bf16.gmra.mrb[0].mxu0 %v252
  %v596 = vpop.f32.mrb[0].mxu0
  %v597 = vadd.f32 %v131, %v596
  %v598 = vpop.f32.mrb[0].mxu0
  %v599 = vpop.f32.mrb[0].mxu0
  %v600 = vadd.f32 %v131, %v599
  %v601 = vpop.f32.mrb[0].mxu0
  %602 = vmatprep.mubr.bf16.mxu0 %v258
  %603 = vmatmul.mubr.bf16.gmra.mrb[0].mxu0 %v257
  %v604 = vpop.f32.mrb[0].mxu0
  %v605 = vadd.f32 %v131, %v604
  %v606 = vpop.f32.mrb[0].mxu0
  %v607 = vpop.f32.mrb[0].mxu0
  %v608 = vadd.f32 %v131, %v607
  %v609 = vpop.f32.mrb[0].mxu0
  %610 = vmatprep.mubr.bf16.mxu0 %v263
  %611 = vmatmul.mubr.bf16.gmra.mrb[0].mxu0 %v262
  %v612 = vpop.f32.mrb[0].mxu0
  %v613 = vadd.f32 %v131, %v612
  %v614 = vpop.f32.mrb[0].mxu0
  %v615 = vpop.f32.mrb[0].mxu0
  %v616 = vadd.f32 %v131, %v615
  %v617 = vpop.f32.mrb[0].mxu0
  %618 = vmatprep.mubr.bf16.mxu0 %v268
  %619 = vmatmul.mubr.bf16.gmra.mrb[0].mxu0 %v267
  %v620 = vpop.f32.mrb[0].mxu0
  %v621 = vadd.f32 %v131, %v620
  %v622 = vpop.f32.mrb[0].mxu0
  %v623 = vpop.f32.mrb[0].mxu0
  %v624 = vpop.f32.mrb[0].mxu0
  %625 = vdwg.mxu0
  %626 = vmatprep.subr.bf16.mxu0 0
  %627 = vmatpush1.bf16.msra.mxu0 %v460
  %628 = vmatprep.subr.bf16.mxu0 0
  %629 = vmatpush1.bf16.msra.mxu0 %v461
  %630 = vmatprep.subr.bf16.mxu0 0
  %631 = vmatpush1.bf16.msra.mxu0 %v462
  %632 = vmatprep.subr.bf16.mxu0 0
  %633 = vmatpush1.bf16.msra.mxu0 %v463
  %634 = vmatprep.subr.bf16.mxu0 0
  %635 = vmatpush1.bf16.msra.mxu0 %v464
  %636 = vmatprep.subr.bf16.mxu0 0
  %637 = vmatpush1.bf16.msra.mxu0 %v465
  %638 = vmatprep.subr.bf16.mxu0 0
  %639 = vmatpush1.bf16.msra.mxu0 %v466
  %640 = vmatprep.subr.bf16.mxu0 0
  %641 = vmatpush1.bf16.msra.mxu0 %v467
  %642 = vmatprep.subr.bf16.mxu0 0
  %643 = vmatpush1.bf16.msra.mxu0 %v468
  %644 = vmatprep.subr.bf16.mxu0 0
  %645 = vmatpush1.bf16.msra.mxu0 %v469
  %646 = vmatprep.subr.bf16.mxu0 0
  %647 = vmatpush1.bf16.msra.mxu0 %v470
  %648 = vmatprep.subr.bf16.mxu0 0
  %649 = vmatpush1.bf16.msra.mxu0 %v471
  %650 = vmatprep.subr.bf16.mxu0 0
  %651 = vmatpush1.bf16.msra.mxu0 %v472
  %652 = vmatprep.subr.bf16.mxu0 0
  %653 = vmatpush1.bf16.msra.mxu0 %v473
  %654 = vmatprep.subr.bf16.mxu0 0
  %655 = vmatpush1.bf16.msra.mxu0 %v474
  %656 = vmatprep.subr.bf16.mxu0 0
  %657 = vmatpush1.bf16.msra.mxu0 %v475
  %658 = vmatprep.mubr.bf16.mxu0 %v240
  %659 = vmatmul.mubr.bf16.gmra.mrb[0].mxu0 %v239
  %v660 = vpop.f32.mrb[0].mxu0
  %v661 = vadd.f32 %v573, %v660
  %v662 = vpop.f32.mrb[0].mxu0
  %v663 = vpop.f32.mrb[0].mxu0
  %v664 = vadd.f32 %v576, %v663
  %v665 = vpop.f32.mrb[0].mxu0
  %666 = vmatprep.mubr.bf16.mxu0 %v245
  %667 = vmatmul.mubr.bf16.gmra.mrb[0].mxu0 %v244
  %v668 = vpop.f32.mrb[0].mxu0
  %v669 = vadd.f32 %v581, %v668
  %v670 = vpop.f32.mrb[0].mxu0
  %v671 = vpop.f32.mrb[0].mxu0
  %v672 = vadd.f32 %v584, %v671
  %v673 = vpop.f32.mrb[0].mxu0
  %674 = vmatprep.mubr.bf16.mxu0 %v250
  %675 = vmatmul.mubr.bf16.gmra.mrb[0].mxu0 %v249
  %v676 = vpop.f32.mrb[0].mxu0
  %v677 = vadd.f32 %v589, %v676
  %v678 = vpop.f32.mrb[0].mxu0
  %v679 = vpop.f32.mrb[0].mxu0
  %v680 = vadd.f32 %v592, %v679
  %v681 = vpop.f32.mrb[0].mxu0
  %682 = vmatprep.mubr.bf16.mxu0 %v255
  %683 = vmatmul.mubr.bf16.gmra.mrb[0].mxu0 %v254
  %v684 = vpop.f32.mrb[0].mxu0
  %v685 = vadd.f32 %v597, %v684
  %v686 = vpop.f32.mrb[0].mxu0
  %v687 = vpop.f32.mrb[0].mxu0
  %v688 = vadd.f32 %v600, %v687
  %v689 = vpop.f32.mrb[0].mxu0
  %690 = vmatprep.mubr.bf16.mxu0 %v260
  %691 = vmatmul.mubr.bf16.gmra.mrb[0].mxu0 %v259
  %v692 = vpop.f32.mrb[0].mxu0
  %v693 = vadd.f32 %v605, %v692
  %v694 = vpop.f32.mrb[0].mxu0
  %v695 = vpop.f32.mrb[0].mxu0
  %v696 = vadd.f32 %v608, %v695
  %v697 = vpop.f32.mrb[0].mxu0
  %698 = vmatprep.mubr.bf16.mxu0 %v265
  %699 = vmatmul.mubr.bf16.gmra.mrb[0].mxu0 %v264
  %v700 = vpop.f32.mrb[0].mxu0
  %v701 = vadd.f32 %v613, %v700
  %v702 = vpop.f32.mrb[0].mxu0
  %v703 = vpop.f32.mrb[0].mxu0
  %v704 = vadd.f32 %v616, %v703
  %v705 = vpop.f32.mrb[0].mxu0
  %706 = vmatprep.mubr.bf16.mxu0 %v270
  %707 = vmatmul.mubr.bf16.gmra.mrb[0].mxu0 %v269
  %v708 = vpop.f32.mrb[0].mxu0
  %v709 = vadd.f32 %v621, %v708
  %v710 = vpop.f32.mrb[0].mxu0
  %v711 = vpop.f32.mrb[0].mxu0
  %v712 = vpop.f32.mrb[0].mxu0
  %713 = vdwg.mxu0
  %714 = vmatprep.subr.bf16.mxu0 0
  %715 = vmatpush1.bf16.msra.mxu0 %v476
  %716 = vmatprep.subr.bf16.mxu0 0
  %717 = vmatpush1.bf16.msra.mxu0 %v477
  %718 = vmatprep.subr.bf16.mxu0 0
  %719 = vmatpush1.bf16.msra.mxu0 %v478
  %720 = vmatprep.subr.bf16.mxu0 0
  %721 = vmatpush1.bf16.msra.mxu0 %v479
  %722 = vmatprep.subr.bf16.mxu0 0
  %723 = vmatpush1.bf16.msra.mxu0 0
  %724 = vmatprep.subr.bf16.mxu0 0
  %725 = vmatpush1.bf16.msra.mxu0 0
  %726 = vmatprep.subr.bf16.mxu0 0
  %727 = vmatpush1.bf16.msra.mxu0 0
  %728 = vmatprep.subr.bf16.mxu0 0
  %729 = vmatpush1.bf16.msra.mxu0 0
  %730 = vmatprep.subr.bf16.mxu0 0
  %731 = vmatpush1.bf16.msra.mxu0 0
  %732 = vmatprep.subr.bf16.mxu0 0
  %733 = vmatpush1.bf16.msra.mxu0 0
  %734 = vmatprep.subr.bf16.mxu0 0
  %735 = vmatpush1.bf16.msra.mxu0 0
  %736 = vmatprep.subr.bf16.mxu0 0
  %737 = vmatpush1.bf16.msra.mxu0 0
  %738 = vmatprep.subr.bf16.mxu0 0
  %739 = vmatpush1.bf16.msra.mxu0 0
  %740 = vmatprep.subr.bf16.mxu0 0
  %741 = vmatpush1.bf16.msra.mxu0 0
  %742 = vmatprep.subr.bf16.mxu0 0
  %743 = vmatpush1.bf16.msra.mxu0 0
  %744 = vmatprep.subr.bf16.mxu0 0
  %745 = vmatpush1.bf16.msra.mxu0 0
  %746 = vmatprep.mubr.bf16.mxu0 0
  %747 = vmatmul.mubr.bf16.gmra.mrb[0].mxu0 %v518
  %v748 = vpop.f32.mrb[0].mxu0
  %v749 = vadd.f32 %v661, %v748
  %v750 = vpop.f32.mrb[0].mxu0
  %v751 = vpop.f32.mrb[0].mxu0
  %v752 = vadd.f32 %v664, %v751
  %v753 = vpop.f32.mrb[0].mxu0
  %754 = vmatprep.mubr.bf16.mxu0 0
  %755 = vmatmul.mubr.bf16.gmra.mrb[0].mxu0 %v521
  %v756 = vpop.f32.mrb[0].mxu0
  %v757 = vadd.f32 %v669, %v756
  %v758 = vpop.f32.mrb[0].mxu0
  %v759 = vpop.f32.mrb[0].mxu0
  %v760 = vadd.f32 %v672, %v759
  %v761 = vpop.f32.mrb[0].mxu0
  %762 = vmatprep.mubr.bf16.mxu0 0
  %763 = vmatmul.mubr.bf16.gmra.mrb[0].mxu0 %v524
  %v764 = vpop.f32.mrb[0].mxu0
  %v765 = vadd.f32 %v677, %v764
  %v766 = vpop.f32.mrb[0].mxu0
  %v767 = vpop.f32.mrb[0].mxu0
  %v768 = vadd.f32 %v680, %v767
  %v769 = vpop.f32.mrb[0].mxu0
  %770 = vmatprep.mubr.bf16.mxu0 0
  %771 = vmatmul.mubr.bf16.gmra.mrb[0].mxu0 %v527
  %v772 = vpop.f32.mrb[0].mxu0
  %v773 = vadd.f32 %v685, %v772
  %v774 = vpop.f32.mrb[0].mxu0
  %v775 = vpop.f32.mrb[0].mxu0
  %v776 = vadd.f32 %v688, %v775
  %v777 = vpop.f32.mrb[0].mxu0
  %778 = vmatprep.mubr.bf16.mxu0 0
  %779 = vmatmul.mubr.bf16.gmra.mrb[0].mxu0 %v530
  %v780 = vpop.f32.mrb[0].mxu0
  %v781 = vadd.f32 %v693, %v780
  %v782 = vpop.f32.mrb[0].mxu0
  %v783 = vpop.f32.mrb[0].mxu0
  %v784 = vadd.f32 %v696, %v783
  %v785 = vpop.f32.mrb[0].mxu0
  %786 = vmatprep.mubr.bf16.mxu0 0
  %787 = vmatmul.mubr.bf16.gmra.mrb[0].mxu0 %v533
  %v788 = vpop.f32.mrb[0].mxu0
  %v789 = vadd.f32 %v701, %v788
  %v790 = vpop.f32.mrb[0].mxu0
  %v791 = vpop.f32.mrb[0].mxu0
  %v792 = vadd.f32 %v704, %v791
  %v793 = vpop.f32.mrb[0].mxu0
  %794 = vmatprep.mubr.bf16.mxu0 0
  %795 = vmatmul.mubr.bf16.gmra.mrb[0].mxu0 %v536
  %v796 = vpop.f32.mrb[0].mxu0
  %v797 = vadd.f32 %v709, %v796
  %v798 = vpop.f32.mrb[0].mxu0
  %v799 = vpop.f32.mrb[0].mxu0
  %v800 = vpop.f32.mrb[0].mxu0
  %801 = vdwg.mxu0
  %v802 = vmax.f32 %v749, 0.0
  %v803 = vmax.f32 %v752, 0.0
  %v804 = vmax.f32 %v757, 0.0
  %v805 = vmax.f32 %v760, 0.0
  %v806 = vmax.f32 %v765, 0.0
  %v807 = vmax.f32 %v768, 0.0
  %v808 = vmax.f32 %v773, 0.0
  %v809 = vmax.f32 %v776, 0.0
  %v810 = vmax.f32 %v781, 0.0
  %v811 = vmax.f32 %v784, 0.0
  %v812 = vmax.f32 %v789, 0.0
  %v813 = vmax.f32 %v792, 0.0
  %v814 = vmax.f32 %v797, 0.0
  %v815 = vpack.c.bf16 %v803, %v802
  %v816 = vpack.c.bf16 %v805, %v804
  %v817 = vpack.c.bf16 %v807, %v806
  %v818 = vpack.c.bf16 %v809, %v808
  %v819 = vpack.c.bf16 %v811, %v810
  %v820 = vpack.c.bf16 %v813, %v812
  %v821 = vpack.c.bf16 %v814, %v814
  %v829 = vunpack.c.l.b16 %v815
  %v830 = vunpack.c.h.b16 %v815
  %v831 = vunpack.c.l.b16 %v816
  %v832 = vunpack.c.h.b16 %v816
  %v833 = vunpack.c.l.b16 %v817
  %v834 = vunpack.c.h.b16 %v817
  %v835 = vunpack.c.l.b16 %v818
  %v836 = vunpack.c.h.b16 %v818
  %v837 = vunpack.c.l.b16 %v819
  %v838 = vunpack.c.h.b16 %v819
  %v839 = vunpack.c.l.b16 %v820
  %v840 = vunpack.c.h.b16 %v820
  %v841 = vunpack.c.l.b16 %v821
  %v842 = vpack.c.b16 %v829, %v829
  %v843 = vpack.c.b16 %v830, %v830
  %v844 = vpack.c.b16 %v831, %v831
  %v845 = vpack.c.b16 %v832, %v832
  %v846 = vpack.c.b16 %v833, %v833
  %v847 = vpack.c.b16 %v834, %v834
  %v848 = vpack.c.b16 %v835, %v835
  %v849 = vpack.c.b16 %v836, %v836
  %v850 = vpack.c.b16 %v837, %v837
  %v851 = vpack.c.b16 %v838, %v838
  %v852 = vpack.c.b16 %v839, %v839
  %v853 = vpack.c.b16 %v840, %v840
  %v854 = vpack.c.b16 %v841, %v841
  %vm868 = vcmask 519168
  %869 = vst.msk [vmem:[%s3] sm:$0xf] %vm868, %v842
  %870 = vst.msk [vmem:[%s3 + $0x4] sm:$0xf] %vm868, %v843
  %871 = vst.msk [vmem:[%s3 + $0x8] sm:$0xf] %vm868, %v844
  %872 = vst.msk [vmem:[%s3 + $0xc] sm:$0xf] %vm868, %v845
  %873 = vst.msk [vmem:[%s3 + $0x10] sm:$0xf] %vm868, %v846
  %874 = vst.msk [vmem:[%s3 + $0x14] sm:$0xf] %vm868, %v847
  %875 = vst.msk [vmem:[%s3 + $0x18] sm:$0xf] %vm868, %v848
  %876 = vst.msk [vmem:[%s3 + $0x1c] sm:$0xf] %vm868, %v849
  %877 = vst.msk [vmem:[%s3 + $0x20] sm:$0xf] %vm868, %v850
  %878 = vst.msk [vmem:[%s3 + $0x24] sm:$0xf] %vm868, %v851
  %879 = vst.msk [vmem:[%s3 + $0x28] sm:$0xf] %vm868, %v852
  %880 = vst.msk [vmem:[%s3 + $0x2c] sm:$0xf] %vm868, %v853
  %vm881 = vcmask 516096
  %882 = vst.msk [vmem:[%s3 + $0x30] sm:$0x1] %vm881, %v854
  // Predicated region
  $region14: #{dqn_forward.6} parent=0 // pred_check
    _
  $region15: #{dqn_forward.6} parent=0 // pred_check_branch
    %884 = sbr.rel (0) target = $region17
  $region16: #{dqn_forward.6} parent=0 // pred_region
    _
  $region17: #{dqn_forward.6} parent=0 // pred_fallthru
    _
  // Predicated region
  $region18: #{dqn_forward.6} parent=0 // pred_check
    _
  $region19: #{dqn_forward.6} parent=0 // pred_check_branch
    %886 = sbr.rel (0) target = $region21
  $region20: #{dqn_forward.6} parent=0 // pred_region
    _
  $region21: #{dqn_forward.6} parent=0 // pred_fallthru
    _

// kernel: dqn_forward.7
$region0: #{dqn_forward.7}
  #allocation0 [shape = 'u32[]', space=smem, size = 0x4, offset = 0x4, fixed_abs, tag = 'smem constant byte address 0x4 - core index']
  #allocation1 [shape = 'u32[144,128]{1,0:T(1,128)}', space=vmem, size = 0x12000, scoped, tag = 'internal scratch']
  #allocation2 [shape = 'f32[2,512]{1,0:T(2,128)}', space=vmem, size = 0x1000, scoped, tag = 'scratch operand']
  %s0 = inlined_call_operand.vmem [shape: bf16[2,3200], index: 0, kind: input, shape index: {}]
  %s1 = inlined_call_operand.vmem [shape: bf16[3200,512], index: 1, kind: input, shape index: {}]
  %s2 = inlined_call_operand.vmem [shape: f32[1,512], index: 2, kind: input, shape index: {}]
  %s3 = inlined_call_operand.vmem [shape: bf16[512,4], index: 3, kind: input, shape index: {}]
  %s4 = inlined_call_operand.vmem [shape: f32[1,4], index: 4, kind: input, shape index: {}]
  %s5 = inlined_call_operand.hbm [shape: f32[2,4], index: 5, kind: output, shape index: {}]
  %s6 = sld [smem:[#allocation0]]
  $region61: #{dqn_forward.7} parent=0
    _
  %s8 = ssub.s32 1, %s6
  %s9 = scalar_select 0, %s8, %s6
  $region1: #{dqn_forward.7} parent=0
    #allocation3 [shape = 'u8[1024]{0}', space=vmem, size = 0x400, scoped, tag = 'output window, operand 0, single buffered']
    #allocation4 [shape = 's32[2]{0}', space=sflag, size = 0x8, scoped, tag = 'scoped memory for dqn_forward.7']
    %10 = vsyncpa [#allocation4], 0
    loop: start=0, step=1, limit=7
    $region2: #{dqn_forward.7} parent=1 // loop_pre_header
      _
    $region3: #{dqn_forward.7} parent=1 // loop_header
      %s12 = sphi 0, %s16
      %p13 = scmp.ge.s32.totalorder %s12, 7
      %s22 = sphi 0, %s24
      %s25 = sphi 0, %s22
      %s26 = sphi 0, %s25
      %s42 = sphi 0, %s26
      %s48 = sphi 0, %s50
      %s51 = sphi 0, %s48
      %s52 = sphi 0, %s51
      %s68 = sphi 0, %s52
      %s72 = sphi 0, %s72
      %s74 = sphi 0, %s72
      %s75 = sphi 0, %s74
      %s89 = sphi 0, %s75
      %s93 = sphi 0, %s93
      %s95 = sphi 0, %s93
      %s96 = sphi 0, %s95
      %s110 = sphi 0, %s96
      %s114 = sphi 0, %s114
      %s116 = sphi 0, %s114
      %s117 = sphi 0, %s116
      %s131 = sphi 0, %s117
      %s135 = sphi 0, %s135
      %s137 = sphi 0, %s135
      %s138 = sphi 0, %s137
      %s152 = sphi 0, %s138
    $region4: #{dqn_forward.7} parent=1 // loop_header_branch
      %15 = sbr.rel (%p13) target = $region8
    $region5: #{dqn_forward.7} parent=1 // loop_body
      %s17 = ssub.s32 %s12, 1
      %s18 = ssub.s32 %s12, 2
      %s19 = sadd.s32 %s12, 1
      %s20 = ssub.s32 %s12, %s19
      %p21 = scmp.eq.s32.totalorder %s20, 0
      %s23 = sadd.s32 %s22, 1
      %s24 = scalar_select %p21, %s22, %s23
      %p27 = pneg %p21
      %p28 = scmp.eq.s32.totalorder %s12, 4
      %p29 = por %p27, %p28
      %p30 = scmp.ne.s32.totalorder %s22, %s25
      %p31 = scmp.eq.s32.totalorder %s12, 0
      %p32 = por %p30, %p31
      %p33 = scmp.ne.s32.totalorder %s22, %s25
      %p34 = scmp.eq.s32.totalorder %s17, 4
      %p35 = por %p33, %p34
      %p36 = scmp.ne.s32.totalorder %s25, %s26
      %p37 = scmp.eq.s32.totalorder %s17, 0
      %p38 = por %p36, %p37
      %p39 = scmp.ne.s32.totalorder %s25, %s26
      %p40 = scmp.eq.s32.totalorder %s18, 4
      %p41 = por %p39, %p40
      %p43 = scmp.ne.s32.totalorder %s26, %s42
      %p44 = scmp.eq.s32.totalorder %s18, 0
      %p45 = por %p43, %p44
      %s46 = ssub.s32 %s12, %s19
      %p47 = scmp.eq.s32.totalorder %s46, 0
      %s49 = sadd.s32 %s48, 1
      %s50 = scalar_select %p47, %s48, %s49
      %p53 = pneg %p47
      %p54 = scmp.eq.s32.totalorder %s12, 4
      %p55 = por %p53, %p54
      %p56 = scmp.ne.s32.totalorder %s48, %s51
      %p57 = scmp.eq.s32.totalorder %s12, 0
      %p58 = por %p56, %p57
      %p59 = scmp.ne.s32.totalorder %s48, %s51
      %p60 = scmp.eq.s32.totalorder %s17, 4
      %p61 = por %p59, %p60
      %p62 = scmp.ne.s32.totalorder %s51, %s52
      %p63 = scmp.eq.s32.totalorder %s17, 0
      %p64 = por %p62, %p63
      %p65 = scmp.ne.s32.totalorder %s51, %s52
      %p66 = scmp.eq.s32.totalorder %s18, 4
      %p67 = por %p65, %p66
      %p69 = scmp.ne.s32.totalorder %s52, %s68
      %p70 = scmp.eq.s32.totalorder %s18, 0
      %p71 = por %p69, %p70
      %s73 = sadd.s32 %s72, 1
      %p76 = scmp.eq.s32.totalorder %s12, 4
      %p77 = scmp.ne.s32.totalorder %s72, %s74
      %p78 = scmp.eq.s32.totalorder %s12, 0
      %p79 = por %p77, %p78
      %p80 = scmp.ne.s32.totalorder %s72, %s74
      %p81 = scmp.eq.s32.totalorder %s17, 4
      %p82 = por %p80, %p81
      %p83 = scmp.ne.s32.totalorder %s74, %s75
      %p84 = scmp.eq.s32.totalorder %s17, 0
      %p85 = por %p83, %p84
      %p86 = scmp.ne.s32.totalorder %s74, %s75
      %p87 = scmp.eq.s32.totalorder %s18, 4
      %p88 = por %p86, %p87
      %p90 = scmp.ne.s32.totalorder %s75, %s89
      %p91 = scmp.eq.s32.totalorder %s18, 0
      %p92 = por %p90, %p91
      %s94 = sadd.s32 %s93, 1
      %p97 = scmp.eq.s32.totalorder %s12, 4
      %p98 = scmp.ne.s32.totalorder %s93, %s95
      %p99 = scmp.eq.s32.totalorder %s12, 0
      %p100 = por %p98, %p99
      %p101 = scmp.ne.s32.totalorder %s93, %s95
      %p102 = scmp.eq.s32.totalorder %s17, 4
      %p103 = por %p101, %p102
      %p104 = scmp.ne.s32.totalorder %s95, %s96
      %p105 = scmp.eq.s32.totalorder %s17, 0
      %p106 = por %p104, %p105
      %p107 = scmp.ne.s32.totalorder %s95, %s96
      %p108 = scmp.eq.s32.totalorder %s18, 4
      %p109 = por %p107, %p108
      %p111 = scmp.ne.s32.totalorder %s96, %s110
      %p112 = scmp.eq.s32.totalorder %s18, 0
      %p113 = por %p111, %p112
      %s115 = sadd.s32 %s114, 1
      %p118 = scmp.eq.s32.totalorder %s12, 4
      %p119 = scmp.ne.s32.totalorder %s114, %s116
      %p120 = scmp.eq.s32.totalorder %s12, 0
      %p121 = por %p119, %p120
      %p122 = scmp.ne.s32.totalorder %s114, %s116
      %p123 = scmp.eq.s32.totalorder %s17, 4
      %p124 = por %p122, %p123
      %p125 = scmp.ne.s32.totalorder %s116, %s117
      %p126 = scmp.eq.s32.totalorder %s17, 0
      %p127 = por %p125, %p126
      %p128 = scmp.ne.s32.totalorder %s116, %s117
      %p129 = scmp.eq.s32.totalorder %s18, 4
      %p130 = por %p128, %p129
      %p132 = scmp.ne.s32.totalorder %s117, %s131
      %p133 = scmp.eq.s32.totalorder %s18, 0
      %p134 = por %p132, %p133
      %s136 = sadd.s32 %s135, 1
      %p139 = scmp.eq.s32.totalorder %s12, 4
      %p140 = scmp.ne.s32.totalorder %s135, %s137
      %p141 = scmp.eq.s32.totalorder %s12, 0
      %p142 = por %p140, %p141
      %p143 = scmp.ne.s32.totalorder %s135, %s137
      %p144 = scmp.eq.s32.totalorder %s17, 4
      %p145 = por %p143, %p144
      %p146 = scmp.ne.s32.totalorder %s137, %s138
      %p147 = scmp.eq.s32.totalorder %s17, 0
      %p148 = por %p146, %p147
      %p149 = scmp.ne.s32.totalorder %s137, %s138
      %p150 = scmp.eq.s32.totalorder %s18, 4
      %p151 = por %p149, %p150
      %p153 = scmp.ne.s32.totalorder %s138, %s152
      %p154 = scmp.eq.s32.totalorder %s18, 0
      %p155 = por %p153, %p154
      %p156 = scmp.le.s32.totalorder 1, %s12
      %p157 = scmp.lt.s32.totalorder %s12, 6
      %p158 = pnand %p156, %p157
      %p159 = pneg %p158
      // Predicated region
      $region9: #{dqn_forward.7} parent=5 // pred_check
        _
      $region10: #{dqn_forward.7} parent=5 // pred_check_branch
        %161 = sbr.rel (%p158) target = $region12
      $region11: #{dqn_forward.7} parent=5 // pred_region
        %s162 = ssub.s32 %s12, 1
        // Predicated region
        $region13: #{dqn_forward.7} parent=11 // pred_check
          %p163 = pneg %p85
        $region14: #{dqn_forward.7} parent=11 // pred_check_branch
          %165 = sbr.rel (%p163) target = $region16
        $region15: #{dqn_forward.7} parent=11 // pred_region
          _
        $region16: #{dqn_forward.7} parent=11 // pred_fallthru
          _
        // Predicated region
        $region17: #{dqn_forward.7} parent=11 // pred_check
          %p166 = pneg %p106
        $region18: #{dqn_forward.7} parent=11 // pred_check_branch
          %168 = sbr.rel (%p166) target = $region20
        $region19: #{dqn_forward.7} parent=11 // pred_region
          _
        $region20: #{dqn_forward.7} parent=11 // pred_fallthru
          _
        // Predicated region
        $region21: #{dqn_forward.7} parent=11 // pred_check
          %p169 = pneg %p127
        $region22: #{dqn_forward.7} parent=11 // pred_check_branch
          %171 = sbr.rel (%p169) target = $region24
        $region23: #{dqn_forward.7} parent=11 // pred_region
          _
        $region24: #{dqn_forward.7} parent=11 // pred_fallthru
          _
      $region12: #{dqn_forward.7} parent=5 // pred_fallthru
        _
      %p172 = scmp.lt.s32.totalorder %s12, 5
      // Predicated region
      $region25: #{dqn_forward.7} parent=5 // pred_check
        %p173 = pneg %p172
      $region26: #{dqn_forward.7} parent=5 // pred_check_branch
        %175 = sbr.rel (%p173) target = $region28
      $region27: #{dqn_forward.7} parent=5 // pred_region
        // Predicated region
        $region29: #{dqn_forward.7} parent=27 // pred_check
          %p176 = pneg %p32
        $region30: #{dqn_forward.7} parent=27 // pred_check_branch
          %178 = sbr.rel (%p176) target = $region32
        $region31: #{dqn_forward.7} parent=27 // pred_region
          %s179 = smul.u32 5, %s12
          %p180 = scmp.lt.s32.totalorder %s179, 24
          %s181 = scalar_select %p180, %s179, 24
          %s182 = scalar_lea.vmem %s0, %s181
          %s183 = smul.u32 5, %s12
        $region32: #{dqn_forward.7} parent=27 // pred_fallthru
          _
        // Predicated region
        $region33: #{dqn_forward.7} parent=27 // pred_check
          %p184 = pneg %p58
        $region34: #{dqn_forward.7} parent=27 // pred_check_branch
          %186 = sbr.rel (%p184) target = $region36
        $region35: #{dqn_forward.7} parent=27 // pred_region
          %s187 = smul.u32 80, %s12
          %p188 = scmp.lt.s32.totalorder %s187, 399
          %s189 = scalar_select %p188, %s187, 399
          %s190 = smul.addr %s189, 4
          %s191 = smul.addr %s190, 4
          %s192 = scalar_lea.vmem %s1, %s191
          %s193 = smul.u32 80, %s12
        $region36: #{dqn_forward.7} parent=27 // pred_fallthru
          _
      $region28: #{dqn_forward.7} parent=5 // pred_fallthru
        _
      %p194 = scmp.le.s32.totalorder 1, %s12
      %p195 = scmp.lt.s32.totalorder %s12, 6
      %p196 = pnand %p194, %p195
      %p197 = pneg %p196
      // Predicated region
      $region37: #{dqn_forward.7} parent=5 // pred_check
        _
      $region38: #{dqn_forward.7} parent=5 // pred_check_branch
        %199 = sbr.rel (%p196) target = $region40
      $region39: #{dqn_forward.7} parent=5 // pred_region
        %s200 = ssub.s32 %s12, 1
        %s201 = smul.u32 5, %s17
        %p202 = scmp.lt.s32.totalorder %s201, 24
        %s203 = scalar_select %p202, %s201, 24
        %s204 = scalar_lea.vmem %s0, %s203
        %p205 = pneg %p38
        %p206 = pneg %p35
        %s207 = smul.u32 80, %s17
        %p208 = scmp.lt.s32.totalorder %s207, 399
        %s209 = scalar_select %p208, %s207, 399
        %s210 = smul.addr %s209, 4
        %s211 = smul.addr %s210, 4
        %s212 = scalar_lea.vmem %s1, %s211
        %p213 = pneg %p64
        %p214 = pneg %p61
        %p215 = pneg %p85
        %p216 = pneg %p82
        %p217 = pneg %p106
        %p218 = pneg %p103
        %p219 = pneg %p127
        %p220 = pneg %p124
        %p221 = pneg %p148
        %p222 = pneg %p145
        %s223 = smul.u32 5, %s17
        %p224 = scmp.lt.s32.totalorder %s223, 24
        %s225 = scalar_select %p224, %s223, 24
        %s226 = scalar_lea.vmem %s0, %s225
        %s227 = smul.u32 5, %s17
        %s228 = smul.u32 80, %s17
        %p229 = scmp.lt.s32.totalorder %s228, 399
        %s230 = scalar_select %p229, %s228, 399
        %s231 = smul.addr %s230, 4
        %s232 = smul.addr %s231, 4
        %s233 = scalar_lea.vmem %s1, %s232
        %s234 = smul.u32 80, %s17
        %p236 = scmp.eq.s32.totalorder %s17, 0
        // Predicated region
        $region41: #{dqn_forward.7} parent=39 // pred_check
          %p237 = pneg %p236
        $region42: #{dqn_forward.7} parent=39 // pred_check_branch
          %239 = sbr.rel (%p237) target = $region44
        $region43: #{dqn_forward.7} parent=39 // pred_region
          %240 = vst [vmem:[#allocation2] sm:$0xff] 0.0
        $region44: #{dqn_forward.7} parent=39 // pred_fallthru
          _
        %v241 = vld [vmem:[#allocation2] sm:$0xff]
        %v242 = vld [vmem:[%s226] sm:$0x1f]
        %v243 = vld [vmem:[%s233] sm:$0xff]
        %v244 = vld [vmem:[%s233 + $0x8] sm:$0xff]
        %v245 = vld [vmem:[%s233 + $0x10] sm:$0xff]
        %v246 = vld [vmem:[%s233 + $0x18] sm:$0xff]
        %v247 = vld [vmem:[%s233 + $0x20] sm:$0xff]
        %v248 = vld [vmem:[%s233 + $0x28] sm:$0xff]
        %v249 = vld [vmem:[%s233 + $0x30] sm:$0xff]
        %v250 = vld [vmem:[%s233 + $0x38] sm:$0xff]
        %v251 = vld [vmem:[%s233 + $0x40] sm:$0xff]
        %v252 = vld [vmem:[%s233 + $0x48] sm:$0xff]
        %v253 = vld [vmem:[%s233 + $0x50] sm:$0xff]
        %v254 = vld [vmem:[%s233 + $0x58] sm:$0xff]
        %v255 = vld [vmem:[%s233 + $0x60] sm:$0xff]
        %v256 = vld [vmem:[%s233 + $0x68] sm:$0xff]
        %v257 = vld [vmem:[%s233 + $0x70] sm:$0xff]
        %v258 = vld [vmem:[%s233 + $0x78] sm:$0xff]
        %v259 = vld [vmem:[%s233 + $0x80] sm:$0xff]
        %v260 = vld [vmem:[%s233 + $0x88] sm:$0xff]
        %v261 = vld [vmem:[%s233 + $0x90] sm:$0xff]
        %v262 = vld [vmem:[%s233 + $0x98] sm:$0xff]
        %v263 = vld [vmem:[%s233 + $0xa0] sm:$0xff]
        %v264 = vld [vmem:[%s233 + $0xa8] sm:$0xff]
        %v265 = vld [vmem:[%s233 + $0xb0] sm:$0xff]
        %v266 = vld [vmem:[%s233 + $0xb8] sm:$0xff]
        %v267 = vld [vmem:[%s233 + $0xc0] sm:$0xff]
        %v268 = vld [vmem:[%s233 + $0xc8] sm:$0xff]
        %v269 = vld [vmem:[%s233 + $0xd0] sm:$0xff]
        %v270 = vld [vmem:[%s233 + $0xd8] sm:$0xff]
        %v271 = vld [vmem:[%s233 + $0xe0] sm:$0xff]
        %v272 = vld [vmem:[%s233 + $0xe8] sm:$0xff]
        %v273 = vld [vmem:[%s233 + $0xf0] sm:$0xff]
        %v274 = vld [vmem:[%s233 + $0xf8] sm:$0xff]
        %v275 = vld [vmem:[%s233 + $0x100] sm:$0xff]
        %v276 = vld [vmem:[%s233 + $0x108] sm:$0xff]
        %v277 = vld [vmem:[%s233 + $0x110] sm:$0xff]
        %v278 = vld [vmem:[%s233 + $0x118] sm:$0xff]
        %v279 = vld [vmem:[%s233 + $0x120] sm:$0xff]
        %v280 = vld [vmem:[%s233 + $0x128] sm:$0xff]
        %v281 = vld [vmem:[%s233 + $0x130] sm:$0xff]
        %v282 = vld [vmem:[%s233 + $0x138] sm:$0xff]
        %v283 = vld [vmem:[%s233 + $0x140] sm:$0xff]
        %v284 = vld [vmem:[%s233 + $0x148] sm:$0xff]
        %v285 = vld [vmem:[%s233 + $0x150] sm:$0xff]
        %v286 = vld [vmem:[%s233 + $0x158] sm:$0xff]
        %v287 = vld [vmem:[%s233 + $0x160] sm:$0xff]
        %v288 = vld [vmem:[%s233 + $0x168] sm:$0xff]
        %v289 = vld [vmem:[%s233 + $0x170] sm:$0xff]
        %v290 = vld [vmem:[%s233 + $0x178] sm:$0xff]
        %v291 = vld [vmem:[%s233 + $0x180] sm:$0xff]
        %v292 = vld [vmem:[%s233 + $0x188] sm:$0xff]
        %v293 = vld [vmem:[%s233 + $0x190] sm:$0xff]
        %v294 = vld [vmem:[%s233 + $0x198] sm:$0xff]
        %v295 = vld [vmem:[%s233 + $0x1a0] sm:$0xff]
        %v296 = vld [vmem:[%s233 + $0x1a8] sm:$0xff]
        %v297 = vld [vmem:[%s233 + $0x1b0] sm:$0xff]
        %v298 = vld [vmem:[%s233 + $0x1b8] sm:$0xff]
        %v299 = vld [vmem:[%s233 + $0x1c0] sm:$0xff]
        %v300 = vld [vmem:[%s233 + $0x1c8] sm:$0xff]
        %v301 = vld [vmem:[%s233 + $0x1d0] sm:$0xff]
        %v302 = vld [vmem:[%s233 + $0x1d8] sm:$0xff]
        %v303 = vld [vmem:[%s233 + $0x1e0] sm:$0xff]
        %v304 = vld [vmem:[%s233 + $0x1e8] sm:$0xff]
        %v305 = vld [vmem:[%s233 + $0x1f0] sm:$0xff]
        %v306 = vld [vmem:[%s233 + $0x1f8] sm:$0xff]
        %v307 = vld [vmem:[%s233 + $0x200] sm:$0xff]
        %v308 = vld [vmem:[%s233 + $0x208] sm:$0xff]
        %v309 = vld [vmem:[%s233 + $0x210] sm:$0xff]
        %v310 = vld [vmem:[%s233 + $0x218] sm:$0xff]
        %v311 = vld [vmem:[%s233 + $0x220] sm:$0xff]
        %v312 = vld [vmem:[%s233 + $0x228] sm:$0xff]
        %v313 = vld [vmem:[%s233 + $0x230] sm:$0xff]
        %v314 = vld [vmem:[%s233 + $0x238] sm:$0xff]
        %v315 = vld [vmem:[%s233 + $0x240] sm:$0xff]
        %v316 = vld [vmem:[%s233 + $0x248] sm:$0xff]
        %v317 = vld [vmem:[%s233 + $0x250] sm:$0xff]
        %v318 = vld [vmem:[%s233 + $0x258] sm:$0xff]
        %v319 = vld [vmem:[%s233 + $0x260] sm:$0xff]
        %v320 = vld [vmem:[%s233 + $0x268] sm:$0xff]
        %v321 = vld [vmem:[%s233 + $0x270] sm:$0xff]
        %v322 = vld [vmem:[%s233 + $0x278] sm:$0xff]
        %v323 = vld [vmem:[%s233 + $0x280] sm:$0xff]
        %v324 = vld [vmem:[%s233 + $0x288] sm:$0xff]
        %v325 = vld [vmem:[%s233 + $0x290] sm:$0xff]
        %v326 = vld [vmem:[%s233 + $0x298] sm:$0xff]
        %v327 = vld [vmem:[%s233 + $0x2a0] sm:$0xff]
        %v328 = vld [vmem:[%s233 + $0x2a8] sm:$0xff]
        %v329 = vld [vmem:[%s233 + $0x2b0] sm:$0xff]
        %v330 = vld [vmem:[%s233 + $0x2b8] sm:$0xff]
        %v331 = vld [vmem:[%s233 + $0x2c0] sm:$0xff]
        %v332 = vld [vmem:[%s233 + $0x2c8] sm:$0xff]
        %v333 = vld [vmem:[%s233 + $0x2d0] sm:$0xff]
        %v334 = vld [vmem:[%s233 + $0x2d8] sm:$0xff]
        %v335 = vld [vmem:[%s233 + $0x2e0] sm:$0xff]
        %v336 = vld [vmem:[%s233 + $0x2e8] sm:$0xff]
        %v337 = vld [vmem:[%s233 + $0x2f0] sm:$0xff]
        %v338 = vld [vmem:[%s233 + $0x2f8] sm:$0xff]
        %v339 = vld [vmem:[%s233 + $0x300] sm:$0xff]
        %v340 = vld [vmem:[%s233 + $0x308] sm:$0xff]
        %v341 = vld [vmem:[%s233 + $0x310] sm:$0xff]
        %v342 = vld [vmem:[%s233 + $0x318] sm:$0xff]
        %v343 = vld [vmem:[%s233 + $0x320] sm:$0xff]
        %v344 = vld [vmem:[%s233 + $0x328] sm:$0xff]
        %v345 = vld [vmem:[%s233 + $0x330] sm:$0xff]
        %v346 = vld [vmem:[%s233 + $0x338] sm:$0xff]
        %v347 = vld [vmem:[%s233 + $0x340] sm:$0xff]
        %v348 = vld [vmem:[%s233 + $0x348] sm:$0xff]
        %v349 = vld [vmem:[%s233 + $0x350] sm:$0xff]
        %v350 = vld [vmem:[%s233 + $0x358] sm:$0xff]
        %v351 = vld [vmem:[%s233 + $0x360] sm:$0xff]
        %v352 = vld [vmem:[%s233 + $0x368] sm:$0xff]
        %v353 = vld [vmem:[%s233 + $0x370] sm:$0xff]
        %v354 = vld [vmem:[%s233 + $0x378] sm:$0xff]
        %v355 = vld [vmem:[%s233 + $0x380] sm:$0xff]
        %v356 = vld [vmem:[%s233 + $0x388] sm:$0xff]
        %v357 = vld [vmem:[%s233 + $0x390] sm:$0xff]
        %v358 = vld [vmem:[%s233 + $0x398] sm:$0xff]
        %v359 = vld [vmem:[%s233 + $0x3a0] sm:$0xff]
        %v360 = vld [vmem:[%s233 + $0x3a8] sm:$0xff]
        %v361 = vld [vmem:[%s233 + $0x3b0] sm:$0xff]
        %v362 = vld [vmem:[%s233 + $0x3b8] sm:$0xff]
        %v363 = vld [vmem:[%s233 + $0x3c0] sm:$0xff]
        %v364 = vld [vmem:[%s233 + $0x3c8] sm:$0xff]
        %v365 = vld [vmem:[%s233 + $0x3d0] sm:$0xff]
        %v366 = vld [vmem:[%s233 + $0x3d8] sm:$0xff]
        %v367 = vld [vmem:[%s233 + $0x3e0] sm:$0xff]
        %v368 = vld [vmem:[%s233 + $0x3e8] sm:$0xff]
        %v369 = vld [vmem:[%s233 + $0x3f0] sm:$0xff]
        %v370 = vld [vmem:[%s233 + $0x3f8] sm:$0xff]
        %v371 = vld [vmem:[%s233 + $0x400] sm:$0xff]
        %v372 = vld [vmem:[%s233 + $0x408] sm:$0xff]
        %v373 = vld [vmem:[%s233 + $0x410] sm:$0xff]
        %v374 = vld [vmem:[%s233 + $0x418] sm:$0xff]
        %v375 = vld [vmem:[%s233 + $0x420] sm:$0xff]
        %v376 = vld [vmem:[%s233 + $0x428] sm:$0xff]
        %v377 = vld [vmem:[%s233 + $0x430] sm:$0xff]
        %v378 = vld [vmem:[%s233 + $0x438] sm:$0xff]
        %v379 = vld [vmem:[%s233 + $0x440] sm:$0xff]
        %v380 = vld [vmem:[%s233 + $0x448] sm:$0xff]
        %v381 = vld [vmem:[%s233 + $0x450] sm:$0xff]
        %v382 = vld [vmem:[%s233 + $0x458] sm:$0xff]
        %v383 = vld [vmem:[%s233 + $0x460] sm:$0xff]
        %v384 = vld [vmem:[%s233 + $0x468] sm:$0xff]
        %v385 = vld [vmem:[%s233 + $0x470] sm:$0xff]
        %v386 = vld [vmem:[%s233 + $0x478] sm:$0xff]
        %v387 = vld [vmem:[%s233 + $0x480] sm:$0xff]
        %v388 = vld [vmem:[%s233 + $0x488] sm:$0xff]
        %v389 = vld [vmem:[%s233 + $0x490] sm:$0xff]
        %v390 = vld [vmem:[%s233 + $0x498] sm:$0xff]
        %v391 = vld [vmem:[%s233 + $0x4a0] sm:$0xff]
        %v392 = vld [vmem:[%s233 + $0x4a8] sm:$0xff]
        %v393 = vld [vmem:[%s233 + $0x4b0] sm:$0xff]
        %v394 = vld [vmem:[%s233 + $0x4b8] sm:$0xff]
        %v395 = vld [vmem:[%s233 + $0x4c0] sm:$0xff]
        %v396 = vld [vmem:[%s233 + $0x4c8] sm:$0xff]
        %v397 = vld [vmem:[%s233 + $0x4d0] sm:$0xff]
        %v398 = vld [vmem:[%s233 + $0x4d8] sm:$0xff]
        %v399 = vld [vmem:[%s233 + $0x4e0] sm:$0xff]
        %v400 = vld [vmem:[%s233 + $0x4e8] sm:$0xff]
        %v401 = vld [vmem:[%s233 + $0x4f0] sm:$0xff]
        %v402 = vld [vmem:[%s233 + $0x4f8] sm:$0xff]
        %v404 = vcombine.high %v242, %v242
        %v406 = vunpack.c.l.s4 1966171168
        %v407 = vunpack.c.0.s8 %v406
        %v408 = vlaneseq
        %v409 = vshrl.u32 %v408, 7
        %v410 = vsub.s32 %v407, %v409
        %v411 = vrot.slane %v242, %v410
        %v413 = vunpack.c.l.s4 1966171168
        %v414 = vunpack.c.0.s8 %v413
        %v415 = vlaneseq
        %v416 = vshrl.u32 %v415, 7
        %v417 = vsub.s32 %v414, %v416
        %v418 = vrot.slane %v404, %v417
        %v419 = vcombine.high %v411, %v411
        %v421 = vunpack.c.l.s4 1966171168
        %v422 = vunpack.c.0.s8 %v421
        %v423 = vlaneseq
        %v424 = vshrl.u32 %v423, 7
        %v425 = vsub.s32 %v422, %v424
        %v426 = vrot.slane %v411, %v425
        %v428 = vunpack.c.l.s4 1966171168
        %v429 = vunpack.c.0.s8 %v428
        %v430 = vlaneseq
        %v431 = vshrl.u32 %v430, 7
        %v432 = vsub.s32 %v429, %v431
        %v433 = vrot.slane %v418, %v432
        %v435 = vunpack.c.l.s4 1966171168
        %v436 = vunpack.c.0.s8 %v435
        %v437 = vlaneseq
        %v438 = vshrl.u32 %v437, 7
        %v439 = vsub.s32 %v436, %v438
        %v440 = vrot.slane %v419, %v439
        %v441 = vcombine.high %v426, %v426
        %v442 = vcombine.high %v440, %v440
        %v608 = vunpack.c.l.b16 %v243
        %v609 = vunpack.c.h.b16 %v243
        %v610 = vunpack.c.l.b16 %v244
        %v611 = vunpack.c.h.b16 %v244
        %v612 = vunpack.c.l.b16 %v245
        %v613 = vunpack.c.h.b16 %v245
        %v614 = vunpack.c.l.b16 %v246
        %v615 = vunpack.c.h.b16 %v246
        %v616 = vunpack.c.l.b16 %v247
        %v617 = vunpack.c.h.b16 %v247
        %v618 = vunpack.c.l.b16 %v248
        %v619 = vunpack.c.h.b16 %v248
        %v620 = vunpack.c.l.b16 %v249
        %v621 = vunpack.c.h.b16 %v249
        %v622 = vunpack.c.l.b16 %v250
        %v623 = vunpack.c.h.b16 %v250
        %v624 = vunpack.c.l.b16 %v251
        %v625 = vunpack.c.h.b16 %v251
        %v626 = vunpack.c.l.b16 %v252
        %v627 = vunpack.c.h.b16 %v252
        %v628 = vunpack.c.l.b16 %v253
        %v629 = vunpack.c.h.b16 %v253
        %v630 = vunpack.c.l.b16 %v254
        %v631 = vunpack.c.h.b16 %v254
        %v632 = vunpack.c.l.b16 %v255
        %v633 = vunpack.c.h.b16 %v255
        %v634 = vunpack.c.l.b16 %v256
        %v635 = vunpack.c.h.b16 %v256
        %v636 = vunpack.c.l.b16 %v257
        %v637 = vunpack.c.h.b16 %v257
        %v638 = vunpack.c.l.b16 %v258
        %v639 = vunpack.c.h.b16 %v258
        %v640 = vunpack.c.l.b16 %v259
        %v641 = vunpack.c.h.b16 %v259
        %v642 = vunpack.c.l.b16 %v260
        %v643 = vunpack.c.h.b16 %v260
        %v644 = vunpack.c.l.b16 %v261
        %v645 = vunpack.c.h.b16 %v261
        %v646 = vunpack.c.l.b16 %v262
        %v647 = vunpack.c.h.b16 %v262
        %v648 = vunpack.c.l.b16 %v263
        %v649 = vunpack.c.h.b16 %v263
        %v650 = vunpack.c.l.b16 %v264
        %v651 = vunpack.c.h.b16 %v264
        %v652 = vunpack.c.l.b16 %v265
        %v653 = vunpack.c.h.b16 %v265
        %v654 = vunpack.c.l.b16 %v266
        %v655 = vunpack.c.h.b16 %v266
        %v656 = vunpack.c.l.b16 %v267
        %v657 = vunpack.c.h.b16 %v267
        %v658 = vunpack.c.l.b16 %v268
        %v659 = vunpack.c.h.b16 %v268
        %v660 = vunpack.c.l.b16 %v269
        %v661 = vunpack.c.h.b16 %v269
        %v662 = vunpack.c.l.b16 %v270
        %v663 = vunpack.c.h.b16 %v270
        %v664 = vunpack.c.l.b16 %v271
        %v665 = vunpack.c.h.b16 %v271
        %v666 = vunpack.c.l.b16 %v272
        %v667 = vunpack.c.h.b16 %v272
        %v668 = vunpack.c.l.b16 %v273
        %v669 = vunpack.c.h.b16 %v273
        %v670 = vunpack.c.l.b16 %v274
        %v671 = vunpack.c.h.b16 %v274
        %v672 = vunpack.c.l.b16 %v275
        %v673 = vunpack.c.h.b16 %v275
        %v674 = vunpack.c.l.b16 %v276
        %v675 = vunpack.c.h.b16 %v276
        %v676 = vunpack.c.l.b16 %v277
        %v677 = vunpack.c.h.b16 %v277
        %v678 = vunpack.c.l.b16 %v278
        %v679 = vunpack.c.h.b16 %v278
        %v680 = vunpack.c.l.b16 %v279
        %v681 = vunpack.c.h.b16 %v279
        %v682 = vunpack.c.l.b16 %v280
        %v683 = vunpack.c.h.b16 %v280
        %v684 = vunpack.c.l.b16 %v281
        %v685 = vunpack.c.h.b16 %v281
        %v686 = vunpack.c.l.b16 %v282
        %v687 = vunpack.c.h.b16 %v282
        %v688 = vunpack.c.l.b16 %v283
        %v689 = vunpack.c.h.b16 %v283
        %v690 = vunpack.c.l.b16 %v284
        %v691 = vunpack.c.h.b16 %v284
        %v692 = vunpack.c.l.b16 %v285
        %v693 = vunpack.c.h.b16 %v285
        %v694 = vunpack.c.l.b16 %v286
        %v695 = vunpack.c.h.b16 %v286
        %v696 = vunpack.c.l.b16 %v287
        %v697 = vunpack.c.h.b16 %v287
        %v698 = vunpack.c.l.b16 %v288
        %v699 = vunpack.c.h.b16 %v288
        %v700 = vunpack.c.l.b16 %v289
        %v701 = vunpack.c.h.b16 %v289
        %v702 = vunpack.c.l.b16 %v290
        %v703 = vunpack.c.h.b16 %v290
        %v704 = vunpack.c.l.b16 %v291
        %v705 = vunpack.c.h.b16 %v291
        %v706 = vunpack.c.l.b16 %v292
        %v707 = vunpack.c.h.b16 %v292
        %v708 = vunpack.c.l.b16 %v293
        %v709 = vunpack.c.h.b16 %v293
        %v710 = vunpack.c.l.b16 %v294
        %v711 = vunpack.c.h.b16 %v294
        %v712 = vunpack.c.l.b16 %v295
        %v713 = vunpack.c.h.b16 %v295
        %v714 = vunpack.c.l.b16 %v296
        %v715 = vunpack.c.h.b16 %v296
        %v716 = vunpack.c.l.b16 %v297
        %v717 = vunpack.c.h.b16 %v297
        %v718 = vunpack.c.l.b16 %v298
        %v719 = vunpack.c.h.b16 %v298
        %v720 = vunpack.c.l.b16 %v299
        %v721 = vunpack.c.h.b16 %v299
        %v722 = vunpack.c.l.b16 %v300
        %v723 = vunpack.c.h.b16 %v300
        %v724 = vunpack.c.l.b16 %v301
        %v725 = vunpack.c.h.b16 %v301
        %v726 = vunpack.c.l.b16 %v302
        %v727 = vunpack.c.h.b16 %v302
        %v728 = vunpack.c.l.b16 %v303
        %v729 = vunpack.c.h.b16 %v303
        %v730 = vunpack.c.l.b16 %v304
        %v731 = vunpack.c.h.b16 %v304
        %v732 = vunpack.c.l.b16 %v305
        %v733 = vunpack.c.h.b16 %v305
        %v734 = vunpack.c.l.b16 %v306
        %v735 = vunpack.c.h.b16 %v306
        %v736 = vunpack.c.l.b16 %v307
        %v737 = vunpack.c.h.b16 %v307
        %v738 = vunpack.c.l.b16 %v308
        %v739 = vunpack.c.h.b16 %v308
        %v740 = vunpack.c.l.b16 %v309
        %v741 = vunpack.c.h.b16 %v309
        %v742 = vunpack.c.l.b16 %v310
        %v743 = vunpack.c.h.b16 %v310
        %v744 = vunpack.c.l.b16 %v311
        %v745 = vunpack.c.h.b16 %v311
        %v746 = vunpack.c.l.b16 %v312
        %v747 = vunpack.c.h.b16 %v312
        %v748 = vunpack.c.l.b16 %v313
        %v749 = vunpack.c.h.b16 %v313
        %v750 = vunpack.c.l.b16 %v314
        %v751 = vunpack.c.h.b16 %v314
        %v752 = vunpack.c.l.b16 %v315
        %v753 = vunpack.c.h.b16 %v315
        %v754 = vunpack.c.l.b16 %v316
        %v755 = vunpack.c.h.b16 %v316
        %v756 = vunpack.c.l.b16 %v317
        %v757 = vunpack.c.h.b16 %v317
        %v758 = vunpack.c.l.b16 %v318
        %v759 = vunpack.c.h.b16 %v318
        %v760 = vunpack.c.l.b16 %v319
        %v761 = vunpack.c.h.b16 %v319
        %v762 = vunpack.c.l.b16 %v320
        %v763 = vunpack.c.h.b16 %v320
        %v764 = vunpack.c.l.b16 %v321
        %v765 = vunpack.c.h.b16 %v321
        %v766 = vunpack.c.l.b16 %v322
        %v767 = vunpack.c.h.b16 %v322
        %v768 = vunpack.c.l.b16 %v323
        %v769 = vunpack.c.h.b16 %v323
        %v770 = vunpack.c.l.b16 %v324
        %v771 = vunpack.c.h.b16 %v324
        %v772 = vunpack.c.l.b16 %v325
        %v773 = vunpack.c.h.b16 %v325
        %v774 = vunpack.c.l.b16 %v326
        %v775 = vunpack.c.h.b16 %v326
        %v776 = vunpack.c.l.b16 %v327
        %v777 = vunpack.c.h.b16 %v327
        %v778 = vunpack.c.l.b16 %v328
        %v779 = vunpack.c.h.b16 %v328
        %v780 = vunpack.c.l.b16 %v329
        %v781 = vunpack.c.h.b16 %v329
        %v782 = vunpack.c.l.b16 %v330
        %v783 = vunpack.c.h.b16 %v330
        %v784 = vunpack.c.l.b16 %v331
        %v785 = vunpack.c.h.b16 %v331
        %v786 = vunpack.c.l.b16 %v332
        %v787 = vunpack.c.h.b16 %v332
        %v788 = vunpack.c.l.b16 %v333
        %v789 = vunpack.c.h.b16 %v333
        %v790 = vunpack.c.l.b16 %v334
        %v791 = vunpack.c.h.b16 %v334
        %v792 = vunpack.c.l.b16 %v335
        %v793 = vunpack.c.h.b16 %v335
        %v794 = vunpack.c.l.b16 %v336
        %v795 = vunpack.c.h.b16 %v336
        %v796 = vunpack.c.l.b16 %v337
        %v797 = vunpack.c.h.b16 %v337
        %v798 = vunpack.c.l.b16 %v338
        %v799 = vunpack.c.h.b16 %v338
        %v800 = vunpack.c.l.b16 %v339
        %v801 = vunpack.c.h.b16 %v339
        %v802 = vunpack.c.l.b16 %v340
        %v803 = vunpack.c.h.b16 %v340
        %v804 = vunpack.c.l.b16 %v341
        %v805 = vunpack.c.h.b16 %v341
        %v806 = vunpack.c.l.b16 %v342
        %v807 = vunpack.c.h.b16 %v342
        %v808 = vunpack.c.l.b16 %v343
        %v809 = vunpack.c.h.b16 %v343
        %v810 = vunpack.c.l.b16 %v344
        %v811 = vunpack.c.h.b16 %v344
        %v812 = vunpack.c.l.b16 %v345
        %v813 = vunpack.c.h.b16 %v345
        %v814 = vunpack.c.l.b16 %v346
        %v815 = vunpack.c.h.b16 %v346
        %v816 = vunpack.c.l.b16 %v347
        %v817 = vunpack.c.h.b16 %v347
        %v818 = vunpack.c.l.b16 %v348
        %v819 = vunpack.c.h.b16 %v348
        %v820 = vunpack.c.l.b16 %v349
        %v821 = vunpack.c.h.b16 %v349
        %v822 = vunpack.c.l.b16 %v350
        %v823 = vunpack.c.h.b16 %v350
        %v824 = vunpack.c.l.b16 %v351
        %v825 = vunpack.c.h.b16 %v351
        %v826 = vunpack.c.l.b16 %v352
        %v827 = vunpack.c.h.b16 %v352
        %v828 = vunpack.c.l.b16 %v353
        %v829 = vunpack.c.h.b16 %v353
        %v830 = vunpack.c.l.b16 %v354
        %v831 = vunpack.c.h.b16 %v354
        %v832 = vunpack.c.l.b16 %v355
        %v833 = vunpack.c.h.b16 %v355
        %v834 = vunpack.c.l.b16 %v356
        %v835 = vunpack.c.h.b16 %v356
        %v836 = vunpack.c.l.b16 %v357
        %v837 = vunpack.c.h.b16 %v357
        %v838 = vunpack.c.l.b16 %v358
        %v839 = vunpack.c.h.b16 %v358
        %v840 = vunpack.c.l.b16 %v359
        %v841 = vunpack.c.h.b16 %v359
        %v842 = vunpack.c.l.b16 %v360
        %v843 = vunpack.c.h.b16 %v360
        %v844 = vunpack.c.l.b16 %v361
        %v845 = vunpack.c.h.b16 %v361
        %v846 = vunpack.c.l.b16 %v362
        %v847 = vunpack.c.h.b16 %v362
        %v848 = vunpack.c.l.b16 %v363
        %v849 = vunpack.c.h.b16 %v363
        %v850 = vunpack.c.l.b16 %v364
        %v851 = vunpack.c.h.b16 %v364
        %v852 = vunpack.c.l.b16 %v365
        %v853 = vunpack.c.h.b16 %v365
        %v854 = vunpack.c.l.b16 %v366
        %v855 = vunpack.c.h.b16 %v366
        %v856 = vunpack.c.l.b16 %v367
        %v857 = vunpack.c.h.b16 %v367
        %v858 = vunpack.c.l.b16 %v368
        %v859 = vunpack.c.h.b16 %v368
        %v860 = vunpack.c.l.b16 %v369
        %v861 = vunpack.c.h.b16 %v369
        %v862 = vunpack.c.l.b16 %v370
        %v863 = vunpack.c.h.b16 %v370
        %v864 = vunpack.c.l.b16 %v371
        %v865 = vunpack.c.h.b16 %v371
        %v866 = vunpack.c.l.b16 %v372
        %v867 = vunpack.c.h.b16 %v372
        %v868 = vunpack.c.l.b16 %v373
        %v869 = vunpack.c.h.b16 %v373
        %v870 = vunpack.c.l.b16 %v374
        %v871 = vunpack.c.h.b16 %v374
        %v872 = vunpack.c.l.b16 %v375
        %v873 = vunpack.c.h.b16 %v375
        %v874 = vunpack.c.l.b16 %v376
        %v875 = vunpack.c.h.b16 %v376
        %v876 = vunpack.c.l.b16 %v377
        %v877 = vunpack.c.h.b16 %v377
        %v878 = vunpack.c.l.b16 %v378
        %v879 = vunpack.c.h.b16 %v378
        %v880 = vunpack.c.l.b16 %v379
        %v881 = vunpack.c.h.b16 %v379
        %v882 = vunpack.c.l.b16 %v380
        %v883 = vunpack.c.h.b16 %v380
        %v884 = vunpack.c.l.b16 %v381
        %v885 = vunpack.c.h.b16 %v381
        %v886 = vunpack.c.l.b16 %v382
        %v887 = vunpack.c.h.b16 %v382
        %v888 = vunpack.c.l.b16 %v383
        %v889 = vunpack.c.h.b16 %v383
        %v890 = vunpack.c.l.b16 %v384
        %v891 = vunpack.c.h.b16 %v384
        %v892 = vunpack.c.l.b16 %v385
        %v893 = vunpack.c.h.b16 %v385
        %v894 = vunpack.c.l.b16 %v386
        %v895 = vunpack.c.h.b16 %v386
        %v896 = vunpack.c.l.b16 %v387
        %v897 = vunpack.c.h.b16 %v387
        %v898 = vunpack.c.l.b16 %v388
        %v899 = vunpack.c.h.b16 %v388
        %v900 = vunpack.c.l.b16 %v389
        %v901 = vunpack.c.h.b16 %v389
        %v902 = vunpack.c.l.b16 %v390
        %v903 = vunpack.c.h.b16 %v390
        %v904 = vunpack.c.l.b16 %v391
        %v905 = vunpack.c.h.b16 %v391
        %v906 = vunpack.c.l.b16 %v392
        %v907 = vunpack.c.h.b16 %v392
        %v908 = vunpack.c.l.b16 %v393
        %v909 = vunpack.c.h.b16 %v393
        %v910 = vunpack.c.l.b16 %v394
        %v911 = vunpack.c.h.b16 %v394
        %v912 = vunpack.c.l.b16 %v395
        %v913 = vunpack.c.h.b16 %v395
        %v914 = vunpack.c.l.b16 %v396
        %v915 = vunpack.c.h.b16 %v396
        %v916 = vunpack.c.l.b16 %v397
        %v917 = vunpack.c.h.b16 %v397
        %v918 = vunpack.c.l.b16 %v398
        %v919 = vunpack.c.h.b16 %v398
        %v920 = vunpack.c.l.b16 %v399
        %v921 = vunpack.c.h.b16 %v399
        %v922 = vunpack.c.l.b16 %v400
        %v923 = vunpack.c.h.b16 %v400
        %v924 = vunpack.c.l.b16 %v401
        %v925 = vunpack.c.h.b16 %v401
        %v926 = vunpack.c.l.b16 %v402
        %v927 = vunpack.c.h.b16 %v402
        %v928 = vpack.c.b16 %v612, %v608
        %v929 = vpack.c.b16 %v613, %v609
        %v930 = vpack.c.b16 %v614, %v610
        %v931 = vpack.c.b16 %v615, %v611
        %v932 = vpack.c.b16 %v620, %v616
        %v933 = vpack.c.b16 %v621, %v617
        %v934 = vpack.c.b16 %v622, %v618
        %v935 = vpack.c.b16 %v623, %v619
        %v936 = vpack.c.b16 %v628, %v624
        %v937 = vpack.c.b16 %v629, %v625
        %v938 = vpack.c.b16 %v630, %v626
        %v939 = vpack.c.b16 %v631, %v627
        %v940 = vpack.c.b16 %v636, %v632
        %v941 = vpack.c.b16 %v637, %v633
        %v942 = vpack.c.b16 %v638, %v634
        %v943 = vpack.c.b16 %v639, %v635
        %v944 = vpack.c.b16 %v644, %v640
        %v945 = vpack.c.b16 %v645, %v641
        %v946 = vpack.c.b16 %v646, %v642
        %v947 = vpack.c.b16 %v647, %v643
        %v948 = vpack.c.b16 %v652, %v648
        %v949 = vpack.c.b16 %v653, %v649
        %v950 = vpack.c.b16 %v654, %v650
        %v951 = vpack.c.b16 %v655, %v651
        %v952 = vpack.c.b16 %v660, %v656
        %v953 = vpack.c.b16 %v661, %v657
        %v954 = vpack.c.b16 %v662, %v658
        %v955 = vpack.c.b16 %v663, %v659
        %v956 = vpack.c.b16 %v668, %v664
        %v957 = vpack.c.b16 %v669, %v665
        %v958 = vpack.c.b16 %v670, %v666
        %v959 = vpack.c.b16 %v671, %v667
        %v960 = vpack.c.b16 %v676, %v672
        %v961 = vpack.c.b16 %v677, %v673
        %v962 = vpack.c.b16 %v678, %v674
        %v963 = vpack.c.b16 %v679, %v675
        %v964 = vpack.c.b16 %v684, %v680
        %v965 = vpack.c.b16 %v685, %v681
        %v966 = vpack.c.b16 %v686, %v682
        %v967 = vpack.c.b16 %v687, %v683
        %v968 = vpack.c.b16 %v692, %v688
        %v969 = vpack.c.b16 %v693, %v689
        %v970 = vpack.c.b16 %v694, %v690
        %v971 = vpack.c.b16 %v695, %v691
        %v972 = vpack.c.b16 %v700, %v696
        %v973 = vpack.c.b16 %v701, %v697
        %v974 = vpack.c.b16 %v702, %v698
        %v975 = vpack.c.b16 %v703, %v699
        %v976 = vpack.c.b16 %v708, %v704
        %v977 = vpack.c.b16 %v709, %v705
        %v978 = vpack.c.b16 %v710, %v706
        %v979 = vpack.c.b16 %v711, %v707
        %v980 = vpack.c.b16 %v716, %v712
        %v981 = vpack.c.b16 %v717, %v713
        %v982 = vpack.c.b16 %v718, %v714
        %v983 = vpack.c.b16 %v719, %v715
        %v984 = vpack.c.b16 %v724, %v720
        %v985 = vpack.c.b16 %v725, %v721
        %v986 = vpack.c.b16 %v726, %v722
        %v987 = vpack.c.b16 %v727, %v723
        %v988 = vpack.c.b16 %v732, %v728
        %v989 = vpack.c.b16 %v733, %v729
        %v990 = vpack.c.b16 %v734, %v730
        %v991 = vpack.c.b16 %v735, %v731
        %v992 = vpack.c.b16 %v740, %v736
        %v993 = vpack.c.b16 %v741, %v737
        %v994 = vpack.c.b16 %v742, %v738
        %v995 = vpack.c.b16 %v743, %v739
        %v996 = vpack.c.b16 %v748, %v744
        %v997 = vpack.c.b16 %v749, %v745
        %v998 = vpack.c.b16 %v750, %v746
        %v999 = vpack.c.b16 %v751, %v747
        %v1000 = vpack.c.b16 %v756, %v752
        %v1001 = vpack.c.b16 %v757, %v753
        %v1002 = vpack.c.b16 %v758, %v754
        %v1003 = vpack.c.b16 %v759, %v755
        %v1004 = vpack.c.b16 %v764, %v760
        %v1005 = vpack.c.b16 %v765, %v761
        %v1006 = vpack.c.b16 %v766, %v762
        %v1007 = vpack.c.b16 %v767, %v763
        %v1008 = vpack.c.b16 %v772, %v768
        %v1009 = vpack.c.b16 %v773, %v769
        %v1010 = vpack.c.b16 %v774, %v770
        %v1011 = vpack.c.b16 %v775, %v771
        %v1012 = vpack.c.b16 %v780, %v776
        %v1013 = vpack.c.b16 %v781, %v777
        %v1014 = vpack.c.b16 %v782, %v778
        %v1015 = vpack.c.b16 %v783, %v779
        %v1016 = vpack.c.b16 %v788, %v784
        %v1017 = vpack.c.b16 %v789, %v785
        %v1018 = vpack.c.b16 %v790, %v786
        %v1019 = vpack.c.b16 %v791, %v787
        %v1020 = vpack.c.b16 %v796, %v792
        %v1021 = vpack.c.b16 %v797, %v793
        %v1022 = vpack.c.b16 %v798, %v794
        %v1023 = vpack.c.b16 %v799, %v795
        %v1024 = vpack.c.b16 %v804, %v800
        %v1025 = vpack.c.b16 %v805, %v801
        %v1026 = vpack.c.b16 %v806, %v802
        %v1027 = vpack.c.b16 %v807, %v803
        %v1028 = vpack.c.b16 %v812, %v808
        %v1029 = vpack.c.b16 %v813, %v809
        %v1030 = vpack.c.b16 %v814, %v810
        %v1031 = vpack.c.b16 %v815, %v811
        %v1032 = vpack.c.b16 %v820, %v816
        %v1033 = vpack.c.b16 %v821, %v817
        %v1034 = vpack.c.b16 %v822, %v818
        %v1035 = vpack.c.b16 %v823, %v819
        %v1036 = vpack.c.b16 %v828, %v824
        %v1037 = vpack.c.b16 %v829, %v825
        %v1038 = vpack.c.b16 %v830, %v826
        %v1039 = vpack.c.b16 %v831, %v827
        %v1040 = vpack.c.b16 %v836, %v832
        %v1041 = vpack.c.b16 %v837, %v833
        %v1042 = vpack.c.b16 %v838, %v834
        %v1043 = vpack.c.b16 %v839, %v835
        %v1044 = vpack.c.b16 %v844, %v840
        %v1045 = vpack.c.b16 %v845, %v841
        %v1046 = vpack.c.b16 %v846, %v842
        %v1047 = vpack.c.b16 %v847, %v843
        %v1048 = vpack.c.b16 %v852, %v848
        %v1049 = vpack.c.b16 %v853, %v849
        %v1050 = vpack.c.b16 %v854, %v850
        %v1051 = vpack.c.b16 %v855, %v851
        %v1052 = vpack.c.b16 %v860, %v856
        %v1053 = vpack.c.b16 %v861, %v857
        %v1054 = vpack.c.b16 %v862, %v858
        %v1055 = vpack.c.b16 %v863, %v859
        %v1056 = vpack.c.b16 %v868, %v864
        %v1057 = vpack.c.b16 %v869, %v865
        %v1058 = vpack.c.b16 %v870, %v866
        %v1059 = vpack.c.b16 %v871, %v867
        %v1060 = vpack.c.b16 %v876, %v872
        %v1061 = vpack.c.b16 %v877, %v873
        %v1062 = vpack.c.b16 %v878, %v874
        %v1063 = vpack.c.b16 %v879, %v875
        %v1064 = vpack.c.b16 %v884, %v880
        %v1065 = vpack.c.b16 %v885, %v881
        %v1066 = vpack.c.b16 %v886, %v882
        %v1067 = vpack.c.b16 %v887, %v883
        %v1068 = vpack.c.b16 %v892, %v888
        %v1069 = vpack.c.b16 %v893, %v889
        %v1070 = vpack.c.b16 %v894, %v890
        %v1071 = vpack.c.b16 %v895, %v891
        %v1072 = vpack.c.b16 %v900, %v896
        %v1073 = vpack.c.b16 %v901, %v897
        %v1074 = vpack.c.b16 %v902, %v898
        %v1075 = vpack.c.b16 %v903, %v899
        %v1076 = vpack.c.b16 %v908, %v904
        %v1077 = vpack.c.b16 %v909, %v905
        %v1078 = vpack.c.b16 %v910, %v906
        %v1079 = vpack.c.b16 %v911, %v907
        %v1080 = vpack.c.b16 %v916, %v912
        %v1081 = vpack.c.b16 %v917, %v913
        %v1082 = vpack.c.b16 %v918, %v914
        %v1083 = vpack.c.b16 %v919, %v915
        %v1084 = vpack.c.b16 %v924, %v920
        %v1085 = vpack.c.b16 %v925, %v921
        %v1086 = vpack.c.b16 %v926, %v922
        %v1087 = vpack.c.b16 %v927, %v923
        %1248 = vmatprep.subr.bf16.mxu0 %v929
        %1249 = vmatpush1.bf16.msra.mxu0 %v928
        %1250 = vmatprep.subr.bf16.mxu0 %v933
        %1251 = vmatpush1.bf16.msra.mxu0 %v932
        %1252 = vmatprep.subr.bf16.mxu0 %v937
        %1253 = vmatpush1.bf16.msra.mxu0 %v936
        %1254 = vmatprep.subr.bf16.mxu0 %v941
        %1255 = vmatpush1.bf16.msra.mxu0 %v940
        %1256 = vmatprep.subr.bf16.mxu0 %v945
        %1257 = vmatpush1.bf16.msra.mxu0 %v944
        %1258 = vmatprep.subr.bf16.mxu0 %v949
        %1259 = vmatpush1.bf16.msra.mxu0 %v948
        %1260 = vmatprep.subr.bf16.mxu0 %v953
        %1261 = vmatpush1.bf16.msra.mxu0 %v952
        %1262 = vmatprep.subr.bf16.mxu0 %v957
        %1263 = vmatpush1.bf16.msra.mxu0 %v956
        %1264 = vmatprep.subr.bf16.mxu0 %v961
        %1265 = vmatpush1.bf16.msra.mxu0 %v960
        %1266 = vmatprep.subr.bf16.mxu0 %v965
        %1267 = vmatpush1.bf16.msra.mxu0 %v964
        %1268 = vmatprep.subr.bf16.mxu0 %v969
        %1269 = vmatpush1.bf16.msra.mxu0 %v968
        %1270 = vmatprep.subr.bf16.mxu0 %v973
        %1271 = vmatpush1.bf16.msra.mxu0 %v972
        %1272 = vmatprep.subr.bf16.mxu0 %v977
        %1273 = vmatpush1.bf16.msra.mxu0 %v976
        %1274 = vmatprep.subr.bf16.mxu0 %v981
        %1275 = vmatpush1.bf16.msra.mxu0 %v980
        %1276 = vmatprep.subr.bf16.mxu0 %v985
        %1277 = vmatpush1.bf16.msra.mxu0 %v984
        %1278 = vmatprep.subr.bf16.mxu0 %v989
        %1279 = vmatpush1.bf16.msra.mxu0 %v988
        %1280 = vmatprep.mubr.bf16.mxu0 %v440
        %1281 = vmatmul.mubr.bf16.gmra.mrb[0].mxu0 %v426
        %v1282 = vpop.f32.mrb[0].mxu0
        %v1283 = vadd.f32 0.0, %v1282
        %v1284 = vpop.f32.mrb[0].mxu0
        %v1285 = vadd.f32 0.0, %v1284
        %v1286 = vpop.f32.mrb[0].mxu0
        %v1287 = vpop.f32.mrb[0].mxu0
        %1288 = vdwg.mxu0
        %1289 = vmatprep.subr.bf16.mxu0 %v993
        %1290 = vmatpush1.bf16.msra.mxu0 %v992
        %1291 = vmatprep.subr.bf16.mxu0 %v997
        %1292 = vmatpush1.bf16.msra.mxu0 %v996
        %1293 = vmatprep.subr.bf16.mxu0 %v1001
        %1294 = vmatpush1.bf16.msra.mxu0 %v1000
        %1295 = vmatprep.subr.bf16.mxu0 %v1005
        %1296 = vmatpush1.bf16.msra.mxu0 %v1004
        %1297 = vmatprep.subr.bf16.mxu0 %v1009
        %1298 = vmatpush1.bf16.msra.mxu0 %v1008
        %1299 = vmatprep.subr.bf16.mxu0 %v1013
        %1300 = vmatpush1.bf16.msra.mxu0 %v1012
        %1301 = vmatprep.subr.bf16.mxu0 %v1017
        %1302 = vmatpush1.bf16.msra.mxu0 %v1016
        %1303 = vmatprep.subr.bf16.mxu0 %v1021
        %1304 = vmatpush1.bf16.msra.mxu0 %v1020
        %1305 = vmatprep.subr.bf16.mxu0 %v1025
        %1306 = vmatpush1.bf16.msra.mxu0 %v1024
        %1307 = vmatprep.subr.bf16.mxu0 %v1029
        %1308 = vmatpush1.bf16.msra.mxu0 %v1028
        %1309 = vmatprep.subr.bf16.mxu0 %v1033
        %1310 = vmatpush1.bf16.msra.mxu0 %v1032
        %1311 = vmatprep.subr.bf16.mxu0 %v1037
        %1312 = vmatpush1.bf16.msra.mxu0 %v1036
        %1313 = vmatprep.subr.bf16.mxu0 %v1041
        %1314 = vmatpush1.bf16.msra.mxu0 %v1040
        %1315 = vmatprep.subr.bf16.mxu0 %v1045
        %1316 = vmatpush1.bf16.msra.mxu0 %v1044
        %1317 = vmatprep.subr.bf16.mxu0 %v1049
        %1318 = vmatpush1.bf16.msra.mxu0 %v1048
        %1319 = vmatprep.subr.bf16.mxu0 %v1053
        %1320 = vmatpush1.bf16.msra.mxu0 %v1052
        %1321 = vmatprep.mubr.bf16.mxu0 %v442
        %1322 = vmatmul.mubr.bf16.gmra.mrb[0].mxu0 %v441
        %v1323 = vpop.f32.mrb[0].mxu0
        %v1324 = vadd.f32 %v1283, %v1323
        %v1325 = vpop.f32.mrb[0].mxu0
        %v1326 = vadd.f32 %v1285, %v1325
        %v1327 = vpop.f32.mrb[0].mxu0
        %v1328 = vpop.f32.mrb[0].mxu0
        %1329 = vdwg.mxu0
        %1330 = vmatprep.subr.bf16.mxu0 %v1057
        %1331 = vmatpush1.bf16.msra.mxu0 %v1056
        %1332 = vmatprep.subr.bf16.mxu0 %v1061
        %1333 = vmatpush1.bf16.msra.mxu0 %v1060
        %1334 = vmatprep.subr.bf16.mxu0 %v1065
        %1335 = vmatpush1.bf16.msra.mxu0 %v1064
        %1336 = vmatprep.subr.bf16.mxu0 %v1069
        %1337 = vmatpush1.bf16.msra.mxu0 %v1068
        %1338 = vmatprep.subr.bf16.mxu0 %v1073
        %1339 = vmatpush1.bf16.msra.mxu0 %v1072
        %1340 = vmatprep.subr.bf16.mxu0 %v1077
        %1341 = vmatpush1.bf16.msra.mxu0 %v1076
        %1342 = vmatprep.subr.bf16.mxu0 %v1081
        %1343 = vmatpush1.bf16.msra.mxu0 %v1080
        %1344 = vmatprep.subr.bf16.mxu0 %v1085
        %1345 = vmatpush1.bf16.msra.mxu0 %v1084
        %1346 = vmatprep.subr.bf16.mxu0 0
        %1347 = vmatpush1.bf16.msra.mxu0 0
        %1348 = vmatprep.subr.bf16.mxu0 0
        %1349 = vmatpush1.bf16.msra.mxu0 0
        %1350 = vmatprep.subr.bf16.mxu0 0
        %1351 = vmatpush1.bf16.msra.mxu0 0
        %1352 = vmatprep.subr.bf16.mxu0 0
        %1353 = vmatpush1.bf16.msra.mxu0 0
        %1354 = vmatprep.subr.bf16.mxu0 0
        %1355 = vmatpush1.bf16.msra.mxu0 0
        %1356 = vmatprep.subr.bf16.mxu0 0
        %1357 = vmatpush1.bf16.msra.mxu0 0
        %1358 = vmatprep.subr.bf16.mxu0 0
        %1359 = vmatpush1.bf16.msra.mxu0 0
        %1360 = vmatprep.subr.bf16.mxu0 0
        %1361 = vmatpush1.bf16.msra.mxu0 0
        %1362 = vmatprep.mubr.bf16.mxu0 0
        %1363 = vmatmul.mubr.bf16.gmra.mrb[0].mxu0 %v433
        %v1364 = vpop.f32.mrb[0].mxu0
        %v1365 = vadd.f32 %v1324, %v1364
        %v1366 = vpop.f32.mrb[0].mxu0
        %v1367 = vadd.f32 %v1326, %v1366
        %v1368 = vpop.f32.mrb[0].mxu0
        %v1369 = vpop.f32.mrb[0].mxu0
        %1370 = vdwg.mxu0
        %1371 = vmatprep.subr.bf16.mxu0 %v931
        %1372 = vmatpush1.bf16.msra.mxu0 %v930
        %1373 = vmatprep.subr.bf16.mxu0 %v935
        %1374 = vmatpush1.bf16.msra.mxu0 %v934
        %1375 = vmatprep.subr.bf16.mxu0 %v939
        %1376 = vmatpush1.bf16.msra.mxu0 %v938
        %1377 = vmatprep.subr.bf16.mxu0 %v943
        %1378 = vmatpush1.bf16.msra.mxu0 %v942
        %1379 = vmatprep.subr.bf16.mxu0 %v947
        %1380 = vmatpush1.bf16.msra.mxu0 %v946
        %1381 = vmatprep.subr.bf16.mxu0 %v951
        %1382 = vmatpush1.bf16.msra.mxu0 %v950
        %1383 = vmatprep.subr.bf16.mxu0 %v955
        %1384 = vmatpush1.bf16.msra.mxu0 %v954
        %1385 = vmatprep.subr.bf16.mxu0 %v959
        %1386 = vmatpush1.bf16.msra.mxu0 %v958
        %1387 = vmatprep.subr.bf16.mxu0 %v963
        %1388 = vmatpush1.bf16.msra.mxu0 %v962
        %1389 = vmatprep.subr.bf16.mxu0 %v967
        %1390 = vmatpush1.bf16.msra.mxu0 %v966
        %1391 = vmatprep.subr.bf16.mxu0 %v971
        %1392 = vmatpush1.bf16.msra.mxu0 %v970
        %1393 = vmatprep.subr.bf16.mxu0 %v975
        %1394 = vmatpush1.bf16.msra.mxu0 %v974
        %1395 = vmatprep.subr.bf16.mxu0 %v979
        %1396 = vmatpush1.bf16.msra.mxu0 %v978
        %1397 = vmatprep.subr.bf16.mxu0 %v983
        %1398 = vmatpush1.bf16.msra.mxu0 %v982
        %1399 = vmatprep.subr.bf16.mxu0 %v987
        %1400 = vmatpush1.bf16.msra.mxu0 %v986
        %1401 = vmatprep.subr.bf16.mxu0 %v991
        %1402 = vmatpush1.bf16.msra.mxu0 %v990
        %1403 = vmatprep.mubr.bf16.mxu0 %v440
        %1404 = vmatmul.mubr.bf16.gmra.mrb[0].mxu0 %v426
        %v1405 = vpop.f32.mrb[0].mxu0
        %v1406 = vadd.f32 0.0, %v1405
        %v1407 = vpop.f32.mrb[0].mxu0
        %v1408 = vadd.f32 0.0, %v1407
        %v1409 = vpop.f32.mrb[0].mxu0
        %v1410 = vpop.f32.mrb[0].mxu0
        %1411 = vdwg.mxu0
        %1412 = vmatprep.subr.bf16.mxu0 %v995
        %1413 = vmatpush1.bf16.msra.mxu0 %v994
        %1414 = vmatprep.subr.bf16.mxu0 %v999
        %1415 = vmatpush1.bf16.msra.mxu0 %v998
        %1416 = vmatprep.subr.bf16.mxu0 %v1003
        %1417 = vmatpush1.bf16.msra.mxu0 %v1002
        %1418 = vmatprep.subr.bf16.mxu0 %v1007
        %1419 = vmatpush1.bf16.msra.mxu0 %v1006
        %1420 = vmatprep.subr.bf16.mxu0 %v1011
        %1421 = vmatpush1.bf16.msra.mxu0 %v1010
        %1422 = vmatprep.subr.bf16.mxu0 %v1015
        %1423 = vmatpush1.bf16.msra.mxu0 %v1014
        %1424 = vmatprep.subr.bf16.mxu0 %v1019
        %1425 = vmatpush1.bf16.msra.mxu0 %v1018
        %1426 = vmatprep.subr.bf16.mxu0 %v1023
        %1427 = vmatpush1.bf16.msra.mxu0 %v1022
        %1428 = vmatprep.subr.bf16.mxu0 %v1027
        %1429 = vmatpush1.bf16.msra.mxu0 %v1026
        %1430 = vmatprep.subr.bf16.mxu0 %v1031
        %1431 = vmatpush1.bf16.msra.mxu0 %v1030
        %1432 = vmatprep.subr.bf16.mxu0 %v1035
        %1433 = vmatpush1.bf16.msra.mxu0 %v1034
        %1434 = vmatprep.subr.bf16.mxu0 %v1039
        %1435 = vmatpush1.bf16.msra.mxu0 %v1038
        %1436 = vmatprep.subr.bf16.mxu0 %v1043
        %1437 = vmatpush1.bf16.msra.mxu0 %v1042
        %1438 = vmatprep.subr.bf16.mxu0 %v1047
        %1439 = vmatpush1.bf16.msra.mxu0 %v1046
        %1440 = vmatprep.subr.bf16.mxu0 %v1051
        %1441 = vmatpush1.bf16.msra.mxu0 %v1050
        %1442 = vmatprep.subr.bf16.mxu0 %v1055
        %1443 = vmatpush1.bf16.msra.mxu0 %v1054
        %1444 = vmatprep.mubr.bf16.mxu0 %v442
        %1445 = vmatmul.mubr.bf16.gmra.mrb[0].mxu0 %v441
        %v1446 = vpop.f32.mrb[0].mxu0
        %v1447 = vadd.f32 %v1406, %v1446
        %v1448 = vpop.f32.mrb[0].mxu0
        %v1449 = vadd.f32 %v1408, %v1448
        %v1450 = vpop.f32.mrb[0].mxu0
        %v1451 = vpop.f32.mrb[0].mxu0
        %1452 = vdwg.mxu0
        %1453 = vmatprep.subr.bf16.mxu0 %v1059
        %1454 = vmatpush1.bf16.msra.mxu0 %v1058
        %1455 = vmatprep.subr.bf16.mxu0 %v1063
        %1456 = vmatpush1.bf16.msra.mxu0 %v1062
        %1457 = vmatprep.subr.bf16.mxu0 %v1067
        %1458 = vmatpush1.bf16.msra.mxu0 %v1066
        %1459 = vmatprep.subr.bf16.mxu0 %v1071
        %1460 = vmatpush1.bf16.msra.mxu0 %v1070
        %1461 = vmatprep.subr.bf16.mxu0 %v1075
        %1462 = vmatpush1.bf16.msra.mxu0 %v1074
        %1463 = vmatprep.subr.bf16.mxu0 %v1079
        %1464 = vmatpush1.bf16.msra.mxu0 %v1078
        %1465 = vmatprep.subr.bf16.mxu0 %v1083
        %1466 = vmatpush1.bf16.msra.mxu0 %v1082
        %1467 = vmatprep.subr.bf16.mxu0 %v1087
        %1468 = vmatpush1.bf16.msra.mxu0 %v1086
        %1469 = vmatprep.subr.bf16.mxu0 0
        %1470 = vmatpush1.bf16.msra.mxu0 0
        %1471 = vmatprep.subr.bf16.mxu0 0
        %1472 = vmatpush1.bf16.msra.mxu0 0
        %1473 = vmatprep.subr.bf16.mxu0 0
        %1474 = vmatpush1.bf16.msra.mxu0 0
        %1475 = vmatprep.subr.bf16.mxu0 0
        %1476 = vmatpush1.bf16.msra.mxu0 0
        %1477 = vmatprep.subr.bf16.mxu0 0
        %1478 = vmatpush1.bf16.msra.mxu0 0
        %1479 = vmatprep.subr.bf16.mxu0 0
        %1480 = vmatpush1.bf16.msra.mxu0 0
        %1481 = vmatprep.subr.bf16.mxu0 0
        %1482 = vmatpush1.bf16.msra.mxu0 0
        %1483 = vmatprep.subr.bf16.mxu0 0
        %1484 = vmatpush1.bf16.msra.mxu0 0
        %1485 = vmatprep.mubr.bf16.mxu0 0
        %1486 = vmatmul.mubr.bf16.gmra.mrb[0].mxu0 %v433
        %v1487 = vpop.f32.mrb[0].mxu0
        %v1488 = vadd.f32 %v1447, %v1487
        %v1489 = vpop.f32.mrb[0].mxu0
        %v1490 = vadd.f32 %v1449, %v1489
        %v1491 = vpop.f32.mrb[0].mxu0
        %v1492 = vpop.f32.mrb[0].mxu0
        %1493 = vdwg.mxu0
        %v1498 = vcombine.low %v1365, %v1367
        %v1499 = vcombine.low %v1488, %v1490
        %v1501 = vunpack.c.l.s4 1983009808
        %v1502 = vunpack.c.0.s8 %v1501
        %v1503 = vlaneseq
        %v1504 = vshrl.u32 %v1503, 7
        %v1505 = vsub.s32 %v1502, %v1504
        %v1506 = vrot.slane %v1498, %v1505
        %v1508 = vunpack.c.l.s4 1983009808
        %v1509 = vunpack.c.0.s8 %v1508
        %v1510 = vlaneseq
        %v1511 = vshrl.u32 %v1510, 7
        %v1512 = vsub.s32 %v1509, %v1511
        %v1513 = vrot.slane %v1499, %v1512
        %v1514 = vcombine.low %v1506, %v1513
        %v1516 = vadd.f32 %v241, %v1514
        %1517 = vst [vmem:[#allocation2] sm:$0xff] %v1516
        %p1518 = scmp.eq.s32.totalorder %s17, 4
        // Predicated region
        $region45: #{dqn_forward.7} parent=39 // pred_check
          %p1519 = pneg %p1518
        $region46: #{dqn_forward.7} parent=39 // pred_check_branch
          %1521 = sbr.rel (%p1519) target = $region48
        $region47: #{dqn_forward.7} parent=39 // pred_region
          %v1522 = vld [vmem:[#allocation2] sm:$0xff]
          %v1523 = vld [vmem:[%s2] sm:$0xf]
          %v1525 = vlaneseq
          %v1526 = vshrl.u32 %v1525, 7
          %v1527 = vsub.s32 0, %v1526
          %v1528 = vrot.slane %v1523, %v1527
          %v1529 = vlaneseq
          %v1530 = vshrl.u32 %v1529, 7
          %v1531 = vsub.s32 1, %v1530
          %v1532 = vrot.slane %v1523, %v1531
          %v1533 = vlaneseq
          %v1534 = vshrl.u32 %v1533, 7
          %v1535 = vsub.s32 2, %v1534
          %v1536 = vrot.slane %v1523, %v1535
          %v1537 = vlaneseq
          %v1538 = vshrl.u32 %v1537, 7
          %v1539 = vsub.s32 3, %v1538
          %v1540 = vrot.slane %v1523, %v1539
          %v1541 = vcombine.low %v1528, %v1532
          %v1542 = vcombine.low %v1536, %v1540
          %v1544 = vunpack.c.l.s4 1983009808
          %v1545 = vunpack.c.0.s8 %v1544
          %v1546 = vlaneseq
          %v1547 = vshrl.u32 %v1546, 7
          %v1548 = vsub.s32 %v1545, %v1547
          %v1549 = vrot.slane %v1541, %v1548
          %v1551 = vunpack.c.l.s4 1983009808
          %v1552 = vunpack.c.0.s8 %v1551
          %v1553 = vlaneseq
          %v1554 = vshrl.u32 %v1553, 7
          %v1555 = vsub.s32 %v1552, %v1554
          %v1556 = vrot.slane %v1542, %v1555
          %v1557 = vcombine.low %v1549, %v1556
          %v1559 = vadd.f32 %v1522, %v1557
          %v1560 = vmax.f32 %v1559, 0.0
          %v1562 = vcombine.high %v1560, %v1560
          %v1564 = vunpack.c.l.s4 1983009808
          %v1565 = vunpack.c.0.s8 %v1564
          %v1566 = vlaneseq
          %v1567 = vshrl.u32 %v1566, 7
          %v1568 = vsub.s32 %v1565, %v1567
          %v1569 = vrot.slane %v1560, %v1568
          %v1571 = vunpack.c.l.s4 1983009808
          %v1572 = vunpack.c.0.s8 %v1571
          %v1573 = vlaneseq
          %v1574 = vshrl.u32 %v1573, 7
          %v1575 = vsub.s32 %v1572, %v1574
          %v1576 = vrot.slane %v1562, %v1575
          %v1577 = vcombine.high %v1569, %v1569
          %v1578 = vcombine.high %v1576, %v1576
          %v1583 = vpack.c.bf16 %v1569, %v1569
          %v1584 = vpack.c.bf16 %v1577, %v1577
          %v1585 = vpack.c.bf16 %v1576, %v1576
          %v1586 = vpack.c.bf16 %v1578, %v1578
          %v1587 = vld [vmem:[%s3] sm:$0xf]
          %v1588 = vld [vmem:[%s3 + $0x4] sm:$0xf]
          %v1589 = vld [vmem:[%s3 + $0x8] sm:$0xf]
          %v1590 = vld [vmem:[%s3 + $0xc] sm:$0xf]
          %v1591 = vld [vmem:[%s3 + $0x10] sm:$0xf]
          %v1592 = vld [vmem:[%s3 + $0x14] sm:$0xf]
          %v1593 = vld [vmem:[%s3 + $0x18] sm:$0xf]
          %v1594 = vld [vmem:[%s3 + $0x1c] sm:$0xf]
          %v1595 = vld [vmem:[%s3 + $0x20] sm:$0xf]
          %v1596 = vld [vmem:[%s3 + $0x24] sm:$0xf]
          %v1597 = vld [vmem:[%s3 + $0x28] sm:$0xf]
          %v1598 = vld [vmem:[%s3 + $0x2c] sm:$0xf]
          %v1599 = vld [vmem:[%s3 + $0x30] sm:$0xf]
          %v1600 = vld [vmem:[%s3 + $0x34] sm:$0xf]
          %v1601 = vld [vmem:[%s3 + $0x38] sm:$0xf]
          %v1602 = vld [vmem:[%s3 + $0x3c] sm:$0xf]
          %v1603 = vld [vmem:[%s3 + $0x40] sm:$0xf]
          %v1604 = vld [vmem:[%s3 + $0x44] sm:$0xf]
          %v1605 = vld [vmem:[%s3 + $0x48] sm:$0xf]
          %v1606 = vld [vmem:[%s3 + $0x4c] sm:$0xf]
          %v1607 = vld [vmem:[%s3 + $0x50] sm:$0xf]
          %v1608 = vld [vmem:[%s3 + $0x54] sm:$0xf]
          %v1609 = vld [vmem:[%s3 + $0x58] sm:$0xf]
          %v1610 = vld [vmem:[%s3 + $0x5c] sm:$0xf]
          %v1611 = vld [vmem:[%s3 + $0x60] sm:$0xf]
          %v1612 = vld [vmem:[%s3 + $0x64] sm:$0xf]
          %v1613 = vld [vmem:[%s3 + $0x68] sm:$0xf]
          %v1614 = vld [vmem:[%s3 + $0x6c] sm:$0xf]
          %v1615 = vld [vmem:[%s3 + $0x70] sm:$0xf]
          %v1616 = vld [vmem:[%s3 + $0x74] sm:$0xf]
          %v1617 = vld [vmem:[%s3 + $0x78] sm:$0xf]
          %v1618 = vld [vmem:[%s3 + $0x7c] sm:$0xf]
          %v1619 = vld [vmem:[%s3 + $0x80] sm:$0xf]
          %v1620 = vld [vmem:[%s3 + $0x84] sm:$0xf]
          %v1621 = vld [vmem:[%s3 + $0x88] sm:$0xf]
          %v1622 = vld [vmem:[%s3 + $0x8c] sm:$0xf]
          %v1623 = vld [vmem:[%s3 + $0x90] sm:$0xf]
          %v1624 = vld [vmem:[%s3 + $0x94] sm:$0xf]
          %v1625 = vld [vmem:[%s3 + $0x98] sm:$0xf]
          %v1626 = vld [vmem:[%s3 + $0x9c] sm:$0xf]
          %v1627 = vld [vmem:[%s3 + $0xa0] sm:$0xf]
          %v1628 = vld [vmem:[%s3 + $0xa4] sm:$0xf]
          %v1629 = vld [vmem:[%s3 + $0xa8] sm:$0xf]
          %v1630 = vld [vmem:[%s3 + $0xac] sm:$0xf]
          %v1631 = vld [vmem:[%s3 + $0xb0] sm:$0xf]
          %v1632 = vld [vmem:[%s3 + $0xb4] sm:$0xf]
          %v1633 = vld [vmem:[%s3 + $0xb8] sm:$0xf]
          %v1634 = vld [vmem:[%s3 + $0xbc] sm:$0xf]
          %v1635 = vld [vmem:[%s3 + $0xc0] sm:$0xf]
          %v1636 = vld [vmem:[%s3 + $0xc4] sm:$0xf]
          %v1637 = vld [vmem:[%s3 + $0xc8] sm:$0xf]
          %v1638 = vld [vmem:[%s3 + $0xcc] sm:$0xf]
          %v1639 = vld [vmem:[%s3 + $0xd0] sm:$0xf]
          %v1640 = vld [vmem:[%s3 + $0xd4] sm:$0xf]
          %v1641 = vld [vmem:[%s3 + $0xd8] sm:$0xf]
          %v1642 = vld [vmem:[%s3 + $0xdc] sm:$0xf]
          %v1643 = vld [vmem:[%s3 + $0xe0] sm:$0xf]
          %v1644 = vld [vmem:[%s3 + $0xe4] sm:$0xf]
          %v1645 = vld [vmem:[%s3 + $0xe8] sm:$0xf]
          %v1646 = vld [vmem:[%s3 + $0xec] sm:$0xf]
          %v1647 = vld [vmem:[%s3 + $0xf0] sm:$0xf]
          %v1648 = vld [vmem:[%s3 + $0xf4] sm:$0xf]
          %v1649 = vld [vmem:[%s3 + $0xf8] sm:$0xf]
          %v1650 = vld [vmem:[%s3 + $0xfc] sm:$0xf]
          %v1651 = vld [vmem:[%s4] sm:$0x1]
          %v1653 = vlaneseq
          %v1654 = vshrl.u32 %v1653, 7
          %v1655 = vsub.s32 0, %v1654
          %v1656 = vrot.slane %v1651, %v1655
          %v1722 = vunpack.c.l.b16 %v1587
          %v1723 = vunpack.c.l.b16 %v1588
          %v1724 = vunpack.c.l.b16 %v1589
          %v1725 = vunpack.c.l.b16 %v1590
          %v1726 = vunpack.c.l.b16 %v1591
          %v1727 = vunpack.c.l.b16 %v1592
          %v1728 = vunpack.c.l.b16 %v1593
          %v1729 = vunpack.c.l.b16 %v1594
          %v1730 = vunpack.c.l.b16 %v1595
          %v1731 = vunpack.c.l.b16 %v1596
          %v1732 = vunpack.c.l.b16 %v1597
          %v1733 = vunpack.c.l.b16 %v1598
          %v1734 = vunpack.c.l.b16 %v1599
          %v1735 = vunpack.c.l.b16 %v1600
          %v1736 = vunpack.c.l.b16 %v1601
          %v1737 = vunpack.c.l.b16 %v1602
          %v1738 = vunpack.c.l.b16 %v1603
          %v1739 = vunpack.c.l.b16 %v1604
          %v1740 = vunpack.c.l.b16 %v1605
          %v1741 = vunpack.c.l.b16 %v1606
          %v1742 = vunpack.c.l.b16 %v1607
          %v1743 = vunpack.c.l.b16 %v1608
          %v1744 = vunpack.c.l.b16 %v1609
          %v1745 = vunpack.c.l.b16 %v1610
          %v1746 = vunpack.c.l.b16 %v1611
          %v1747 = vunpack.c.l.b16 %v1612
          %v1748 = vunpack.c.l.b16 %v1613
          %v1749 = vunpack.c.l.b16 %v1614
          %v1750 = vunpack.c.l.b16 %v1615
          %v1751 = vunpack.c.l.b16 %v1616
          %v1752 = vunpack.c.l.b16 %v1617
          %v1753 = vunpack.c.l.b16 %v1618
          %v1754 = vunpack.c.l.b16 %v1619
          %v1755 = vunpack.c.l.b16 %v1620
          %v1756 = vunpack.c.l.b16 %v1621
          %v1757 = vunpack.c.l.b16 %v1622
          %v1758 = vunpack.c.l.b16 %v1623
          %v1759 = vunpack.c.l.b16 %v1624
          %v1760 = vunpack.c.l.b16 %v1625
          %v1761 = vunpack.c.l.b16 %v1626
          %v1762 = vunpack.c.l.b16 %v1627
          %v1763 = vunpack.c.l.b16 %v1628
          %v1764 = vunpack.c.l.b16 %v1629
          %v1765 = vunpack.c.l.b16 %v1630
          %v1766 = vunpack.c.l.b16 %v1631
          %v1767 = vunpack.c.l.b16 %v1632
          %v1768 = vunpack.c.l.b16 %v1633
          %v1769 = vunpack.c.l.b16 %v1634
          %v1770 = vunpack.c.l.b16 %v1635
          %v1771 = vunpack.c.l.b16 %v1636
          %v1772 = vunpack.c.l.b16 %v1637
          %v1773 = vunpack.c.l.b16 %v1638
          %v1774 = vunpack.c.l.b16 %v1639
          %v1775 = vunpack.c.l.b16 %v1640
          %v1776 = vunpack.c.l.b16 %v1641
          %v1777 = vunpack.c.l.b16 %v1642
          %v1778 = vunpack.c.l.b16 %v1643
          %v1779 = vunpack.c.l.b16 %v1644
          %v1780 = vunpack.c.l.b16 %v1645
          %v1781 = vunpack.c.l.b16 %v1646
          %v1782 = vunpack.c.l.b16 %v1647
          %v1783 = vunpack.c.l.b16 %v1648
          %v1784 = vunpack.c.l.b16 %v1649
          %v1785 = vunpack.c.l.b16 %v1650
          %v1786 = vpack.c.b16 %v1723, %v1722
          %v1787 = vpack.c.b16 %v1725, %v1724
          %v1788 = vpack.c.b16 %v1727, %v1726
          %v1789 = vpack.c.b16 %v1729, %v1728
          %v1790 = vpack.c.b16 %v1731, %v1730
          %v1791 = vpack.c.b16 %v1733, %v1732
          %v1792 = vpack.c.b16 %v1735, %v1734
          %v1793 = vpack.c.b16 %v1737, %v1736
          %v1794 = vpack.c.b16 %v1739, %v1738
          %v1795 = vpack.c.b16 %v1741, %v1740
          %v1796 = vpack.c.b16 %v1743, %v1742
          %v1797 = vpack.c.b16 %v1745, %v1744
          %v1798 = vpack.c.b16 %v1747, %v1746
          %v1799 = vpack.c.b16 %v1749, %v1748
          %v1800 = vpack.c.b16 %v1751, %v1750
          %v1801 = vpack.c.b16 %v1753, %v1752
          %v1802 = vpack.c.b16 %v1755, %v1754
          %v1803 = vpack.c.b16 %v1757, %v1756
          %v1804 = vpack.c.b16 %v1759, %v1758
          %v1805 = vpack.c.b16 %v1761, %v1760
          %v1806 = vpack.c.b16 %v1763, %v1762
          %v1807 = vpack.c.b16 %v1765, %v1764
          %v1808 = vpack.c.b16 %v1767, %v1766
          %v1809 = vpack.c.b16 %v1769, %v1768
          %v1810 = vpack.c.b16 %v1771, %v1770
          %v1811 = vpack.c.b16 %v1773, %v1772
          %v1812 = vpack.c.b16 %v1775, %v1774
          %v1813 = vpack.c.b16 %v1777, %v1776
          %v1814 = vpack.c.b16 %v1779, %v1778
          %v1815 = vpack.c.b16 %v1781, %v1780
          %v1816 = vpack.c.b16 %v1783, %v1782
          %v1817 = vpack.c.b16 %v1785, %v1784
          %1850 = vmatprep.subr.bf16.mxu0 0
          %1851 = vmatpush1.bf16.msra.mxu0 %v1786
          %1852 = vmatprep.subr.bf16.mxu0 0
          %1853 = vmatpush1.bf16.msra.mxu0 %v1787
          %1854 = vmatprep.subr.bf16.mxu0 0
          %1855 = vmatpush1.bf16.msra.mxu0 %v1788
          %1856 = vmatprep.subr.bf16.mxu0 0
          %1857 = vmatpush1.bf16.msra.mxu0 %v1789
          %1858 = vmatprep.subr.bf16.mxu0 0
          %1859 = vmatpush1.bf16.msra.mxu0 %v1790
          %1860 = vmatprep.subr.bf16.mxu0 0
          %1861 = vmatpush1.bf16.msra.mxu0 %v1791
          %1862 = vmatprep.subr.bf16.mxu0 0
          %1863 = vmatpush1.bf16.msra.mxu0 %v1792
          %1864 = vmatprep.subr.bf16.mxu0 0
          %1865 = vmatpush1.bf16.msra.mxu0 %v1793
          %1866 = vmatprep.subr.bf16.mxu0 0
          %1867 = vmatpush1.bf16.msra.mxu0 %v1794
          %1868 = vmatprep.subr.bf16.mxu0 0
          %1869 = vmatpush1.bf16.msra.mxu0 %v1795
          %1870 = vmatprep.subr.bf16.mxu0 0
          %1871 = vmatpush1.bf16.msra.mxu0 %v1796
          %1872 = vmatprep.subr.bf16.mxu0 0
          %1873 = vmatpush1.bf16.msra.mxu0 %v1797
          %1874 = vmatprep.subr.bf16.mxu0 0
          %1875 = vmatpush1.bf16.msra.mxu0 %v1798
          %1876 = vmatprep.subr.bf16.mxu0 0
          %1877 = vmatpush1.bf16.msra.mxu0 %v1799
          %1878 = vmatprep.subr.bf16.mxu0 0
          %1879 = vmatpush1.bf16.msra.mxu0 %v1800
          %1880 = vmatprep.subr.bf16.mxu0 0
          %1881 = vmatpush1.bf16.msra.mxu0 %v1801
          %1882 = vmatprep.mubr.bf16.mxu0 %v1584
          %1883 = vmatmul.mubr.bf16.gmra.mrb[0].mxu0 %v1583
          %v1884 = vpop.f32.mrb[0].mxu0
          %v1885 = vadd.f32 %v1656, %v1884
          %v1886 = vpop.f32.mrb[0].mxu0
          %v1887 = vpop.f32.mrb[0].mxu0
          %v1888 = vpop.f32.mrb[0].mxu0
          %1889 = vdwg.mxu0
          %1890 = vmatprep.subr.bf16.mxu0 0
          %1891 = vmatpush1.bf16.msra.mxu0 %v1802
          %1892 = vmatprep.subr.bf16.mxu0 0
          %1893 = vmatpush1.bf16.msra.mxu0 %v1803
          %1894 = vmatprep.subr.bf16.mxu0 0
          %1895 = vmatpush1.bf16.msra.mxu0 %v1804
          %1896 = vmatprep.subr.bf16.mxu0 0
          %1897 = vmatpush1.bf16.msra.mxu0 %v1805
          %1898 = vmatprep.subr.bf16.mxu0 0
          %1899 = vmatpush1.bf16.msra.mxu0 %v1806
          %1900 = vmatprep.subr.bf16.mxu0 0
          %1901 = vmatpush1.bf16.msra.mxu0 %v1807
          %1902 = vmatprep.subr.bf16.mxu0 0
          %1903 = vmatpush1.bf16.msra.mxu0 %v1808
          %1904 = vmatprep.subr.bf16.mxu0 0
          %1905 = vmatpush1.bf16.msra.mxu0 %v1809
          %1906 = vmatprep.subr.bf16.mxu0 0
          %1907 = vmatpush1.bf16.msra.mxu0 %v1810
          %1908 = vmatprep.subr.bf16.mxu0 0
          %1909 = vmatpush1.bf16.msra.mxu0 %v1811
          %1910 = vmatprep.subr.bf16.mxu0 0
          %1911 = vmatpush1.bf16.msra.mxu0 %v1812
          %1912 = vmatprep.subr.bf16.mxu0 0
          %1913 = vmatpush1.bf16.msra.mxu0 %v1813
          %1914 = vmatprep.subr.bf16.mxu0 0
          %1915 = vmatpush1.bf16.msra.mxu0 %v1814
          %1916 = vmatprep.subr.bf16.mxu0 0
          %1917 = vmatpush1.bf16.msra.mxu0 %v1815
          %1918 = vmatprep.subr.bf16.mxu0 0
          %1919 = vmatpush1.bf16.msra.mxu0 %v1816
          %1920 = vmatprep.subr.bf16.mxu0 0
          %1921 = vmatpush1.bf16.msra.mxu0 %v1817
          %1922 = vmatprep.mubr.bf16.mxu0 %v1586
          %1923 = vmatmul.mubr.bf16.gmra.mrb[0].mxu0 %v1585
          %v1924 = vpop.f32.mrb[0].mxu0
          %v1925 = vadd.f32 %v1885, %v1924
          %v1926 = vpop.f32.mrb[0].mxu0
          %v1927 = vpop.f32.mrb[0].mxu0
          %v1928 = vpop.f32.mrb[0].mxu0
          %1929 = vdwg.mxu0
          %vm1930 = vcmask 25600
          %1931 = vst.msk [vmem:[#allocation3] sm:$0x3] %vm1930, %v1925
        $region48: #{dqn_forward.7} parent=39 // pred_fallthru
          _
        // Predicated region
        $region49: #{dqn_forward.7} parent=39 // pred_check
          %p1932 = pneg %p145
        $region50: #{dqn_forward.7} parent=39 // pred_check_branch
          %1934 = sbr.rel (%p1932) target = $region52
        $region51: #{dqn_forward.7} parent=39 // pred_region
          %s1936 = ssub.s32 32, 32
          %1937 = vsyncadd [#allocation4], %s1936
          %s1939 = sshll.u32 [#allocation3], 4
          %s1940 = int_to_ptr.vmem [resolvable:$true] %s1939
          %1942 = dma.vmem_to_hbm [thread:$0]  %s1940, 32, %s5, [#allocation4]
        $region52: #{dqn_forward.7} parent=39 // pred_fallthru
          _
        // Predicated region
        $region53: #{dqn_forward.7} parent=39 // pred_check
          %p1943 = pneg %p145
        $region54: #{dqn_forward.7} parent=39 // pred_check_branch
          %1945 = sbr.rel (%p1943) target = $region56
        $region55: #{dqn_forward.7} parent=39 // pred_region
          %1946 = dma.done [#allocation4], 32
        $region56: #{dqn_forward.7} parent=39 // pred_fallthru
          _
      $region40: #{dqn_forward.7} parent=5 // pred_fallthru
        _
      %p1947 = scmp.le.s32.totalorder 2, %s12
      // Predicated region
      $region57: #{dqn_forward.7} parent=5 // pred_check
        %p1948 = pneg %p1947
      $region58: #{dqn_forward.7} parent=5 // pred_check_branch
        %1950 = sbr.rel (%p1948) target = $region60
      $region59: #{dqn_forward.7} parent=5 // pred_region
        %s1951 = ssub.s32 %s12, 2
      $region60: #{dqn_forward.7} parent=5 // pred_fallthru
        _
    $region6: #{dqn_forward.7} parent=1 // loop_footer
      %s16 = sadd.s32 1, %s12
    $region7: #{dqn_forward.7} parent=1 // loop_footer_branch
      %11 = sbr.rel target = $region3
    $region8: #{dqn_forward.7} parent=1 // loop_exit
      _
    %1952 = vsyncpa [#allocation4], 1
    %s1953 = scalar_lea.sflag [#allocation4], 1
    %1954 = vsyncpa %s1953, 1

</llo_original>
